<compile_context>
chip_gen: v7x
topology: tpu7x:2x2x1
jax: 0.10.0
libtpu: 0.0.40
codegen_flags: <defaults>
</compile_context>

<pallas_src>
import math
from functools import partial

import jax
import jax.numpy as jnp
from jax import lax
from jax.experimental import pallas as pl
from jax.experimental.pallas import tpu as pltpu


def _mha_kernel(x_ref, wqkv_ref, wo_ref, bo_ref, out_ref, qkv_ref, ctx_ref, *,
                num_heads, head_dim_padded, mask_value):
    H, Dp = num_heads, head_dim_padded
    Bb, T, D = x_ref.shape
    HDp = H * Dp
    cdt = qkv_ref.dtype  # MXU operand dtype (bf16 by default, f32 in exact mode)

    # --- fused QKV projection: ONE lane-dense MXU matmul for all heads/q/k/v.
    #     Operands in `cdt`, accumulation in f32; result is staged into a VMEM scratch
    #     ref so the big slab is not kept live as a value across the head loop.
    x2 = x_ref[...].reshape(Bb * T, D).astype(cdt)
    qkv = jnp.dot(x2, wqkv_ref[...], preferred_element_type=jnp.float32)
    qkv_ref[...] = qkv.reshape(Bb, T, 3 * HDp).astype(cdt)

    # --- causal mask bias built in-kernel (diagonal masked too, matching triu(k=0)).
    #     1/sqrt(Dh) is folded into Wq (wrapper) and into mask_value, so
    #     logits == (scores + mask*-1e10) / sqrt(Dh) of the reference.
    rows = lax.broadcasted_iota(jnp.int32, (T, T), 0)
    cols = lax.broadcasted_iota(jnp.int32, (T, T), 1)
    mask2 = jnp.where(cols >= rows, jnp.float32(mask_value), jnp.float32(0.0))
    mask_bias = mask2[None, :, :]  # hoisted once; not re-broadcast per head

    # --- per-head attention.  Head slices are 128-lane aligned (Dh padded to Dp), so
    #     the qkv reads and ctx writes are dense full-vreg loads/stores.
    # TODO(synk): for H >> 4, move this loop onto an "arbitrary" grid axis (ctx_ref as
    #             persistent scratch, output projection under pl.when(h == H-1)).
    for h in range(H):
        q = qkv_ref[:, :, h * Dp:(h + 1) * Dp]
        k = qkv_ref[:, :, HDp + h * Dp:HDp + (h + 1) * Dp]
        v = qkv_ref[:, :, 2 * HDp + h * Dp:2 * HDp + (h + 1) * Dp]

        s = jnp.einsum('btd,bsd->bts', q, k,
                       preferred_element_type=jnp.float32)      # (Bb, T, T) f32
        logits = s + mask_bias

        # numerically-stable softmax along the last axis (torch.nn.Softmax(dim=2))
        m = jnp.max(logits, axis=-1, keepdims=True)
        e = jnp.exp(logits - m)
        denom = jnp.sum(e, axis=-1, keepdims=True)               # (Bb, T, 1)
        inv = pl.reciprocal(denom, approx=True)                  # EUP slot, cheap
        inv = inv * (2.0 - denom * inv)                          # one Newton step
        p = (e * inv).astype(cdt)

        # write this head's context into its lane-aligned slab: concat for free.
        ctx_ref[:, :, h * Dp:(h + 1) * Dp] = jnp.einsum(
            'bts,bsd->btd', p, v, preferred_element_type=jnp.float32).astype(cdt)

    # --- output projection: one matmul over the full concatenated (padded) slab ---
    ctx2 = ctx_ref[...].reshape(Bb * T, HDp)
    out = jnp.dot(ctx2, wo_ref[...], preferred_element_type=jnp.float32) + bo_ref[...]
    out_ref[...] = out.reshape(Bb, T, D).astype(out_ref.dtype)
    # TODO(synk): training-mode dropout (eval semantics: identity).


def _pack_weights(wq, wk, wv, wo_t, dh_pad, scale, dtype):
    """Fuse per-head (H, D, Dh) weights into one (D, 3*H*Dh_pad) QKV matrix with each
    head's columns zero-padded to dh_pad lanes, and pad Wo^T rows to match.
    The 1/sqrt(Dh) scale is folded into the Q columns (done in f32)."""
    H, D, Dh = wq.shape
    pad = dh_pad - Dh

    def fuse(w):
        wp = jnp.pad(w, ((0, 0), (0, 0), (0, pad)))                  # (H, D, Dh_pad)
        return jnp.transpose(wp, (1, 0, 2)).reshape(D, H * dh_pad)

    w_qkv = jnp.concatenate([fuse(wq * scale), fuse(wk), fuse(wv)], axis=1)
    wo3 = jnp.pad(wo_t.reshape(H, Dh, D), ((0, 0), (0, pad), (0, 0)))
    wo_p = wo3.reshape(H * dh_pad, D)
    return w_qkv.astype(dtype), wo_p.astype(dtype)


def _auto_batch_block(B, T):
    """Largest divisor of B that keeps >= 2 grid steps (both v7x TCs busy) while
    keeping the per-step row count modest."""
    best = 1
    for cand in range(1, B + 1):
        if B % cand == 0 and (B // cand) >= 2 and cand * T <= 512:
            best = cand
    return best


def multi_head_attention(x, wq, wk, wv, wo_t, bo, *, batch_block=None,
                         mxu_dtype=jnp.bfloat16):
    """x: (B,T,D); wq/wk/wv: (H,D,Dh) with q = x @ wq[h]; wo_t: (D,D) transposed
    output projection (out = concat_heads @ wo_t + bo); bo: (D,)."""
    B, T, D = x.shape
    H, D2, Dh = wq.shape
    assert D2 == D
    assert H * Dh == D, "output projection expects concat width == input_dim"

    if batch_block is None:
        batch_block = _auto_batch_block(B, T)
    assert B % batch_block == 0, "batch_block must divide the batch size"
    bb = batch_block

    # Pad each head's feature width up to a multiple of 128 lanes so all per-head
    # slices/stores in the kernel are full-vreg dense.
    dh_pad = ((Dh + 127) // 128) * 128
    hdp = H * dh_pad
    scale = 1.0 / math.sqrt(float(Dh))

    w_qkv, wo_p = _pack_weights(wq, wk, wv, wo_t, dh_pad, scale, mxu_dtype)
    bo2 = bo.reshape(1, D).astype(jnp.float32)

    itm = jnp.dtype(mxu_dtype).itemsize
    # Rough per-step VMEM budget: double-buffered x/out blocks, (single-buffered)
    # weights, qkv/ctx scratch and the live f32 intermediates. Used to set an explicit
    # scoped-VMEM limit that also fits v7x's 64 MiB physical VMEM.
    est = (2 * 2 * bb * T * D * x.dtype.itemsize
           + (D * 3 * hdp + hdp * D) * itm + 4 * D
           + (bb * T * 3 * hdp + bb * T * hdp) * itm
           + 4 * bb * T * (3 * hdp + 4 * T + dh_pad))
    vmem_limit = int(min(60 * 2 ** 20, max(16 * 2 ** 20, 3 * est)))

    flops = B * (2 * T * D * 3 * hdp           # fused QKV projection
                 + 4 * H * T * T * dh_pad      # QK^T + P@V
                 + 2 * T * hdp * D)            # output projection
    bytes_accessed = (2 * x.size * x.dtype.itemsize
                      + (w_qkv.size + wo_p.size) * itm + bo2.size * 4)
    cost = pl.CostEstimate(flops=int(flops), transcendentals=int(B * H * T * T),
                           bytes_accessed=int(bytes_accessed))

    kernel = partial(_mha_kernel, num_heads=H, head_dim_padded=dh_pad,
                     mask_value=-10000000000.0 * scale)
    grid = (B // bb,)

    def build_and_run(single_buffer_weights):
        # Constant-index weight blocks: single-buffer to halve their VMEM footprint.
        wkw = ({'pipeline_mode': pl.Buffered(1)} if single_buffer_weights else {})
        call = pl.pallas_call(
            kernel,
            out_shape=jax.ShapeDtypeStruct((B, T, D), x.dtype),
            grid_spec=pltpu.PrefetchScalarGridSpec(
                num_scalar_prefetch=0,
                grid=grid,
                in_specs=[
                    pl.BlockSpec((bb, T, D), lambda b: (b, 0, 0)),        # x
                    pl.BlockSpec((D, 3 * hdp), lambda b: (0, 0), **wkw),  # W_qkv
                    pl.BlockSpec((hdp, D), lambda b: (0, 0), **wkw),      # Wo^T (padded)
                    pl.BlockSpec((1, D), lambda b: (0, 0), **wkw),        # bias
                ],
                out_specs=pl.BlockSpec((bb, T, D), lambda b: (b, 0, 0)),
                scratch_shapes=[
                    pltpu.VMEM((bb, T, 3 * hdp), mxu_dtype),  # staged fused QKV slab
                    pltpu.VMEM((bb, T, hdp), mxu_dtype),      # concatenated head ctx
                ],
            ),
            compiler_params=pltpu.CompilerParams(
                dimension_semantics=("parallel",),
                vmem_limit_bytes=vmem_limit),
            cost_estimate=cost,
        )
        return call(x, w_qkv, wo_p, bo2)

    try:
        out = build_and_run(True)
        return jax.block_until_ready(out)
    except Exception:
        # pipeline_mode=pl.Buffered(1) not supported on this jax version: fall back
        # to default double-buffering (correctness unchanged).
        return build_and_run(False)


def _reference(x, wq, wk, wv, wo_t, bo):
    """Pure-JAX f32 replica of the PyTorch forward (eval mode)."""
    H, D, Dh = wq.shape
    T = x.shape[1]
    mask = jnp.triu(jnp.ones((T, T), dtype=jnp.float32), k=0)   # diagonal included
    c = mask * (-10000000000.0)
    outs = []
    for h in range(H):
        q = x @ wq[h]
        k = x @ wk[h]
        v = x @ wv[h]
        d = jnp.einsum('btd,bsd->bts', q, k)
        s = jax.nn.softmax((d + c[None]) / math.sqrt(float(Dh)), axis=-1)
        outs.append(jnp.einsum('bts,bsd->btd', s, v))
    concat = jnp.concatenate(outs, axis=-1)
    return concat @ wo_t + bo[None, None, :]


if __name__ == "__main__":
    B, T, D, H = 2, 8, 32, 4
    Dh = D // H

    key = jax.random.PRNGKey(0)
    kx, kq, kk, kv, ko, kb = jax.random.split(key, 6)

    x = jax.random.normal(kx, (B, T, D), dtype=jnp.float32)

    lim = 1.0 / math.sqrt(D)
    wq = jax.random.uniform(kq, (H, D, Dh), minval=-lim, maxval=lim, dtype=jnp.float32)
    wk = jax.random.uniform(kk, (H, D, Dh), minval=-lim, maxval=lim, dtype=jnp.float32)
    wv = jax.random.uniform(kv, (H, D, Dh), minval=-lim, maxval=lim, dtype=jnp.float32)
    wo_t = jax.random.uniform(ko, (D, D), minval=-lim, maxval=lim, dtype=jnp.float32)
    bo = jax.random.uniform(kb, (D,), minval=-lim, maxval=lim, dtype=jnp.float32)

    ref = _reference(x, wq, wk, wv, wo_t, bo)

    # Exact mode (f32 MXU operands): tight check of the kernel math / masking.
    out_f32 = jax.block_until_ready(
        multi_head_attention(x, wq, wk, wv, wo_t, bo, mxu_dtype=jnp.float32))
    assert out_f32.shape == (B, T, D)
    assert jnp.allclose(out_f32, ref, atol=1e-4, rtol=1e-4), \
        "Pallas kernel (f32 mode) mismatch vs reference"

    # Default perf mode: bf16 MXU operands, f32 accumulation (bf16-level tolerance).
    out_bf16 = jax.block_until_ready(
        multi_head_attention(x, wq, wk, wv, wo_t, bo))
    assert out_bf16.shape == (B, T, D)
    assert jnp.allclose(out_bf16, ref, atol=5e-2, rtol=5e-2), \
        "Pallas kernel (bf16 mode) mismatch vs reference"

    print("KERNEL_OK")
</pallas_src>

<mosaic_0001>
module attributes {stable_mosaic.version = 11 : i64} {
  func.func @_mha_kernel(%arg0: i32, %arg1: memref<1x8x32xf32, #tpu.memory_space<vmem>>, %arg2: memref<32x1536xf32, #tpu.memory_space<vmem>>, %arg3: memref<512x32xf32, #tpu.memory_space<vmem>>, %arg4: memref<1x32xf32, #tpu.memory_space<vmem>>, %arg5: memref<1x8x32xf32, #tpu.memory_space<vmem>>, %arg6: memref<1x8x1536xf32, #tpu.memory_space<vmem>>, %arg7: memref<1x8x512xf32, #tpu.memory_space<vmem>>) attributes {dimension_semantics = [#tpu.dimension_semantics<parallel>], iteration_bounds = array<i64: 2>, scalar_prefetch = 0 : i64, scratch_operands = 2 : i64, tpu.core_type = #tpu.core_type<tc>, window_params = [{transform_indices = @transform_0, window_bounds = array<i64: 1, 8, 32>}, {pipeline_mode = #tpu.pipeline_mode<synchronous>, transform_indices = @transform_1, window_bounds = array<i64: 32, 1536>}, {pipeline_mode = #tpu.pipeline_mode<synchronous>, transform_indices = @transform_2, window_bounds = array<i64: 512, 32>}, {pipeline_mode = #tpu.pipeline_mode<synchronous>, transform_indices = @transform_3, window_bounds = array<i64: 1, 32>}, {transform_indices = @transform_4, window_bounds = array<i64: 1, 8, 32>}]} {
    %c0 = arith.constant 0 : index
    %c0_0 = arith.constant 0 : index
    %c0_1 = arith.constant 0 : index
    %0 = vector.load %arg1[%c0, %c0_0, %c0_1] : memref<1x8x32xf32, #tpu.memory_space<vmem>>, vector<1x8x32xf32>
    %1 = vector.shape_cast %0 : vector<1x8x32xf32> to vector<8x32xf32>
    %c0_2 = arith.constant 0 : index
    %c0_3 = arith.constant 0 : index
    %2 = vector.load %arg2[%c0_2, %c0_3] : memref<32x1536xf32, #tpu.memory_space<vmem>>, vector<32x1536xf32>
    %cst = arith.constant dense<0.000000e+00> : vector<8x1536xf32>
    %3 = tpu.matmul %1, %2, %cst {dimension_numbers = #tpu.dot_dimension_numbers<[1], [0], [0], [1], [0, 0, 1, 1], [], []>} : vector<8x32xf32>, vector<32x1536xf32>, vector<8x1536xf32> -> vector<8x1536xf32>
    %4 = vector.shape_cast %3 : vector<8x1536xf32> to vector<1x8x1536xf32>
    %c0_4 = arith.constant 0 : index
    %c0_5 = arith.constant 0 : index
    %c0_6 = arith.constant 0 : index
    %5 = vector.load %arg6[%c0_4, %c0_5, %c0_6] : memref<1x8x1536xf32, #tpu.memory_space<vmem>>, vector<1x8x1536xf32>
    tpu.vector_store %arg6[%c0_4, %c0_5, %c0_6], %4 {strides = array<i32>} : memref<1x8x1536xf32, #tpu.memory_space<vmem>>, vector<1x8x1536xf32>,
    %6 = tpu.iota {dimensions = array<i32: 0>} : vector<8x8xi32>
    %7 = tpu.iota {dimensions = array<i32: 1>} : vector<8x8xi32>
    %8 = arith.cmpi sge, %7, %6 : vector<8x8xi32>
    %cst_7 = arith.constant -3.53553382E+9 : f32
    %cst_8 = arith.constant 0.000000e+00 : f32
    %9 = vector.broadcast %cst_7 : f32 to vector<8x8xf32>
    %10 = vector.broadcast %cst_8 : f32 to vector<8x8xf32>
    %11 = arith.select %8, %9, %10 : vector<8x8xi1>, vector<8x8xf32>
    %12 = vector.shape_cast %11 : vector<8x8xf32> to vector<1x8x8xf32>
    %c0_9 = arith.constant 0 : index
    %c0_10 = arith.constant 0 : index
    %c0_11 = arith.constant 0 : index
    %13 = vector.load %arg6[%c0_9, %c0_10, %c0_11] : memref<1x8x1536xf32, #tpu.memory_space<vmem>>, vector<1x8x128xf32>
    %c0_12 = arith.constant 0 : index
    %c0_13 = arith.constant 0 : index
    %c512 = arith.constant 512 : index
    %14 = vector.load %arg6[%c0_12, %c0_13, %c512] : memref<1x8x1536xf32, #tpu.memory_space<vmem>>, vector<1x8x128xf32>
    %c0_14 = arith.constant 0 : index
    %c0_15 = arith.constant 0 : index
    %c1024 = arith.constant 1024 : index
    %15 = vector.load %arg6[%c0_14, %c0_15, %c1024] : memref<1x8x1536xf32, #tpu.memory_space<vmem>>, vector<1x8x128xf32>
    "tpu.trace_start"() <{level = 10 : i32, message = "btd,bsd->bts"}> : () -> ()
    %cst_16 = arith.constant dense<0.000000e+00> : vector<1x8x8xf32>
    %16 = tpu.matmul %13, %14, %cst_16 {dimension_numbers = #tpu.dot_dimension_numbers<[2], [2], [1], [1], [0, 0, 0, 1, 1, 1], [0], [0]>} : vector<1x8x128xf32>, vector<1x8x128xf32>, vector<1x8x8xf32> -> vector<1x8x8xf32>
    "tpu.trace_stop"() : () -> ()
    %17 = arith.addf %16, %12 : vector<1x8x8xf32>
    %cst_17 = arith.constant dense<0xFF800000> : vector<1x8xf32>
    %18 = vector.multi_reduction <maximumf>, %17, %cst_17 [2] : vector<1x8x8xf32> to vector<1x8xf32>
    %19 = vector.shape_cast %18 : vector<1x8xf32> to vector<1x8x1xf32>
    %20 = vector.broadcast %19 : vector<1x8x1xf32> to vector<1x8x8xf32>
    %21 = arith.subf %17, %20 : vector<1x8x8xf32>
    %22 = math.exp %21 : vector<1x8x8xf32>
    %cst_18 = arith.constant dense<0.000000e+00> : vector<1x8xf32>
    %23 = vector.multi_reduction <add>, %22, %cst_18 [2] : vector<1x8x8xf32> to vector<1x8xf32>
    %24 = vector.shape_cast %23 : vector<1x8xf32> to vector<1x8x1xf32>
    %25 = tpu.reciprocal %24 {approx = true} : vector<1x8x1xf32> -> vector<1x8x1xf32>
    %26 = arith.mulf %24, %25 : vector<1x8x1xf32>
    %cst_19 = arith.constant 2.000000e+00 : f32
    %27 = vector.broadcast %cst_19 : f32 to vector<1x8x1xf32>
    %28 = arith.subf %27, %26 : vector<1x8x1xf32>
    %29 = arith.mulf %25, %28 : vector<1x8x1xf32>
    %30 = vector.broadcast %29 : vector<1x8x1xf32> to vector<1x8x8xf32>
    %31 = arith.mulf %22, %30 : vector<1x8x8xf32>
    "tpu.trace_start"() <{level = 10 : i32, message = "bts,bsd->btd"}> : () -> ()
    %cst_20 = arith.constant dense<0.000000e+00> : vector<1x8x128xf32>
    %32 = tpu.matmul %31, %15, %cst_20 {dimension_numbers = #tpu.dot_dimension_numbers<[2], [1], [1], [2], [0, 0, 0, 1, 1, 2], [0], [0]>} : vector<1x8x8xf32>, vector<1x8x128xf32>, vector<1x8x128xf32> -> vector<1x8x128xf32>
    "tpu.trace_stop"() : () -> ()
    %c0_21 = arith.constant 0 : index
    %c0_22 = arith.constant 0 : index
    %c0_23 = arith.constant 0 : index
    %33 = vector.load %arg7[%c0_21, %c0_22, %c0_23] : memref<1x8x512xf32, #tpu.memory_space<vmem>>, vector<1x8x128xf32>
    tpu.vector_store %arg7[%c0_21, %c0_22, %c0_23], %32 {strides = array<i32>} : memref<1x8x512xf32, #tpu.memory_space<vmem>>, vector<1x8x128xf32>,
    %c0_24 = arith.constant 0 : index
    %c0_25 = arith.constant 0 : index
    %c128 = arith.constant 128 : index
    %34 = vector.load %arg6[%c0_24, %c0_25, %c128] : memref<1x8x1536xf32, #tpu.memory_space<vmem>>, vector<1x8x128xf32>
    %c0_26 = arith.constant 0 : index
    %c0_27 = arith.constant 0 : index
    %c640 = arith.constant 640 : index
    %35 = vector.load %arg6[%c0_26, %c0_27, %c640] : memref<1x8x1536xf32, #tpu.memory_space<vmem>>, vector<1x8x128xf32>
    %c0_28 = arith.constant 0 : index
    %c0_29 = arith.constant 0 : index
    %c1152 = arith.constant 1152 : index
    %36 = vector.load %arg6[%c0_28, %c0_29, %c1152] : memref<1x8x1536xf32, #tpu.memory_space<vmem>>, vector<1x8x128xf32>
    "tpu.trace_start"() <{level = 10 : i32, message = "btd,bsd->bts"}> : () -> ()
    %cst_30 = arith.constant dense<0.000000e+00> : vector<1x8x8xf32>
    %37 = tpu.matmul %34, %35, %cst_30 {dimension_numbers = #tpu.dot_dimension_numbers<[2], [2], [1], [1], [0, 0, 0, 1, 1, 1], [0], [0]>} : vector<1x8x128xf32>, vector<1x8x128xf32>, vector<1x8x8xf32> -> vector<1x8x8xf32>
    "tpu.trace_stop"() : () -> ()
    %38 = arith.addf %37, %12 : vector<1x8x8xf32>
    %cst_31 = arith.constant dense<0xFF800000> : vector<1x8xf32>
    %39 = vector.multi_reduction <maximumf>, %38, %cst_31 [2] : vector<1x8x8xf32> to vector<1x8xf32>
    %40 = vector.shape_cast %39 : vector<1x8xf32> to vector<1x8x1xf32>
    %41 = vector.broadcast %40 : vector<1x8x1xf32> to vector<1x8x8xf32>
    %42 = arith.subf %38, %41 : vector<1x8x8xf32>
    %43 = math.exp %42 : vector<1x8x8xf32>
    %cst_32 = arith.constant dense<0.000000e+00> : vector<1x8xf32>
    %44 = vector.multi_reduction <add>, %43, %cst_32 [2] : vector<1x8x8xf32> to vector<1x8xf32>
    %45 = vector.shape_cast %44 : vector<1x8xf32> to vector<1x8x1xf32>
    %46 = tpu.reciprocal %45 {approx = true} : vector<1x8x1xf32> -> vector<1x8x1xf32>
    %47 = arith.mulf %45, %46 : vector<1x8x1xf32>
    %cst_33 = arith.constant 2.000000e+00 : f32
    %48 = vector.broadcast %cst_33 : f32 to vector<1x8x1xf32>
    %49 = arith.subf %48, %47 : vector<1x8x1xf32>
    %50 = arith.mulf %46, %49 : vector<1x8x1xf32>
    %51 = vector.broadcast %50 : vector<1x8x1xf32> to vector<1x8x8xf32>
    %52 = arith.mulf %43, %51 : vector<1x8x8xf32>
    "tpu.trace_start"() <{level = 10 : i32, message = "bts,bsd->btd"}> : () -> ()
    %cst_34 = arith.constant dense<0.000000e+00> : vector<1x8x128xf32>
    %53 = tpu.matmul %52, %36, %cst_34 {dimension_numbers = #tpu.dot_dimension_numbers<[2], [1], [1], [2], [0, 0, 0, 1, 1, 2], [0], [0]>} : vector<1x8x8xf32>, vector<1x8x128xf32>, vector<1x8x128xf32> -> vector<1x8x128xf32>
    "tpu.trace_stop"() : () -> ()
    %c0_35 = arith.constant 0 : index
    %c0_36 = arith.constant 0 : index
    %c128_37 = arith.constant 128 : index
    %54 = vector.load %arg7[%c0_35, %c0_36, %c128_37] : memref<1x8x512xf32, #tpu.memory_space<vmem>>, vector<1x8x128xf32>
    tpu.vector_store %arg7[%c0_35, %c0_36, %c128_37], %53 {strides = array<i32>} : memref<1x8x512xf32, #tpu.memory_space<vmem>>, vector<1x8x128xf32>,
    %c0_38 = arith.constant 0 : index
    %c0_39 = arith.constant 0 : index
    %c256 = arith.constant 256 : index
    %55 = vector.load %arg6[%c0_38, %c0_39, %c256] : memref<1x8x1536xf32, #tpu.memory_space<vmem>>, vector<1x8x128xf32>
    %c0_40 = arith.constant 0 : index
    %c0_41 = arith.constant 0 : index
    %c768 = arith.constant 768 : index
    %56 = vector.load %arg6[%c0_40, %c0_41, %c768] : memref<1x8x1536xf32, #tpu.memory_space<vmem>>, vector<1x8x128xf32>
    %c0_42 = arith.constant 0 : index
    %c0_43 = arith.constant 0 : index
    %c1280 = arith.constant 1280 : index
    %57 = vector.load %arg6[%c0_42, %c0_43, %c1280] : memref<1x8x1536xf32, #tpu.memory_space<vmem>>, vector<1x8x128xf32>
    "tpu.trace_start"() <{level = 10 : i32, message = "btd,bsd->bts"}> : () -> ()
    %cst_44 = arith.constant dense<0.000000e+00> : vector<1x8x8xf32>
    %58 = tpu.matmul %55, %56, %cst_44 {dimension_numbers = #tpu.dot_dimension_numbers<[2], [2], [1], [1], [0, 0, 0, 1, 1, 1], [0], [0]>} : vector<1x8x128xf32>, vector<1x8x128xf32>, vector<1x8x8xf32> -> vector<1x8x8xf32>
    "tpu.trace_stop"() : () -> ()
    %59 = arith.addf %58, %12 : vector<1x8x8xf32>
    %cst_45 = arith.constant dense<0xFF800000> : vector<1x8xf32>
    %60 = vector.multi_reduction <maximumf>, %59, %cst_45 [2] : vector<1x8x8xf32> to vector<1x8xf32>
    %61 = vector.shape_cast %60 : vector<1x8xf32> to vector<1x8x1xf32>
    %62 = vector.broadcast %61 : vector<1x8x1xf32> to vector<1x8x8xf32>
    %63 = arith.subf %59, %62 : vector<1x8x8xf32>
    %64 = math.exp %63 : vector<1x8x8xf32>
    %cst_46 = arith.constant dense<0.000000e+00> : vector<1x8xf32>
    %65 = vector.multi_reduction <add>, %64, %cst_46 [2] : vector<1x8x8xf32> to vector<1x8xf32>
    %66 = vector.shape_cast %65 : vector<1x8xf32> to vector<1x8x1xf32>
    %67 = tpu.reciprocal %66 {approx = true} : vector<1x8x1xf32> -> vector<1x8x1xf32>
    %68 = arith.mulf %66, %67 : vector<1x8x1xf32>
    %cst_47 = arith.constant 2.000000e+00 : f32
    %69 = vector.broadcast %cst_47 : f32 to vector<1x8x1xf32>
    %70 = arith.subf %69, %68 : vector<1x8x1xf32>
    %71 = arith.mulf %67, %70 : vector<1x8x1xf32>
    %72 = vector.broadcast %71 : vector<1x8x1xf32> to vector<1x8x8xf32>
    %73 = arith.mulf %64, %72 : vector<1x8x8xf32>
    "tpu.trace_start"() <{level = 10 : i32, message = "bts,bsd->btd"}> : () -> ()
    %cst_48 = arith.constant dense<0.000000e+00> : vector<1x8x128xf32>
    %74 = tpu.matmul %73, %57, %cst_48 {dimension_numbers = #tpu.dot_dimension_numbers<[2], [1], [1], [2], [0, 0, 0, 1, 1, 2], [0], [0]>} : vector<1x8x8xf32>, vector<1x8x128xf32>, vector<1x8x128xf32> -> vector<1x8x128xf32>
    "tpu.trace_stop"() : () -> ()
    %c0_49 = arith.constant 0 : index
    %c0_50 = arith.constant 0 : index
    %c256_51 = arith.constant 256 : index
    %75 = vector.load %arg7[%c0_49, %c0_50, %c256_51] : memref<1x8x512xf32, #tpu.memory_space<vmem>>, vector<1x8x128xf32>
    tpu.vector_store %arg7[%c0_49, %c0_50, %c256_51], %74 {strides = array<i32>} : memref<1x8x512xf32, #tpu.memory_space<vmem>>, vector<1x8x128xf32>,
    %c0_52 = arith.constant 0 : index
    %c0_53 = arith.constant 0 : index
    %c384 = arith.constant 384 : index
    %76 = vector.load %arg6[%c0_52, %c0_53, %c384] : memref<1x8x1536xf32, #tpu.memory_space<vmem>>, vector<1x8x128xf32>
    %c0_54 = arith.constant 0 : index
    %c0_55 = arith.constant 0 : index
    %c896 = arith.constant 896 : index
    %77 = vector.load %arg6[%c0_54, %c0_55, %c896] : memref<1x8x1536xf32, #tpu.memory_space<vmem>>, vector<1x8x128xf32>
    %c0_56 = arith.constant 0 : index
    %c0_57 = arith.constant 0 : index
    %c1408 = arith.constant 1408 : index
    %78 = vector.load %arg6[%c0_56, %c0_57, %c1408] : memref<1x8x1536xf32, #tpu.memory_space<vmem>>, vector<1x8x128xf32>
    "tpu.trace_start"() <{level = 10 : i32, message = "btd,bsd->bts"}> : () -> ()
    %cst_58 = arith.constant dense<0.000000e+00> : vector<1x8x8xf32>
    %79 = tpu.matmul %76, %77, %cst_58 {dimension_numbers = #tpu.dot_dimension_numbers<[2], [2], [1], [1], [0, 0, 0, 1, 1, 1], [0], [0]>} : vector<1x8x128xf32>, vector<1x8x128xf32>, vector<1x8x8xf32> -> vector<1x8x8xf32>
    "tpu.trace_stop"() : () -> ()
    %80 = arith.addf %79, %12 : vector<1x8x8xf32>
    %cst_59 = arith.constant dense<0xFF800000> : vector<1x8xf32>
    %81 = vector.multi_reduction <maximumf>, %80, %cst_59 [2] : vector<1x8x8xf32> to vector<1x8xf32>
    %82 = vector.shape_cast %81 : vector<1x8xf32> to vector<1x8x1xf32>
    %83 = vector.broadcast %82 : vector<1x8x1xf32> to vector<1x8x8xf32>
    %84 = arith.subf %80, %83 : vector<1x8x8xf32>
    %85 = math.exp %84 : vector<1x8x8xf32>
    %cst_60 = arith.constant dense<0.000000e+00> : vector<1x8xf32>
    %86 = vector.multi_reduction <add>, %85, %cst_60 [2] : vector<1x8x8xf32> to vector<1x8xf32>
    %87 = vector.shape_cast %86 : vector<1x8xf32> to vector<1x8x1xf32>
    %88 = tpu.reciprocal %87 {approx = true} : vector<1x8x1xf32> -> vector<1x8x1xf32>
    %89 = arith.mulf %87, %88 : vector<1x8x1xf32>
    %cst_61 = arith.constant 2.000000e+00 : f32
    %90 = vector.broadcast %cst_61 : f32 to vector<1x8x1xf32>
    %91 = arith.subf %90, %89 : vector<1x8x1xf32>
    %92 = arith.mulf %88, %91 : vector<1x8x1xf32>
    %93 = vector.broadcast %92 : vector<1x8x1xf32> to vector<1x8x8xf32>
    %94 = arith.mulf %85, %93 : vector<1x8x8xf32>
    "tpu.trace_start"() <{level = 10 : i32, message = "bts,bsd->btd"}> : () -> ()
    %cst_62 = arith.constant dense<0.000000e+00> : vector<1x8x128xf32>
    %95 = tpu.matmul %94, %78, %cst_62 {dimension_numbers = #tpu.dot_dimension_numbers<[2], [1], [1], [2], [0, 0, 0, 1, 1, 2], [0], [0]>} : vector<1x8x8xf32>, vector<1x8x128xf32>, vector<1x8x128xf32> -> vector<1x8x128xf32>
    "tpu.trace_stop"() : () -> ()
    %c0_63 = arith.constant 0 : index
    %c0_64 = arith.constant 0 : index
    %c384_65 = arith.constant 384 : index
    %96 = vector.load %arg7[%c0_63, %c0_64, %c384_65] : memref<1x8x512xf32, #tpu.memory_space<vmem>>, vector<1x8x128xf32>
    tpu.vector_store %arg7[%c0_63, %c0_64, %c384_65], %95 {strides = array<i32>} : memref<1x8x512xf32, #tpu.memory_space<vmem>>, vector<1x8x128xf32>,
    %c0_66 = arith.constant 0 : index
    %c0_67 = arith.constant 0 : index
    %c0_68 = arith.constant 0 : index
    %97 = vector.load %arg7[%c0_66, %c0_67, %c0_68] : memref<1x8x512xf32, #tpu.memory_space<vmem>>, vector<1x8x512xf32>
    %98 = vector.shape_cast %97 : vector<1x8x512xf32> to vector<8x512xf32>
    %c0_69 = arith.constant 0 : index
    %c0_70 = arith.constant 0 : index
    %99 = vector.load %arg3[%c0_69, %c0_70] : memref<512x32xf32, #tpu.memory_space<vmem>>, vector<512x32xf32>
    %cst_71 = arith.constant dense<0.000000e+00> : vector<8x32xf32>
    %100 = tpu.matmul %98, %99, %cst_71 {dimension_numbers = #tpu.dot_dimension_numbers<[1], [0], [0], [1], [0, 0, 1, 1], [], []>} : vector<8x512xf32>, vector<512x32xf32>, vector<8x32xf32> -> vector<8x32xf32>
    %c0_72 = arith.constant 0 : index
    %c0_73 = arith.constant 0 : index
    %101 = vector.load %arg4[%c0_72, %c0_73] : memref<1x32xf32, #tpu.memory_space<vmem>>, vector<1x32xf32>
    %102 = vector.broadcast %101 : vector<1x32xf32> to vector<8x32xf32>
    %103 = arith.addf %100, %102 : vector<8x32xf32>
    %104 = vector.shape_cast %103 : vector<8x32xf32> to vector<1x8x32xf32>
    %c0_74 = arith.constant 0 : index
    %c0_75 = arith.constant 0 : index
    %c0_76 = arith.constant 0 : index
    %105 = vector.load %arg5[%c0_74, %c0_75, %c0_76] : memref<1x8x32xf32, #tpu.memory_space<vmem>>, vector<1x8x32xf32>
    tpu.vector_store %arg5[%c0_74, %c0_75, %c0_76], %104 {strides = array<i32>} : memref<1x8x32xf32, #tpu.memory_space<vmem>>, vector<1x8x32xf32>,
    return
  }
  func.func @transform_0(%arg0: i32) -> (i32, i32, i32) {
    %c0_i32 = arith.constant 0 : i32
    %c0_i32_0 = arith.constant 0 : i32
    %c0_i32_1 = arith.constant 0 : i32
    return %arg0, %c0_i32, %c0_i32_0 : i32, i32, i32
  }
  func.func @transform_1(%arg0: i32) -> (i32, i32) {
    %c0_i32 = arith.constant 0 : i32
    %c0_i32_0 = arith.constant 0 : i32
    %c0_i32_1 = arith.constant 0 : i32
    return %c0_i32, %c0_i32_0 : i32, i32
  }
  func.func @transform_2(%arg0: i32) -> (i32, i32) {
    %c0_i32 = arith.constant 0 : i32
    %c0_i32_0 = arith.constant 0 : i32
    %c0_i32_1 = arith.constant 0 : i32
    return %c0_i32, %c0_i32_0 : i32, i32
  }
  func.func @transform_3(%arg0: i32) -> (i32, i32) {
    %c0_i32 = arith.constant 0 : i32
    %c0_i32_0 = arith.constant 0 : i32
    %c0_i32_1 = arith.constant 0 : i32
    return %c0_i32, %c0_i32_0 : i32, i32
  }
  func.func @transform_4(%arg0: i32) -> (i32, i32, i32) {
    %c0_i32 = arith.constant 0 : i32
    %c0_i32_0 = arith.constant 0 : i32
    %c0_i32_1 = arith.constant 0 : i32
    return %arg0, %c0_i32, %c0_i32_0 : i32, i32, i32
  }
}

module attributes {stable_mosaic.version = 11 : i64} {
  func.func @_mha_kernel(%arg0: i32, %arg1: memref<1x8x32xf32, #tpu.memory_space<vmem>>, %arg2: memref<32x1536xf32, #tpu.memory_space<vmem>>, %arg3: memref<512x32xf32, #tpu.memory_space<vmem>>, %arg4: memref<1x32xf32, #tpu.memory_space<vmem>>, %arg5: memref<1x8x32xf32, #tpu.memory_space<vmem>>, %arg6: memref<1x8x1536xf32, #tpu.memory_space<vmem>>, %arg7: memref<1x8x512xf32, #tpu.memory_space<vmem>>) attributes {dimension_semantics = [#tpu.dimension_semantics<parallel>], iteration_bounds = array<i64: 2>, scalar_prefetch = 0 : i64, scratch_operands = 2 : i64, tpu.core_type = #tpu.core_type<tc>, window_params = [{transform_indices = @transform_0, window_bounds = array<i64: 1, 8, 32>}, {pipeline_mode = #tpu.pipeline_mode<synchronous>, transform_indices = @transform_1, window_bounds = array<i64: 32, 1536>}, {pipeline_mode = #tpu.pipeline_mode<synchronous>, transform_indices = @transform_2, window_bounds = array<i64: 512, 32>}, {pipeline_mode = #tpu.pipeline_mode<synchronous>, transform_indices = @transform_3, window_bounds = array<i64: 1, 32>}, {transform_indices = @transform_4, window_bounds = array<i64: 1, 8, 32>}]} {
    %c0 = arith.constant 0 : index
    %c0_0 = arith.constant 0 : index
    %c0_1 = arith.constant 0 : index
    %0 = vector.load %arg1[%c0, %c0_0, %c0_1] : memref<1x8x32xf32, #tpu.memory_space<vmem>>, vector<1x8x32xf32>
    %1 = vector.shape_cast %0 : vector<1x8x32xf32> to vector<8x32xf32>
    %c0_2 = arith.constant 0 : index
    %c0_3 = arith.constant 0 : index
    %2 = vector.load %arg2[%c0_2, %c0_3] : memref<32x1536xf32, #tpu.memory_space<vmem>>, vector<32x1536xf32>
    %cst = arith.constant dense<0.000000e+00> : vector<8x1536xf32>
    %3 = tpu.matmul %1, %2, %cst {dimension_numbers = #tpu.dot_dimension_numbers<[1], [0], [0], [1], [0, 0, 1, 1], [], []>} : vector<8x32xf32>, vector<32x1536xf32>, vector<8x1536xf32> -> vector<8x1536xf32>
    %4 = vector.shape_cast %3 : vector<8x1536xf32> to vector<1x8x1536xf32>
    %c0_4 = arith.constant 0 : index
    %c0_5 = arith.constant 0 : index
    %c0_6 = arith.constant 0 : index
    %5 = vector.load %arg6[%c0_4, %c0_5, %c0_6] : memref<1x8x1536xf32, #tpu.memory_space<vmem>>, vector<1x8x1536xf32>
    tpu.vector_store %arg6[%c0_4, %c0_5, %c0_6], %4 {strides = array<i32>} : memref<1x8x1536xf32, #tpu.memory_space<vmem>>, vector<1x8x1536xf32>,
    %6 = tpu.iota {dimensions = array<i32: 0>} : vector<8x8xi32>
    %7 = tpu.iota {dimensions = array<i32: 1>} : vector<8x8xi32>
    %8 = arith.cmpi sge, %7, %6 : vector<8x8xi32>
    %cst_7 = arith.constant -3.53553382E+9 : f32
    %cst_8 = arith.constant 0.000000e+00 : f32
    %9 = vector.broadcast %cst_7 : f32 to vector<8x8xf32>
    %10 = vector.broadcast %cst_8 : f32 to vector<8x8xf32>
    %11 = arith.select %8, %9, %10 : vector<8x8xi1>, vector<8x8xf32>
    %12 = vector.shape_cast %11 : vector<8x8xf32> to vector<1x8x8xf32>
    %c0_9 = arith.constant 0 : index
    %c0_10 = arith.constant 0 : index
    %c0_11 = arith.constant 0 : index
    %13 = vector.load %arg6[%c0_9, %c0_10, %c0_11] : memref<1x8x1536xf32, #tpu.memory_space<vmem>>, vector<1x8x128xf32>
    %c0_12 = arith.constant 0 : index
    %c0_13 = arith.constant 0 : index
    %c512 = arith.constant 512 : index
    %14 = vector.load %arg6[%c0_12, %c0_13, %c512] : memref<1x8x1536xf32, #tpu.memory_space<vmem>>, vector<1x8x128xf32>
    %c0_14 = arith.constant 0 : index
    %c0_15 = arith.constant 0 : index
    %c1024 = arith.constant 1024 : index
    %15 = vector.load %arg6[%c0_14, %c0_15, %c1024] : memref<1x8x1536xf32, #tpu.memory_space<vmem>>, vector<1x8x128xf32>
    "tpu.trace_start"() <{level = 10 : i32, message = "btd,bsd->bts"}> : () -> ()
    %cst_16 = arith.constant dense<0.000000e+00> : vector<1x8x8xf32>
    %16 = tpu.matmul %13, %14, %cst_16 {dimension_numbers = #tpu.dot_dimension_numbers<[2], [2], [1], [1], [0, 0, 0, 1, 1, 1], [0], [0]>} : vector<1x8x128xf32>, vector<1x8x128xf32>, vector<1x8x8xf32> -> vector<1x8x8xf32>
    "tpu.trace_stop"() : () -> ()
    %17 = arith.addf %16, %12 : vector<1x8x8xf32>
    %cst_17 = arith.constant dense<0xFF800000> : vector<1x8xf32>
    %18 = vector.multi_reduction <maximumf>, %17, %cst_17 [2] : vector<1x8x8xf32> to vector<1x8xf32>
    %19 = vector.shape_cast %18 : vector<1x8xf32> to vector<1x8x1xf32>
    %20 = vector.broadcast %19 : vector<1x8x1xf32> to vector<1x8x8xf32>
    %21 = arith.subf %17, %20 : vector<1x8x8xf32>
    %22 = math.exp %21 : vector<1x8x8xf32>
    %cst_18 = arith.constant dense<0.000000e+00> : vector<1x8xf32>
    %23 = vector.multi_reduction <add>, %22, %cst_18 [2] : vector<1x8x8xf32> to vector<1x8xf32>
    %24 = vector.shape_cast %23 : vector<1x8xf32> to vector<1x8x1xf32>
    %25 = tpu.reciprocal %24 {approx = true} : vector<1x8x1xf32> -> vector<1x8x1xf32>
    %26 = arith.mulf %24, %25 : vector<1x8x1xf32>
    %cst_19 = arith.constant 2.000000e+00 : f32
    %27 = vector.broadcast %cst_19 : f32 to vector<1x8x1xf32>
    %28 = arith.subf %27, %26 : vector<1x8x1xf32>
    %29 = arith.mulf %25, %28 : vector<1x8x1xf32>
    %30 = vector.broadcast %29 : vector<1x8x1xf32> to vector<1x8x8xf32>
    %31 = arith.mulf %22, %30 : vector<1x8x8xf32>
    "tpu.trace_start"() <{level = 10 : i32, message = "bts,bsd->btd"}> : () -> ()
    %cst_20 = arith.constant dense<0.000000e+00> : vector<1x8x128xf32>
    %32 = tpu.matmul %31, %15, %cst_20 {dimension_numbers = #tpu.dot_dimension_numbers<[2], [1], [1], [2], [0, 0, 0, 1, 1, 2], [0], [0]>} : vector<1x8x8xf32>, vector<1x8x128xf32>, vector<1x8x128xf32> -> vector<1x8x128xf32>
    "tpu.trace_stop"() : () -> ()
    %c0_21 = arith.constant 0 : index
    %c0_22 = arith.constant 0 : index
    %c0_23 = arith.constant 0 : index
    %33 = vector.load %arg7[%c0_21, %c0_22, %c0_23] : memref<1x8x512xf32, #tpu.memory_space<vmem>>, vector<1x8x128xf32>
    tpu.vector_store %arg7[%c0_21, %c0_22, %c0_23], %32 {strides = array<i32>} : memref<1x8x512xf32, #tpu.memory_space<vmem>>, vector<1x8x128xf32>,
    %c0_24 = arith.constant 0 : index
    %c0_25 = arith.constant 0 : index
    %c128 = arith.constant 128 : index
    %34 = vector.load %arg6[%c0_24, %c0_25, %c128] : memref<1x8x1536xf32, #tpu.memory_space<vmem>>, vector<1x8x128xf32>
    %c0_26 = arith.constant 0 : index
    %c0_27 = arith.constant 0 : index
    %c640 = arith.constant 640 : index
    %35 = vector.load %arg6[%c0_26, %c0_27, %c640] : memref<1x8x1536xf32, #tpu.memory_space<vmem>>, vector<1x8x128xf32>
    %c0_28 = arith.constant 0 : index
    %c0_29 = arith.constant 0 : index
    %c1152 = arith.constant 1152 : index
    %36 = vector.load %arg6[%c0_28, %c0_29, %c1152] : memref<1x8x1536xf32, #tpu.memory_space<vmem>>, vector<1x8x128xf32>
    "tpu.trace_start"() <{level = 10 : i32, message = "btd,bsd->bts"}> : () -> ()
    %cst_30 = arith.constant dense<0.000000e+00> : vector<1x8x8xf32>
    %37 = tpu.matmul %34, %35, %cst_30 {dimension_numbers = #tpu.dot_dimension_numbers<[2], [2], [1], [1], [0, 0, 0, 1, 1, 1], [0], [0]>} : vector<1x8x128xf32>, vector<1x8x128xf32>, vector<1x8x8xf32> -> vector<1x8x8xf32>
    "tpu.trace_stop"() : () -> ()
    %38 = arith.addf %37, %12 : vector<1x8x8xf32>
    %cst_31 = arith.constant dense<0xFF800000> : vector<1x8xf32>
    %39 = vector.multi_reduction <maximumf>, %38, %cst_31 [2] : vector<1x8x8xf32> to vector<1x8xf32>
    %40 = vector.shape_cast %39 : vector<1x8xf32> to vector<1x8x1xf32>
    %41 = vector.broadcast %40 : vector<1x8x1xf32> to vector<1x8x8xf32>
    %42 = arith.subf %38, %41 : vector<1x8x8xf32>
    %43 = math.exp %42 : vector<1x8x8xf32>
    %cst_32 = arith.constant dense<0.000000e+00> : vector<1x8xf32>
    %44 = vector.multi_reduction <add>, %43, %cst_32 [2] : vector<1x8x8xf32> to vector<1x8xf32>
    %45 = vector.shape_cast %44 : vector<1x8xf32> to vector<1x8x1xf32>
    %46 = tpu.reciprocal %45 {approx = true} : vector<1x8x1xf32> -> vector<1x8x1xf32>
    %47 = arith.mulf %45, %46 : vector<1x8x1xf32>
    %cst_33 = arith.constant 2.000000e+00 : f32
    %48 = vector.broadcast %cst_33 : f32 to vector<1x8x1xf32>
    %49 = arith.subf %48, %47 : vector<1x8x1xf32>
    %50 = arith.mulf %46, %49 : vector<1x8x1xf32>
    %51 = vector.broadcast %50 : vector<1x8x1xf32> to vector<1x8x8xf32>
    %52 = arith.mulf %43, %51 : vector<1x8x8xf32>
    "tpu.trace_start"() <{level = 10 : i32, message = "bts,bsd->btd"}> : () -> ()
    %cst_34 = arith.constant dense<0.000000e+00> : vector<1x8x128xf32>
    %53 = tpu.matmul %52, %36, %cst_34 {dimension_numbers = #tpu.dot_dimension_numbers<[2], [1], [1], [2], [0, 0, 0, 1, 1, 2], [0], [0]>} : vector<1x8x8xf32>, vector<1x8x128xf32>, vector<1x8x128xf32> -> vector<1x8x128xf32>
    "tpu.trace_stop"() : () -> ()
    %c0_35 = arith.constant 0 : index
    %c0_36 = arith.constant 0 : index
    %c128_37 = arith.constant 128 : index
    %54 = vector.load %arg7[%c0_35, %c0_36, %c128_37] : memref<1x8x512xf32, #tpu.memory_space<vmem>>, vector<1x8x128xf32>
    tpu.vector_store %arg7[%c0_35, %c0_36, %c128_37], %53 {strides = array<i32>} : memref<1x8x512xf32, #tpu.memory_space<vmem>>, vector<1x8x128xf32>,
    %c0_38 = arith.constant 0 : index
    %c0_39 = arith.constant 0 : index
    %c256 = arith.constant 256 : index
    %55 = vector.load %arg6[%c0_38, %c0_39, %c256] : memref<1x8x1536xf32, #tpu.memory_space<vmem>>, vector<1x8x128xf32>
    %c0_40 = arith.constant 0 : index
    %c0_41 = arith.constant 0 : index
    %c768 = arith.constant 768 : index
    %56 = vector.load %arg6[%c0_40, %c0_41, %c768] : memref<1x8x1536xf32, #tpu.memory_space<vmem>>, vector<1x8x128xf32>
    %c0_42 = arith.constant 0 : index
    %c0_43 = arith.constant 0 : index
    %c1280 = arith.constant 1280 : index
    %57 = vector.load %arg6[%c0_42, %c0_43, %c1280] : memref<1x8x1536xf32, #tpu.memory_space<vmem>>, vector<1x8x128xf32>
    "tpu.trace_start"() <{level = 10 : i32, message = "btd,bsd->bts"}> : () -> ()
    %cst_44 = arith.constant dense<0.000000e+00> : vector<1x8x8xf32>
    %58 = tpu.matmul %55, %56, %cst_44 {dimension_numbers = #tpu.dot_dimension_numbers<[2], [2], [1], [1], [0, 0, 0, 1, 1, 1], [0], [0]>} : vector<1x8x128xf32>, vector<1x8x128xf32>, vector<1x8x8xf32> -> vector<1x8x8xf32>
    "tpu.trace_stop"() : () -> ()
    %59 = arith.addf %58, %12 : vector<1x8x8xf32>
    %cst_45 = arith.constant dense<0xFF800000> : vector<1x8xf32>
    %60 = vector.multi_reduction <maximumf>, %59, %cst_45 [2] : vector<1x8x8xf32> to vector<1x8xf32>
    %61 = vector.shape_cast %60 : vector<1x8xf32> to vector<1x8x1xf32>
    %62 = vector.broadcast %61 : vector<1x8x1xf32> to vector<1x8x8xf32>
    %63 = arith.subf %59, %62 : vector<1x8x8xf32>
    %64 = math.exp %63 : vector<1x8x8xf32>
    %cst_46 = arith.constant dense<0.000000e+00> : vector<1x8xf32>
    %65 = vector.multi_reduction <add>, %64, %cst_46 [2] : vector<1x8x8xf32> to vector<1x8xf32>
    %66 = vector.shape_cast %65 : vector<1x8xf32> to vector<1x8x1xf32>
    %67 = tpu.reciprocal %66 {approx = true} : vector<1x8x1xf32> -> vector<1x8x1xf32>
    %68 = arith.mulf %66, %67 : vector<1x8x1xf32>
    %cst_47 = arith.constant 2.000000e+00 : f32
    %69 = vector.broadcast %cst_47 : f32 to vector<1x8x1xf32>
    %70 = arith.subf %69, %68 : vector<1x8x1xf32>
    %71 = arith.mulf %67, %70 : vector<1x8x1xf32>
    %72 = vector.broadcast %71 : vector<1x8x1xf32> to vector<1x8x8xf32>
    %73 = arith.mulf %64, %72 : vector<1x8x8xf32>
    "tpu.trace_start"() <{level = 10 : i32, message = "bts,bsd->btd"}> : () -> ()
    %cst_48 = arith.constant dense<0.000000e+00> : vector<1x8x128xf32>
    %74 = tpu.matmul %73, %57, %cst_48 {dimension_numbers = #tpu.dot_dimension_numbers<[2], [1], [1], [2], [0, 0, 0, 1, 1, 2], [0], [0]>} : vector<1x8x8xf32>, vector<1x8x128xf32>, vector<1x8x128xf32> -> vector<1x8x128xf32>
    "tpu.trace_stop"() : () -> ()
    %c0_49 = arith.constant 0 : index
    %c0_50 = arith.constant 0 : index
    %c256_51 = arith.constant 256 : index
    %75 = vector.load %arg7[%c0_49, %c0_50, %c256_51] : memref<1x8x512xf32, #tpu.memory_space<vmem>>, vector<1x8x128xf32>
    tpu.vector_store %arg7[%c0_49, %c0_50, %c256_51], %74 {strides = array<i32>} : memref<1x8x512xf32, #tpu.memory_space<vmem>>, vector<1x8x128xf32>,
    %c0_52 = arith.constant 0 : index
    %c0_53 = arith.constant 0 : index
    %c384 = arith.constant 384 : index
    %76 = vector.load %arg6[%c0_52, %c0_53, %c384] : memref<1x8x1536xf32, #tpu.memory_space<vmem>>, vector<1x8x128xf32>
    %c0_54 = arith.constant 0 : index
    %c0_55 = arith.constant 0 : index
    %c896 = arith.constant 896 : index
    %77 = vector.load %arg6[%c0_54, %c0_55, %c896] : memref<1x8x1536xf32, #tpu.memory_space<vmem>>, vector<1x8x128xf32>
    %c0_56 = arith.constant 0 : index
    %c0_57 = arith.constant 0 : index
    %c1408 = arith.constant 1408 : index
    %78 = vector.load %arg6[%c0_56, %c0_57, %c1408] : memref<1x8x1536xf32, #tpu.memory_space<vmem>>, vector<1x8x128xf32>
    "tpu.trace_start"() <{level = 10 : i32, message = "btd,bsd->bts"}> : () -> ()
    %cst_58 = arith.constant dense<0.000000e+00> : vector<1x8x8xf32>
    %79 = tpu.matmul %76, %77, %cst_58 {dimension_numbers = #tpu.dot_dimension_numbers<[2], [2], [1], [1], [0, 0, 0, 1, 1, 1], [0], [0]>} : vector<1x8x128xf32>, vector<1x8x128xf32>, vector<1x8x8xf32> -> vector<1x8x8xf32>
    "tpu.trace_stop"() : () -> ()
    %80 = arith.addf %79, %12 : vector<1x8x8xf32>
    %cst_59 = arith.constant dense<0xFF800000> : vector<1x8xf32>
    %81 = vector.multi_reduction <maximumf>, %80, %cst_59 [2] : vector<1x8x8xf32> to vector<1x8xf32>
    %82 = vector.shape_cast %81 : vector<1x8xf32> to vector<1x8x1xf32>
    %83 = vector.broadcast %82 : vector<1x8x1xf32> to vector<1x8x8xf32>
    %84 = arith.subf %80, %83 : vector<1x8x8xf32>
    %85 = math.exp %84 : vector<1x8x8xf32>
    %cst_60 = arith.constant dense<0.000000e+00> : vector<1x8xf32>
    %86 = vector.multi_reduction <add>, %85, %cst_60 [2] : vector<1x8x8xf32> to vector<1x8xf32>
    %87 = vector.shape_cast %86 : vector<1x8xf32> to vector<1x8x1xf32>
    %88 = tpu.reciprocal %87 {approx = true} : vector<1x8x1xf32> -> vector<1x8x1xf32>
    %89 = arith.mulf %87, %88 : vector<1x8x1xf32>
    %cst_61 = arith.constant 2.000000e+00 : f32
    %90 = vector.broadcast %cst_61 : f32 to vector<1x8x1xf32>
    %91 = arith.subf %90, %89 : vector<1x8x1xf32>
    %92 = arith.mulf %88, %91 : vector<1x8x1xf32>
    %93 = vector.broadcast %92 : vector<1x8x1xf32> to vector<1x8x8xf32>
    %94 = arith.mulf %85, %93 : vector<1x8x8xf32>
    "tpu.trace_start"() <{level = 10 : i32, message = "bts,bsd->btd"}> : () -> ()
    %cst_62 = arith.constant dense<0.000000e+00> : vector<1x8x128xf32>
    %95 = tpu.matmul %94, %78, %cst_62 {dimension_numbers = #tpu.dot_dimension_numbers<[2], [1], [1], [2], [0, 0, 0, 1, 1, 2], [0], [0]>} : vector<1x8x8xf32>, vector<1x8x128xf32>, vector<1x8x128xf32> -> vector<1x8x128xf32>
    "tpu.trace_stop"() : () -> ()
    %c0_63 = arith.constant 0 : index
    %c0_64 = arith.constant 0 : index
    %c384_65 = arith.constant 384 : index
    %96 = vector.load %arg7[%c0_63, %c0_64, %c384_65] : memref<1x8x512xf32, #tpu.memory_space<vmem>>, vector<1x8x128xf32>
    tpu.vector_store %arg7[%c0_63, %c0_64, %c384_65], %95 {strides = array<i32>} : memref<1x8x512xf32, #tpu.memory_space<vmem>>, vector<1x8x128xf32>,
    %c0_66 = arith.constant 0 : index
    %c0_67 = arith.constant 0 : index
    %c0_68 = arith.constant 0 : index
    %97 = vector.load %arg7[%c0_66, %c0_67, %c0_68] : memref<1x8x512xf32, #tpu.memory_space<vmem>>, vector<1x8x512xf32>
    %98 = vector.shape_cast %97 : vector<1x8x512xf32> to vector<8x512xf32>
    %c0_69 = arith.constant 0 : index
    %c0_70 = arith.constant 0 : index
    %99 = vector.load %arg3[%c0_69, %c0_70] : memref<512x32xf32, #tpu.memory_space<vmem>>, vector<512x32xf32>
    %cst_71 = arith.constant dense<0.000000e+00> : vector<8x32xf32>
    %100 = tpu.matmul %98, %99, %cst_71 {dimension_numbers = #tpu.dot_dimension_numbers<[1], [0], [0], [1], [0, 0, 1, 1], [], []>} : vector<8x512xf32>, vector<512x32xf32>, vector<8x32xf32> -> vector<8x32xf32>
    %c0_72 = arith.constant 0 : index
    %c0_73 = arith.constant 0 : index
    %101 = vector.load %arg4[%c0_72, %c0_73] : memref<1x32xf32, #tpu.memory_space<vmem>>, vector<1x32xf32>
    %102 = vector.broadcast %101 : vector<1x32xf32> to vector<8x32xf32>
    %103 = arith.addf %100, %102 : vector<8x32xf32>
    %104 = vector.shape_cast %103 : vector<8x32xf32> to vector<1x8x32xf32>
    %c0_74 = arith.constant 0 : index
    %c0_75 = arith.constant 0 : index
    %c0_76 = arith.constant 0 : index
    %105 = vector.load %arg5[%c0_74, %c0_75, %c0_76] : memref<1x8x32xf32, #tpu.memory_space<vmem>>, vector<1x8x32xf32>
    tpu.vector_store %arg5[%c0_74, %c0_75, %c0_76], %104 {strides = array<i32>} : memref<1x8x32xf32, #tpu.memory_space<vmem>>, vector<1x8x32xf32>,
    return
  }
  func.func @transform_0(%arg0: i32) -> (i32, i32, i32) {
    %c0_i32 = arith.constant 0 : i32
    %c0_i32_0 = arith.constant 0 : i32
    %c0_i32_1 = arith.constant 0 : i32
    return %arg0, %c0_i32, %c0_i32_0 : i32, i32, i32
  }
  func.func @transform_1(%arg0: i32) -> (i32, i32) {
    %c0_i32 = arith.constant 0 : i32
    %c0_i32_0 = arith.constant 0 : i32
    %c0_i32_1 = arith.constant 0 : i32
    return %c0_i32, %c0_i32_0 : i32, i32
  }
  func.func @transform_2(%arg0: i32) -> (i32, i32) {
    %c0_i32 = arith.constant 0 : i32
    %c0_i32_0 = arith.constant 0 : i32
    %c0_i32_1 = arith.constant 0 : i32
    return %c0_i32, %c0_i32_0 : i32, i32
  }
  func.func @transform_3(%arg0: i32) -> (i32, i32) {
    %c0_i32 = arith.constant 0 : i32
    %c0_i32_0 = arith.constant 0 : i32
    %c0_i32_1 = arith.constant 0 : i32
    return %c0_i32, %c0_i32_0 : i32, i32
  }
  func.func @transform_4(%arg0: i32) -> (i32, i32, i32) {
    %c0_i32 = arith.constant 0 : i32
    %c0_i32_0 = arith.constant 0 : i32
    %c0_i32_1 = arith.constant 0 : i32
    return %arg0, %c0_i32, %c0_i32_0 : i32, i32, i32
  }
}

</mosaic_0001>

<llo_original>
// kernel: tpu_custom_call.1
$region0: #{tpu_custom_call.1}
  #allocation0 [shape = 'u32[]', space=smem, size = 0x4, offset = 0x4, fixed_abs, tag = 'smem constant byte address 0x4 - core index']
  #allocation1 [shape = 'u32[144,128]{1,0:T(1,128)}', space=vmem, size = 0x12000, scoped, tag = 'internal scratch']
  #allocation2 [shape = 'f32[1,8,1536]{2,1,0:T(8,128)}', space=vmem, size = 0xc000, scoped, tag = 'scratch operand']
  #allocation3 [shape = 'f32[1,8,512]{2,1,0:T(8,128)}', space=vmem, size = 0x4000, scoped, tag = 'scratch operand']
  %s0 = inlined_call_operand.vmem [shape: f32[2,8,32], index: 0, kind: input, shape index: {}]
  %s1 = inlined_call_operand.vmem [shape: f32[32,1536], index: 1, kind: input, shape index: {}]
  %s2 = inlined_call_operand.vmem [shape: f32[512,32], index: 2, kind: input, shape index: {}]
  %s3 = inlined_call_operand.vmem [shape: f32[1,32], index: 3, kind: input, shape index: {}]
  %s4 = inlined_call_operand.hbm [shape: f32[2,8,32], index: 4, kind: output, shape index: {}]
  %s5 = sld [smem:[#allocation0]]
  $region49: #{tpu_custom_call.1} parent=0
    _
  %s7 = ssub.s32 1, %s5
  %s8 = scalar_select 0, %s7, %s5
  $region1: #{tpu_custom_call.1} parent=0
    #allocation4 [shape = 'u8[8192]{0}', space=vmem, size = 0x2000, scoped, tag = 'output window, operand 0']
    #allocation5 [shape = 's32[2]{0}', space=sflag, size = 0x8, scoped, tag = 'scoped memory for tpu_custom_call.1']
    %9 = vsyncpa [#allocation5], 0
    %s10 = scalar_lea.sflag [#allocation5], 1
    %11 = vsyncpa %s10, 0
    loop: start=0, step=1, limit=4
    $region2: #{tpu_custom_call.1} parent=1 // loop_pre_header
      _
    $region3: #{tpu_custom_call.1} parent=1 // loop_header
      %s13 = sphi 0, %s17
      %p14 = scmp.ge.s32.totalorder %s13, 4
      %s23 = sphi 0, %s25
      %s26 = sphi 0, %s23
      %s27 = sphi 0, %s26
      %s43 = sphi 0, %s27
      %s47 = sphi 0, %s47
      %s49 = sphi 0, %s47
      %s50 = sphi 0, %s49
      %s64 = sphi 0, %s50
      %s68 = sphi 0, %s68
      %s70 = sphi 0, %s68
      %s71 = sphi 0, %s70
      %s85 = sphi 0, %s71
      %s89 = sphi 0, %s89
      %s91 = sphi 0, %s89
      %s92 = sphi 0, %s91
      %s106 = sphi 0, %s92
      %s112 = sphi 0, %s114
      %s115 = sphi 0, %s112
      %s116 = sphi 0, %s115
      %s132 = sphi 0, %s116
    $region4: #{tpu_custom_call.1} parent=1 // loop_header_branch
      %16 = sbr.rel (%p14) target = $region8
    $region5: #{tpu_custom_call.1} parent=1 // loop_body
      %s18 = ssub.s32 %s13, 1
      %s19 = ssub.s32 %s13, 2
      %s20 = sadd.s32 %s13, 1
      %s21 = ssub.s32 %s13, %s20
      %p22 = scmp.eq.s32.totalorder %s21, 0
      %s24 = sadd.s32 %s23, 1
      %s25 = scalar_select %p22, %s23, %s24
      %p28 = pneg %p22
      %p29 = scmp.eq.s32.totalorder %s13, 1
      %p30 = por %p28, %p29
      %p31 = scmp.ne.s32.totalorder %s23, %s26
      %p32 = scmp.eq.s32.totalorder %s13, 0
      %p33 = por %p31, %p32
      %p34 = scmp.ne.s32.totalorder %s23, %s26
      %p35 = scmp.eq.s32.totalorder %s18, 1
      %p36 = por %p34, %p35
      %p37 = scmp.ne.s32.totalorder %s26, %s27
      %p38 = scmp.eq.s32.totalorder %s18, 0
      %p39 = por %p37, %p38
      %p40 = scmp.ne.s32.totalorder %s26, %s27
      %p41 = scmp.eq.s32.totalorder %s19, 1
      %p42 = por %p40, %p41
      %p44 = scmp.ne.s32.totalorder %s27, %s43
      %p45 = scmp.eq.s32.totalorder %s19, 0
      %p46 = por %p44, %p45
      %s48 = sadd.s32 %s47, 1
      %p51 = scmp.eq.s32.totalorder %s13, 1
      %p52 = scmp.ne.s32.totalorder %s47, %s49
      %p53 = scmp.eq.s32.totalorder %s13, 0
      %p54 = por %p52, %p53
      %p55 = scmp.ne.s32.totalorder %s47, %s49
      %p56 = scmp.eq.s32.totalorder %s18, 1
      %p57 = por %p55, %p56
      %p58 = scmp.ne.s32.totalorder %s49, %s50
      %p59 = scmp.eq.s32.totalorder %s18, 0
      %p60 = por %p58, %p59
      %p61 = scmp.ne.s32.totalorder %s49, %s50
      %p62 = scmp.eq.s32.totalorder %s19, 1
      %p63 = por %p61, %p62
      %p65 = scmp.ne.s32.totalorder %s50, %s64
      %p66 = scmp.eq.s32.totalorder %s19, 0
      %p67 = por %p65, %p66
      %s69 = sadd.s32 %s68, 1
      %p72 = scmp.eq.s32.totalorder %s13, 1
      %p73 = scmp.ne.s32.totalorder %s68, %s70
      %p74 = scmp.eq.s32.totalorder %s13, 0
      %p75 = por %p73, %p74
      %p76 = scmp.ne.s32.totalorder %s68, %s70
      %p77 = scmp.eq.s32.totalorder %s18, 1
      %p78 = por %p76, %p77
      %p79 = scmp.ne.s32.totalorder %s70, %s71
      %p80 = scmp.eq.s32.totalorder %s18, 0
      %p81 = por %p79, %p80
      %p82 = scmp.ne.s32.totalorder %s70, %s71
      %p83 = scmp.eq.s32.totalorder %s19, 1
      %p84 = por %p82, %p83
      %p86 = scmp.ne.s32.totalorder %s71, %s85
      %p87 = scmp.eq.s32.totalorder %s19, 0
      %p88 = por %p86, %p87
      %s90 = sadd.s32 %s89, 1
      %p93 = scmp.eq.s32.totalorder %s13, 1
      %p94 = scmp.ne.s32.totalorder %s89, %s91
      %p95 = scmp.eq.s32.totalorder %s13, 0
      %p96 = por %p94, %p95
      %p97 = scmp.ne.s32.totalorder %s89, %s91
      %p98 = scmp.eq.s32.totalorder %s18, 1
      %p99 = por %p97, %p98
      %p100 = scmp.ne.s32.totalorder %s91, %s92
      %p101 = scmp.eq.s32.totalorder %s18, 0
      %p102 = por %p100, %p101
      %p103 = scmp.ne.s32.totalorder %s91, %s92
      %p104 = scmp.eq.s32.totalorder %s19, 1
      %p105 = por %p103, %p104
      %p107 = scmp.ne.s32.totalorder %s92, %s106
      %p108 = scmp.eq.s32.totalorder %s19, 0
      %p109 = por %p107, %p108
      %s110 = ssub.s32 %s13, %s20
      %p111 = scmp.eq.s32.totalorder %s110, 0
      %s113 = sadd.s32 %s112, 1
      %s114 = scalar_select %p111, %s112, %s113
      %p117 = pneg %p111
      %p118 = scmp.eq.s32.totalorder %s13, 1
      %p119 = por %p117, %p118
      %p120 = scmp.ne.s32.totalorder %s112, %s115
      %p121 = scmp.eq.s32.totalorder %s13, 0
      %p122 = por %p120, %p121
      %p123 = scmp.ne.s32.totalorder %s112, %s115
      %p124 = scmp.eq.s32.totalorder %s18, 1
      %p125 = por %p123, %p124
      %p126 = scmp.ne.s32.totalorder %s115, %s116
      %p127 = scmp.eq.s32.totalorder %s18, 0
      %p128 = por %p126, %p127
      %p129 = scmp.ne.s32.totalorder %s115, %s116
      %p130 = scmp.eq.s32.totalorder %s19, 1
      %p131 = por %p129, %p130
      %p133 = scmp.ne.s32.totalorder %s116, %s132
      %p134 = scmp.eq.s32.totalorder %s19, 0
      %p135 = por %p133, %p134
      %p136 = scmp.le.s32.totalorder 1, %s13
      %p137 = scmp.lt.s32.totalorder %s13, 3
      %p138 = pnand %p136, %p137
      %p139 = pneg %p138
      // Predicated region
      $region9: #{tpu_custom_call.1} parent=5 // pred_check
        _
      $region10: #{tpu_custom_call.1} parent=5 // pred_check_branch
        %141 = sbr.rel (%p138) target = $region12
      $region11: #{tpu_custom_call.1} parent=5 // pred_region
        %s142 = ssub.s32 %s13, 1
        // Predicated region
        $region13: #{tpu_custom_call.1} parent=11 // pred_check
          %p143 = pneg %p60
        $region14: #{tpu_custom_call.1} parent=11 // pred_check_branch
          %145 = sbr.rel (%p143) target = $region16
        $region15: #{tpu_custom_call.1} parent=11 // pred_region
          _
        $region16: #{tpu_custom_call.1} parent=11 // pred_fallthru
          _
        // Predicated region
        $region17: #{tpu_custom_call.1} parent=11 // pred_check
          %p146 = pneg %p81
        $region18: #{tpu_custom_call.1} parent=11 // pred_check_branch
          %148 = sbr.rel (%p146) target = $region20
        $region19: #{tpu_custom_call.1} parent=11 // pred_region
          _
        $region20: #{tpu_custom_call.1} parent=11 // pred_fallthru
          _
        // Predicated region
        $region21: #{tpu_custom_call.1} parent=11 // pred_check
          %p149 = pneg %p102
        $region22: #{tpu_custom_call.1} parent=11 // pred_check_branch
          %151 = sbr.rel (%p149) target = $region24
        $region23: #{tpu_custom_call.1} parent=11 // pred_region
          _
        $region24: #{tpu_custom_call.1} parent=11 // pred_fallthru
          _
      $region12: #{tpu_custom_call.1} parent=5 // pred_fallthru
        _
      %p152 = scmp.lt.s32.totalorder %s13, 2
      // Predicated region
      $region25: #{tpu_custom_call.1} parent=5 // pred_check
        %p153 = pneg %p152
      $region26: #{tpu_custom_call.1} parent=5 // pred_check_branch
        %155 = sbr.rel (%p153) target = $region28
      $region27: #{tpu_custom_call.1} parent=5 // pred_region
        // Predicated region
        $region29: #{tpu_custom_call.1} parent=27 // pred_check
          %p156 = pneg %p33
        $region30: #{tpu_custom_call.1} parent=27 // pred_check_branch
          %158 = sbr.rel (%p156) target = $region32
        $region31: #{tpu_custom_call.1} parent=27 // pred_region
          %p159 = scmp.lt.s32.totalorder %s13, 1
          %s160 = scalar_select %p159, %s13, 1
          %s161 = smul.addr %s160, 8
          %s162 = scalar_lea.vmem %s0, %s161
        $region32: #{tpu_custom_call.1} parent=27 // pred_fallthru
          _
      $region28: #{tpu_custom_call.1} parent=5 // pred_fallthru
        _
      %p163 = scmp.le.s32.totalorder 1, %s13
      %p164 = scmp.lt.s32.totalorder %s13, 3
      %p165 = pnand %p163, %p164
      %p166 = pneg %p165
      // Predicated region
      $region33: #{tpu_custom_call.1} parent=5 // pred_check
        _
      $region34: #{tpu_custom_call.1} parent=5 // pred_check_branch
        %168 = sbr.rel (%p165) target = $region36
      $region35: #{tpu_custom_call.1} parent=5 // pred_region
        %s169 = ssub.s32 %s13, 1
        %p170 = scmp.lt.s32.totalorder %s18, 1
        %s171 = scalar_select %p170, %s18, 1
        %s172 = smul.addr %s171, 8
        %s173 = scalar_lea.vmem %s0, %s172
        %p174 = pneg %p39
        %p175 = pneg %p36
        %p176 = pneg %p60
        %p177 = pneg %p57
        %p178 = pneg %p81
        %p179 = pneg %p78
        %p180 = pneg %p102
        %p181 = pneg %p99
        %p182 = pneg %p128
        %p183 = pneg %p125
        %s184 = sand.u32 %s115, 1
        %s185 = scalar_lea.sflag [#allocation5], %s184
        %s186 = sand.u32 %s115, 1
        %s187 = smul.addr %s186, 8
        %s188 = scalar_lea.vmem [#allocation4], %s187
        %p189 = scmp.lt.s32.totalorder %s18, 1
        %s190 = scalar_select %p189, %s18, 1
        %s191 = smul.addr %s190, 8
        %s192 = scalar_lea.vmem %s0, %s191
        %v193 = vld [vmem:[%s192] sm:$0xff]
        %v194 = vld [vmem:[%s1] sm:$0xff]
        %v195 = vld [vmem:[%s1 + $0x8] sm:$0xff]
        %v196 = vld [vmem:[%s1 + $0x10] sm:$0xff]
        %v197 = vld [vmem:[%s1 + $0x18] sm:$0xff]
        %v198 = vld [vmem:[%s1 + $0x20] sm:$0xff]
        %v199 = vld [vmem:[%s1 + $0x28] sm:$0xff]
        %v200 = vld [vmem:[%s1 + $0x30] sm:$0xff]
        %v201 = vld [vmem:[%s1 + $0x38] sm:$0xff]
        %v202 = vld [vmem:[%s1 + $0x40] sm:$0xff]
        %v203 = vld [vmem:[%s1 + $0x48] sm:$0xff]
        %v204 = vld [vmem:[%s1 + $0x50] sm:$0xff]
        %v205 = vld [vmem:[%s1 + $0x58] sm:$0xff]
        %v206 = vld [vmem:[%s1 + $0x60] sm:$0xff]
        %v207 = vld [vmem:[%s1 + $0x68] sm:$0xff]
        %v208 = vld [vmem:[%s1 + $0x70] sm:$0xff]
        %v209 = vld [vmem:[%s1 + $0x78] sm:$0xff]
        %v210 = vld [vmem:[%s1 + $0x80] sm:$0xff]
        %v211 = vld [vmem:[%s1 + $0x88] sm:$0xff]
        %v212 = vld [vmem:[%s1 + $0x90] sm:$0xff]
        %v213 = vld [vmem:[%s1 + $0x98] sm:$0xff]
        %v214 = vld [vmem:[%s1 + $0xa0] sm:$0xff]
        %v215 = vld [vmem:[%s1 + $0xa8] sm:$0xff]
        %v216 = vld [vmem:[%s1 + $0xb0] sm:$0xff]
        %v217 = vld [vmem:[%s1 + $0xb8] sm:$0xff]
        %v218 = vld [vmem:[%s1 + $0xc0] sm:$0xff]
        %v219 = vld [vmem:[%s1 + $0xc8] sm:$0xff]
        %v220 = vld [vmem:[%s1 + $0xd0] sm:$0xff]
        %v221 = vld [vmem:[%s1 + $0xd8] sm:$0xff]
        %v222 = vld [vmem:[%s1 + $0xe0] sm:$0xff]
        %v223 = vld [vmem:[%s1 + $0xe8] sm:$0xff]
        %v224 = vld [vmem:[%s1 + $0xf0] sm:$0xff]
        %v225 = vld [vmem:[%s1 + $0xf8] sm:$0xff]
        %v226 = vld [vmem:[%s1 + $0x100] sm:$0xff]
        %v227 = vld [vmem:[%s1 + $0x108] sm:$0xff]
        %v228 = vld [vmem:[%s1 + $0x110] sm:$0xff]
        %v229 = vld [vmem:[%s1 + $0x118] sm:$0xff]
        %v230 = vld [vmem:[%s1 + $0x120] sm:$0xff]
        %v231 = vld [vmem:[%s1 + $0x128] sm:$0xff]
        %v232 = vld [vmem:[%s1 + $0x130] sm:$0xff]
        %v233 = vld [vmem:[%s1 + $0x138] sm:$0xff]
        %v234 = vld [vmem:[%s1 + $0x140] sm:$0xff]
        %v235 = vld [vmem:[%s1 + $0x148] sm:$0xff]
        %v236 = vld [vmem:[%s1 + $0x150] sm:$0xff]
        %v237 = vld [vmem:[%s1 + $0x158] sm:$0xff]
        %v238 = vld [vmem:[%s1 + $0x160] sm:$0xff]
        %v239 = vld [vmem:[%s1 + $0x168] sm:$0xff]
        %v240 = vld [vmem:[%s1 + $0x170] sm:$0xff]
        %v241 = vld [vmem:[%s1 + $0x178] sm:$0xff]
        %vm242 = vcmask 261120
        %v244 = vsel %vm242, %v193, 0
        %246 = vmatprep.subr.mxu0 %v195
        %247 = vmatpush1.msra.mxu0 %v194
        %248 = vmatprep.subr.mxu0 %v207
        %249 = vmatpush1.msra.mxu0 %v206
        %250 = vmatprep.subr.mxu0 %v219
        %251 = vmatpush1.msra.mxu0 %v218
        %252 = vmatprep.subr.mxu0 %v231
        %253 = vmatpush1.msra.mxu0 %v230
        %254 = vmatprep.subr.mxu0 0.0
        %255 = vmatpush1.msra.mxu0 0.0
        %256 = vmatprep.subr.mxu0 0.0
        %257 = vmatpush1.msra.mxu0 0.0
        %258 = vmatprep.subr.mxu0 0.0
        %259 = vmatpush1.msra.mxu0 0.0
        %260 = vmatprep.subr.mxu0 0.0
        %261 = vmatpush1.msra.mxu0 0.0
        %262 = vmatprep.subr.mxu0 0.0
        %263 = vmatpush1.msra.mxu0 0.0
        %264 = vmatprep.subr.mxu0 0.0
        %265 = vmatpush1.msra.mxu0 0.0
        %266 = vmatprep.subr.mxu0 0.0
        %267 = vmatpush1.msra.mxu0 0.0
        %268 = vmatprep.subr.mxu0 0.0
        %269 = vmatpush1.msra.mxu0 0.0
        %270 = vmatprep.subr.mxu0 0.0
        %271 = vmatpush1.msra.mxu0 0.0
        %272 = vmatprep.subr.mxu0 0.0
        %273 = vmatpush1.msra.mxu0 0.0
        %274 = vmatprep.subr.mxu0 0.0
        %275 = vmatpush1.msra.mxu0 0.0
        %276 = vmatprep.subr.mxu0 0.0
        %277 = vmatpush1.msra.mxu0 0.0
        %278 = vmatprep.subr.mxu0 0.0
        %279 = vmatpush1.msra.mxu0 0.0
        %280 = vmatprep.subr.mxu0 0.0
        %281 = vmatpush1.msra.mxu0 0.0
        %282 = vmatprep.subr.mxu0 0.0
        %283 = vmatpush1.msra.mxu0 0.0
        %284 = vmatprep.subr.mxu0 0.0
        %285 = vmatpush1.msra.mxu0 0.0
        %286 = vmatprep.subr.mxu0 0.0
        %287 = vmatpush1.msra.mxu0 0.0
        %288 = vmatprep.subr.mxu0 0.0
        %289 = vmatpush1.msra.mxu0 0.0
        %290 = vmatprep.subr.mxu0 0.0
        %291 = vmatpush1.msra.mxu0 0.0
        %292 = vmatprep.subr.mxu0 0.0
        %293 = vmatpush1.msra.mxu0 0.0
        %294 = vmatprep.subr.mxu0 0.0
        %295 = vmatpush1.msra.mxu0 0.0
        %296 = vmatprep.subr.mxu0 0.0
        %297 = vmatpush1.msra.mxu0 0.0
        %298 = vmatprep.subr.mxu0 0.0
        %299 = vmatpush1.msra.mxu0 0.0
        %300 = vmatprep.subr.mxu0 0.0
        %301 = vmatpush1.msra.mxu0 0.0
        %302 = vmatprep.subr.mxu0 0.0
        %303 = vmatpush1.msra.mxu0 0.0
        %304 = vmatprep.subr.mxu0 0.0
        %305 = vmatpush1.msra.mxu0 0.0
        %306 = vmatprep.subr.mxu0 0.0
        %307 = vmatpush1.msra.mxu0 0.0
        %308 = vmatprep.subr.mxu0 0.0
        %309 = vmatpush1.msra.mxu0 0.0
        %310 = vmatprep.mubr.f32.mxu0 0.0
        %311 = vmatmul.mubr.f32.gmra.mrb[0].mxu0 %v244
        %v312 = vpop.f32.mrb[0].mxu0
        %v313 = vadd.f32 0.0, %v312
        %v314 = vpop.f32.mrb[0].mxu0
        %v315 = vadd.f32 0.0, %v314
        %316 = vdwg.mxu0
        %317 = vmatprep.subr.mxu0 %v197
        %318 = vmatpush1.msra.mxu0 %v196
        %319 = vmatprep.subr.mxu0 %v209
        %320 = vmatpush1.msra.mxu0 %v208
        %321 = vmatprep.subr.mxu0 %v221
        %322 = vmatpush1.msra.mxu0 %v220
        %323 = vmatprep.subr.mxu0 %v233
        %324 = vmatpush1.msra.mxu0 %v232
        %325 = vmatprep.subr.mxu0 0.0
        %326 = vmatpush1.msra.mxu0 0.0
        %327 = vmatprep.subr.mxu0 0.0
        %328 = vmatpush1.msra.mxu0 0.0
        %329 = vmatprep.subr.mxu0 0.0
        %330 = vmatpush1.msra.mxu0 0.0
        %331 = vmatprep.subr.mxu0 0.0
        %332 = vmatpush1.msra.mxu0 0.0
        %333 = vmatprep.subr.mxu0 0.0
        %334 = vmatpush1.msra.mxu0 0.0
        %335 = vmatprep.subr.mxu0 0.0
        %336 = vmatpush1.msra.mxu0 0.0
        %337 = vmatprep.subr.mxu0 0.0
        %338 = vmatpush1.msra.mxu0 0.0
        %339 = vmatprep.subr.mxu0 0.0
        %340 = vmatpush1.msra.mxu0 0.0
        %341 = vmatprep.subr.mxu0 0.0
        %342 = vmatpush1.msra.mxu0 0.0
        %343 = vmatprep.subr.mxu0 0.0
        %344 = vmatpush1.msra.mxu0 0.0
        %345 = vmatprep.subr.mxu0 0.0
        %346 = vmatpush1.msra.mxu0 0.0
        %347 = vmatprep.subr.mxu0 0.0
        %348 = vmatpush1.msra.mxu0 0.0
        %349 = vmatprep.subr.mxu0 0.0
        %350 = vmatpush1.msra.mxu0 0.0
        %351 = vmatprep.subr.mxu0 0.0
        %352 = vmatpush1.msra.mxu0 0.0
        %353 = vmatprep.subr.mxu0 0.0
        %354 = vmatpush1.msra.mxu0 0.0
        %355 = vmatprep.subr.mxu0 0.0
        %356 = vmatpush1.msra.mxu0 0.0
        %357 = vmatprep.subr.mxu0 0.0
        %358 = vmatpush1.msra.mxu0 0.0
        %359 = vmatprep.subr.mxu0 0.0
        %360 = vmatpush1.msra.mxu0 0.0
        %361 = vmatprep.subr.mxu0 0.0
        %362 = vmatpush1.msra.mxu0 0.0
        %363 = vmatprep.subr.mxu0 0.0
        %364 = vmatpush1.msra.mxu0 0.0
        %365 = vmatprep.subr.mxu0 0.0
        %366 = vmatpush1.msra.mxu0 0.0
        %367 = vmatprep.subr.mxu0 0.0
        %368 = vmatpush1.msra.mxu0 0.0
        %369 = vmatprep.subr.mxu0 0.0
        %370 = vmatpush1.msra.mxu0 0.0
        %371 = vmatprep.subr.mxu0 0.0
        %372 = vmatpush1.msra.mxu0 0.0
        %373 = vmatprep.subr.mxu0 0.0
        %374 = vmatpush1.msra.mxu0 0.0
        %375 = vmatprep.subr.mxu0 0.0
        %376 = vmatpush1.msra.mxu0 0.0
        %377 = vmatprep.subr.mxu0 0.0
        %378 = vmatpush1.msra.mxu0 0.0
        %379 = vmatprep.subr.mxu0 0.0
        %380 = vmatpush1.msra.mxu0 0.0
        %381 = vmatprep.mubr.f32.mxu0 0.0
        %382 = vmatmul.mubr.f32.gmra.mrb[0].mxu0 %v244
        %v383 = vpop.f32.mrb[0].mxu0
        %v384 = vadd.f32 0.0, %v383
        %v385 = vpop.f32.mrb[0].mxu0
        %v386 = vadd.f32 0.0, %v385
        %387 = vdwg.mxu0
        %388 = vmatprep.subr.mxu0 %v199
        %389 = vmatpush1.msra.mxu0 %v198
        %390 = vmatprep.subr.mxu0 %v211
        %391 = vmatpush1.msra.mxu0 %v210
        %392 = vmatprep.subr.mxu0 %v223
        %393 = vmatpush1.msra.mxu0 %v222
        %394 = vmatprep.subr.mxu0 %v235
        %395 = vmatpush1.msra.mxu0 %v234
        %396 = vmatprep.subr.mxu0 0.0
        %397 = vmatpush1.msra.mxu0 0.0
        %398 = vmatprep.subr.mxu0 0.0
        %399 = vmatpush1.msra.mxu0 0.0
        %400 = vmatprep.subr.mxu0 0.0
        %401 = vmatpush1.msra.mxu0 0.0
        %402 = vmatprep.subr.mxu0 0.0
        %403 = vmatpush1.msra.mxu0 0.0
        %404 = vmatprep.subr.mxu0 0.0
        %405 = vmatpush1.msra.mxu0 0.0
        %406 = vmatprep.subr.mxu0 0.0
        %407 = vmatpush1.msra.mxu0 0.0
        %408 = vmatprep.subr.mxu0 0.0
        %409 = vmatpush1.msra.mxu0 0.0
        %410 = vmatprep.subr.mxu0 0.0
        %411 = vmatpush1.msra.mxu0 0.0
        %412 = vmatprep.subr.mxu0 0.0
        %413 = vmatpush1.msra.mxu0 0.0
        %414 = vmatprep.subr.mxu0 0.0
        %415 = vmatpush1.msra.mxu0 0.0
        %416 = vmatprep.subr.mxu0 0.0
        %417 = vmatpush1.msra.mxu0 0.0
        %418 = vmatprep.subr.mxu0 0.0
        %419 = vmatpush1.msra.mxu0 0.0
        %420 = vmatprep.subr.mxu0 0.0
        %421 = vmatpush1.msra.mxu0 0.0
        %422 = vmatprep.subr.mxu0 0.0
        %423 = vmatpush1.msra.mxu0 0.0
        %424 = vmatprep.subr.mxu0 0.0
        %425 = vmatpush1.msra.mxu0 0.0
        %426 = vmatprep.subr.mxu0 0.0
        %427 = vmatpush1.msra.mxu0 0.0
        %428 = vmatprep.subr.mxu0 0.0
        %429 = vmatpush1.msra.mxu0 0.0
        %430 = vmatprep.subr.mxu0 0.0
        %431 = vmatpush1.msra.mxu0 0.0
        %432 = vmatprep.subr.mxu0 0.0
        %433 = vmatpush1.msra.mxu0 0.0
        %434 = vmatprep.subr.mxu0 0.0
        %435 = vmatpush1.msra.mxu0 0.0
        %436 = vmatprep.subr.mxu0 0.0
        %437 = vmatpush1.msra.mxu0 0.0
        %438 = vmatprep.subr.mxu0 0.0
        %439 = vmatpush1.msra.mxu0 0.0
        %440 = vmatprep.subr.mxu0 0.0
        %441 = vmatpush1.msra.mxu0 0.0
        %442 = vmatprep.subr.mxu0 0.0
        %443 = vmatpush1.msra.mxu0 0.0
        %444 = vmatprep.subr.mxu0 0.0
        %445 = vmatpush1.msra.mxu0 0.0
        %446 = vmatprep.subr.mxu0 0.0
        %447 = vmatpush1.msra.mxu0 0.0
        %448 = vmatprep.subr.mxu0 0.0
        %449 = vmatpush1.msra.mxu0 0.0
        %450 = vmatprep.subr.mxu0 0.0
        %451 = vmatpush1.msra.mxu0 0.0
        %452 = vmatprep.mubr.f32.mxu0 0.0
        %453 = vmatmul.mubr.f32.gmra.mrb[0].mxu0 %v244
        %v454 = vpop.f32.mrb[0].mxu0
        %v455 = vadd.f32 0.0, %v454
        %v456 = vpop.f32.mrb[0].mxu0
        %v457 = vadd.f32 0.0, %v456
        %458 = vdwg.mxu0
        %459 = vmatprep.subr.mxu0 %v201
        %460 = vmatpush1.msra.mxu0 %v200
        %461 = vmatprep.subr.mxu0 %v213
        %462 = vmatpush1.msra.mxu0 %v212
        %463 = vmatprep.subr.mxu0 %v225
        %464 = vmatpush1.msra.mxu0 %v224
        %465 = vmatprep.subr.mxu0 %v237
        %466 = vmatpush1.msra.mxu0 %v236
        %467 = vmatprep.subr.mxu0 0.0
        %468 = vmatpush1.msra.mxu0 0.0
        %469 = vmatprep.subr.mxu0 0.0
        %470 = vmatpush1.msra.mxu0 0.0
        %471 = vmatprep.subr.mxu0 0.0
        %472 = vmatpush1.msra.mxu0 0.0
        %473 = vmatprep.subr.mxu0 0.0
        %474 = vmatpush1.msra.mxu0 0.0
        %475 = vmatprep.subr.mxu0 0.0
        %476 = vmatpush1.msra.mxu0 0.0
        %477 = vmatprep.subr.mxu0 0.0
        %478 = vmatpush1.msra.mxu0 0.0
        %479 = vmatprep.subr.mxu0 0.0
        %480 = vmatpush1.msra.mxu0 0.0
        %481 = vmatprep.subr.mxu0 0.0
        %482 = vmatpush1.msra.mxu0 0.0
        %483 = vmatprep.subr.mxu0 0.0
        %484 = vmatpush1.msra.mxu0 0.0
        %485 = vmatprep.subr.mxu0 0.0
        %486 = vmatpush1.msra.mxu0 0.0
        %487 = vmatprep.subr.mxu0 0.0
        %488 = vmatpush1.msra.mxu0 0.0
        %489 = vmatprep.subr.mxu0 0.0
        %490 = vmatpush1.msra.mxu0 0.0
        %491 = vmatprep.subr.mxu0 0.0
        %492 = vmatpush1.msra.mxu0 0.0
        %493 = vmatprep.subr.mxu0 0.0
        %494 = vmatpush1.msra.mxu0 0.0
        %495 = vmatprep.subr.mxu0 0.0
        %496 = vmatpush1.msra.mxu0 0.0
        %497 = vmatprep.subr.mxu0 0.0
        %498 = vmatpush1.msra.mxu0 0.0
        %499 = vmatprep.subr.mxu0 0.0
        %500 = vmatpush1.msra.mxu0 0.0
        %501 = vmatprep.subr.mxu0 0.0
        %502 = vmatpush1.msra.mxu0 0.0
        %503 = vmatprep.subr.mxu0 0.0
        %504 = vmatpush1.msra.mxu0 0.0
        %505 = vmatprep.subr.mxu0 0.0
        %506 = vmatpush1.msra.mxu0 0.0
        %507 = vmatprep.subr.mxu0 0.0
        %508 = vmatpush1.msra.mxu0 0.0
        %509 = vmatprep.subr.mxu0 0.0
        %510 = vmatpush1.msra.mxu0 0.0
        %511 = vmatprep.subr.mxu0 0.0
        %512 = vmatpush1.msra.mxu0 0.0
        %513 = vmatprep.subr.mxu0 0.0
        %514 = vmatpush1.msra.mxu0 0.0
        %515 = vmatprep.subr.mxu0 0.0
        %516 = vmatpush1.msra.mxu0 0.0
        %517 = vmatprep.subr.mxu0 0.0
        %518 = vmatpush1.msra.mxu0 0.0
        %519 = vmatprep.subr.mxu0 0.0
        %520 = vmatpush1.msra.mxu0 0.0
        %521 = vmatprep.subr.mxu0 0.0
        %522 = vmatpush1.msra.mxu0 0.0
        %523 = vmatprep.mubr.f32.mxu0 0.0
        %524 = vmatmul.mubr.f32.gmra.mrb[0].mxu0 %v244
        %v525 = vpop.f32.mrb[0].mxu0
        %v526 = vadd.f32 0.0, %v525
        %v527 = vpop.f32.mrb[0].mxu0
        %v528 = vadd.f32 0.0, %v527
        %529 = vdwg.mxu0
        %530 = vmatprep.subr.mxu0 %v203
        %531 = vmatpush1.msra.mxu0 %v202
        %532 = vmatprep.subr.mxu0 %v215
        %533 = vmatpush1.msra.mxu0 %v214
        %534 = vmatprep.subr.mxu0 %v227
        %535 = vmatpush1.msra.mxu0 %v226
        %536 = vmatprep.subr.mxu0 %v239
        %537 = vmatpush1.msra.mxu0 %v238
        %538 = vmatprep.subr.mxu0 0.0
        %539 = vmatpush1.msra.mxu0 0.0
        %540 = vmatprep.subr.mxu0 0.0
        %541 = vmatpush1.msra.mxu0 0.0
        %542 = vmatprep.subr.mxu0 0.0
        %543 = vmatpush1.msra.mxu0 0.0
        %544 = vmatprep.subr.mxu0 0.0
        %545 = vmatpush1.msra.mxu0 0.0
        %546 = vmatprep.subr.mxu0 0.0
        %547 = vmatpush1.msra.mxu0 0.0
        %548 = vmatprep.subr.mxu0 0.0
        %549 = vmatpush1.msra.mxu0 0.0
        %550 = vmatprep.subr.mxu0 0.0
        %551 = vmatpush1.msra.mxu0 0.0
        %552 = vmatprep.subr.mxu0 0.0
        %553 = vmatpush1.msra.mxu0 0.0
        %554 = vmatprep.subr.mxu0 0.0
        %555 = vmatpush1.msra.mxu0 0.0
        %556 = vmatprep.subr.mxu0 0.0
        %557 = vmatpush1.msra.mxu0 0.0
        %558 = vmatprep.subr.mxu0 0.0
        %559 = vmatpush1.msra.mxu0 0.0
        %560 = vmatprep.subr.mxu0 0.0
        %561 = vmatpush1.msra.mxu0 0.0
        %562 = vmatprep.subr.mxu0 0.0
        %563 = vmatpush1.msra.mxu0 0.0
        %564 = vmatprep.subr.mxu0 0.0
        %565 = vmatpush1.msra.mxu0 0.0
        %566 = vmatprep.subr.mxu0 0.0
        %567 = vmatpush1.msra.mxu0 0.0
        %568 = vmatprep.subr.mxu0 0.0
        %569 = vmatpush1.msra.mxu0 0.0
        %570 = vmatprep.subr.mxu0 0.0
        %571 = vmatpush1.msra.mxu0 0.0
        %572 = vmatprep.subr.mxu0 0.0
        %573 = vmatpush1.msra.mxu0 0.0
        %574 = vmatprep.subr.mxu0 0.0
        %575 = vmatpush1.msra.mxu0 0.0
        %576 = vmatprep.subr.mxu0 0.0
        %577 = vmatpush1.msra.mxu0 0.0
        %578 = vmatprep.subr.mxu0 0.0
        %579 = vmatpush1.msra.mxu0 0.0
        %580 = vmatprep.subr.mxu0 0.0
        %581 = vmatpush1.msra.mxu0 0.0
        %582 = vmatprep.subr.mxu0 0.0
        %583 = vmatpush1.msra.mxu0 0.0
        %584 = vmatprep.subr.mxu0 0.0
        %585 = vmatpush1.msra.mxu0 0.0
        %586 = vmatprep.subr.mxu0 0.0
        %587 = vmatpush1.msra.mxu0 0.0
        %588 = vmatprep.subr.mxu0 0.0
        %589 = vmatpush1.msra.mxu0 0.0
        %590 = vmatprep.subr.mxu0 0.0
        %591 = vmatpush1.msra.mxu0 0.0
        %592 = vmatprep.subr.mxu0 0.0
        %593 = vmatpush1.msra.mxu0 0.0
        %594 = vmatprep.mubr.f32.mxu0 0.0
        %595 = vmatmul.mubr.f32.gmra.mrb[0].mxu0 %v244
        %v596 = vpop.f32.mrb[0].mxu0
        %v597 = vadd.f32 0.0, %v596
        %v598 = vpop.f32.mrb[0].mxu0
        %v599 = vadd.f32 0.0, %v598
        %600 = vdwg.mxu0
        %601 = vmatprep.subr.mxu0 %v205
        %602 = vmatpush1.msra.mxu0 %v204
        %603 = vmatprep.subr.mxu0 %v217
        %604 = vmatpush1.msra.mxu0 %v216
        %605 = vmatprep.subr.mxu0 %v229
        %606 = vmatpush1.msra.mxu0 %v228
        %607 = vmatprep.subr.mxu0 %v241
        %608 = vmatpush1.msra.mxu0 %v240
        %609 = vmatprep.subr.mxu0 0.0
        %610 = vmatpush1.msra.mxu0 0.0
        %611 = vmatprep.subr.mxu0 0.0
        %612 = vmatpush1.msra.mxu0 0.0
        %613 = vmatprep.subr.mxu0 0.0
        %614 = vmatpush1.msra.mxu0 0.0
        %615 = vmatprep.subr.mxu0 0.0
        %616 = vmatpush1.msra.mxu0 0.0
        %617 = vmatprep.subr.mxu0 0.0
        %618 = vmatpush1.msra.mxu0 0.0
        %619 = vmatprep.subr.mxu0 0.0
        %620 = vmatpush1.msra.mxu0 0.0
        %621 = vmatprep.subr.mxu0 0.0
        %622 = vmatpush1.msra.mxu0 0.0
        %623 = vmatprep.subr.mxu0 0.0
        %624 = vmatpush1.msra.mxu0 0.0
        %625 = vmatprep.subr.mxu0 0.0
        %626 = vmatpush1.msra.mxu0 0.0
        %627 = vmatprep.subr.mxu0 0.0
        %628 = vmatpush1.msra.mxu0 0.0
        %629 = vmatprep.subr.mxu0 0.0
        %630 = vmatpush1.msra.mxu0 0.0
        %631 = vmatprep.subr.mxu0 0.0
        %632 = vmatpush1.msra.mxu0 0.0
        %633 = vmatprep.subr.mxu0 0.0
        %634 = vmatpush1.msra.mxu0 0.0
        %635 = vmatprep.subr.mxu0 0.0
        %636 = vmatpush1.msra.mxu0 0.0
        %637 = vmatprep.subr.mxu0 0.0
        %638 = vmatpush1.msra.mxu0 0.0
        %639 = vmatprep.subr.mxu0 0.0
        %640 = vmatpush1.msra.mxu0 0.0
        %641 = vmatprep.subr.mxu0 0.0
        %642 = vmatpush1.msra.mxu0 0.0
        %643 = vmatprep.subr.mxu0 0.0
        %644 = vmatpush1.msra.mxu0 0.0
        %645 = vmatprep.subr.mxu0 0.0
        %646 = vmatpush1.msra.mxu0 0.0
        %647 = vmatprep.subr.mxu0 0.0
        %648 = vmatpush1.msra.mxu0 0.0
        %649 = vmatprep.subr.mxu0 0.0
        %650 = vmatpush1.msra.mxu0 0.0
        %651 = vmatprep.subr.mxu0 0.0
        %652 = vmatpush1.msra.mxu0 0.0
        %653 = vmatprep.subr.mxu0 0.0
        %654 = vmatpush1.msra.mxu0 0.0
        %655 = vmatprep.subr.mxu0 0.0
        %656 = vmatpush1.msra.mxu0 0.0
        %657 = vmatprep.subr.mxu0 0.0
        %658 = vmatpush1.msra.mxu0 0.0
        %659 = vmatprep.subr.mxu0 0.0
        %660 = vmatpush1.msra.mxu0 0.0
        %661 = vmatprep.subr.mxu0 0.0
        %662 = vmatpush1.msra.mxu0 0.0
        %663 = vmatprep.subr.mxu0 0.0
        %664 = vmatpush1.msra.mxu0 0.0
        %665 = vmatprep.mubr.f32.mxu0 0.0
        %666 = vmatmul.mubr.f32.gmra.mrb[0].mxu0 %v244
        %v667 = vpop.f32.mrb[0].mxu0
        %v668 = vadd.f32 0.0, %v667
        %v669 = vpop.f32.mrb[0].mxu0
        %v670 = vadd.f32 0.0, %v669
        %671 = vdwg.mxu0
        %672 = vst [vmem:[#allocation2] sm:$0xff] %v313
        %673 = vst [vmem:[#allocation2 + $0x8] sm:$0xff] %v315
        %674 = vst [vmem:[#allocation2 + $0x10] sm:$0xff] %v384
        %675 = vst [vmem:[#allocation2 + $0x18] sm:$0xff] %v386
        %676 = vst [vmem:[#allocation2 + $0x20] sm:$0xff] %v455
        %677 = vst [vmem:[#allocation2 + $0x28] sm:$0xff] %v457
        %678 = vst [vmem:[#allocation2 + $0x30] sm:$0xff] %v526
        %679 = vst [vmem:[#allocation2 + $0x38] sm:$0xff] %v528
        %680 = vst [vmem:[#allocation2 + $0x40] sm:$0xff] %v597
        %681 = vst [vmem:[#allocation2 + $0x48] sm:$0xff] %v599
        %682 = vst [vmem:[#allocation2 + $0x50] sm:$0xff] %v668
        %683 = vst [vmem:[#allocation2 + $0x58] sm:$0xff] %v670
        %v684 = vlaneseq
        %v685 = vshrl.u32 %v684, 7
        %v686 = vlaneseq
        %v687 = vand.u32 %v686, 127
        %vm688 = vcmp.ge.s32.totalorder %v687, %v685
        %v689 = vsel %vm688, -3.5355338e+09, 0.0
        %v690 = vld [vmem:[#allocation2] sm:$0xff]
        %v691 = vld [vmem:[#allocation2 + $0x20] sm:$0xff]
        %v692 = vld [vmem:[#allocation2 + $0x40] sm:$0xff]
        %693 = vmatprep.subr.mxu0 0.0
        %694 = vmatpush1.xpose.msra.mxu0 %v691
        %695 = vmatprep.subr.mxu0 0.0
        %696 = vmatpush1.xpose.msra.mxu0 0.0
        %697 = vmatprep.subr.mxu0 0.0
        %698 = vmatpush1.xpose.msra.mxu0 0.0
        %699 = vmatprep.subr.mxu0 0.0
        %700 = vmatpush1.xpose.msra.mxu0 0.0
        %701 = vmatprep.subr.mxu0 0.0
        %702 = vmatpush1.xpose.msra.mxu0 0.0
        %703 = vmatprep.subr.mxu0 0.0
        %704 = vmatpush1.xpose.msra.mxu0 0.0
        %705 = vmatprep.subr.mxu0 0.0
        %706 = vmatpush1.xpose.msra.mxu0 0.0
        %707 = vmatprep.subr.mxu0 0.0
        %708 = vmatpush1.xpose.msra.mxu0 0.0
        %709 = vmatprep.subr.mxu0 0.0
        %710 = vmatpush1.xpose.msra.mxu0 0.0
        %711 = vmatprep.subr.mxu0 0.0
        %712 = vmatpush1.xpose.msra.mxu0 0.0
        %713 = vmatprep.subr.mxu0 0.0
        %714 = vmatpush1.xpose.msra.mxu0 0.0
        %715 = vmatprep.subr.mxu0 0.0
        %716 = vmatpush1.xpose.msra.mxu0 0.0
        %717 = vmatprep.subr.mxu0 0.0
        %718 = vmatpush1.xpose.msra.mxu0 0.0
        %719 = vmatprep.subr.mxu0 0.0
        %720 = vmatpush1.xpose.msra.mxu0 0.0
        %721 = vmatprep.subr.mxu0 0.0
        %722 = vmatpush1.xpose.msra.mxu0 0.0
        %723 = vmatprep.subr.mxu0 0.0
        %724 = vmatpush1.xpose.msra.mxu0 0.0
        %725 = vmatprep.subr.mxu0 0.0
        %726 = vmatpush1.xpose.msra.mxu0 0.0
        %727 = vmatprep.subr.mxu0 0.0
        %728 = vmatpush1.xpose.msra.mxu0 0.0
        %729 = vmatprep.subr.mxu0 0.0
        %730 = vmatpush1.xpose.msra.mxu0 0.0
        %731 = vmatprep.subr.mxu0 0.0
        %732 = vmatpush1.xpose.msra.mxu0 0.0
        %733 = vmatprep.subr.mxu0 0.0
        %734 = vmatpush1.xpose.msra.mxu0 0.0
        %735 = vmatprep.subr.mxu0 0.0
        %736 = vmatpush1.xpose.msra.mxu0 0.0
        %737 = vmatprep.subr.mxu0 0.0
        %738 = vmatpush1.xpose.msra.mxu0 0.0
        %739 = vmatprep.subr.mxu0 0.0
        %740 = vmatpush1.xpose.msra.mxu0 0.0
        %741 = vmatprep.subr.mxu0 0.0
        %742 = vmatpush1.xpose.msra.mxu0 0.0
        %743 = vmatprep.subr.mxu0 0.0
        %744 = vmatpush1.xpose.msra.mxu0 0.0
        %745 = vmatprep.subr.mxu0 0.0
        %746 = vmatpush1.xpose.msra.mxu0 0.0
        %747 = vmatprep.subr.mxu0 0.0
        %748 = vmatpush1.xpose.msra.mxu0 0.0
        %749 = vmatprep.subr.mxu0 0.0
        %750 = vmatpush1.xpose.msra.mxu0 0.0
        %751 = vmatprep.subr.mxu0 0.0
        %752 = vmatpush1.xpose.msra.mxu0 0.0
        %753 = vmatprep.subr.mxu0 0.0
        %754 = vmatpush1.xpose.msra.mxu0 0.0
        %755 = vmatprep.subr.mxu0 0.0
        %756 = vmatpush1.xpose.msra.mxu0 0.0
        %757 = vmatprep.mubr.f32.mxu0 0.0
        %758 = vmatmul.mubr.f32.gmra.mrb[0].mxu0 %v690
        %v759 = vpop.f32.mrb[0].mxu0
        %v760 = vadd.f32 %v689, %v759
        %v761 = vpop.f32.mrb[0].mxu0
        %762 = vdwg.mxu0
        %vm763 = vcmask 64512
        %v764 = vsel %vm763, %v760, -inf
        %765 = vmax.xlane.f32.xlu0 %v764
        %v766 = vpop.xlane.xlu0 %765
        %v767 = vsub.f32 %v760, %v766
        %v768 = vmul.f32 %v767, 1.442695
        %v769 = vpow.pop %v768
        %v770 = vsel %vm763, %v769, 0.0
        %771 = vadd.xlane.f32.xlu0 %v770
        %v772 = vpop.xlane.xlu0 %771
        %v773 = vrcp.pop %v772
        %v774 = vmul.f32 %v772, %v773
        %v775 = vsub.f32 2.0, %v774
        %v776 = vmul.f32 %v773, %v775
        %v777 = vmul.f32 %v769, %v776
        %v779 = vsel %vm763, %v777, 0
        %781 = vmatprep.subr.mxu0 0.0
        %782 = vmatpush1.msra.mxu0 %v692
        %783 = vmatprep.subr.mxu0 0.0
        %784 = vmatpush1.msra.mxu0 0.0
        %785 = vmatprep.subr.mxu0 0.0
        %786 = vmatpush1.msra.mxu0 0.0
        %787 = vmatprep.subr.mxu0 0.0
        %788 = vmatpush1.msra.mxu0 0.0
        %789 = vmatprep.subr.mxu0 0.0
        %790 = vmatpush1.msra.mxu0 0.0
        %791 = vmatprep.subr.mxu0 0.0
        %792 = vmatpush1.msra.mxu0 0.0
        %793 = vmatprep.subr.mxu0 0.0
        %794 = vmatpush1.msra.mxu0 0.0
        %795 = vmatprep.subr.mxu0 0.0
        %796 = vmatpush1.msra.mxu0 0.0
        %797 = vmatprep.subr.mxu0 0.0
        %798 = vmatpush1.msra.mxu0 0.0
        %799 = vmatprep.subr.mxu0 0.0
        %800 = vmatpush1.msra.mxu0 0.0
        %801 = vmatprep.subr.mxu0 0.0
        %802 = vmatpush1.msra.mxu0 0.0
        %803 = vmatprep.subr.mxu0 0.0
        %804 = vmatpush1.msra.mxu0 0.0
        %805 = vmatprep.subr.mxu0 0.0
        %806 = vmatpush1.msra.mxu0 0.0
        %807 = vmatprep.subr.mxu0 0.0
        %808 = vmatpush1.msra.mxu0 0.0
        %809 = vmatprep.subr.mxu0 0.0
        %810 = vmatpush1.msra.mxu0 0.0
        %811 = vmatprep.subr.mxu0 0.0
        %812 = vmatpush1.msra.mxu0 0.0
        %813 = vmatprep.subr.mxu0 0.0
        %814 = vmatpush1.msra.mxu0 0.0
        %815 = vmatprep.subr.mxu0 0.0
        %816 = vmatpush1.msra.mxu0 0.0
        %817 = vmatprep.subr.mxu0 0.0
        %818 = vmatpush1.msra.mxu0 0.0
        %819 = vmatprep.subr.mxu0 0.0
        %820 = vmatpush1.msra.mxu0 0.0
        %821 = vmatprep.subr.mxu0 0.0
        %822 = vmatpush1.msra.mxu0 0.0
        %823 = vmatprep.subr.mxu0 0.0
        %824 = vmatpush1.msra.mxu0 0.0
        %825 = vmatprep.subr.mxu0 0.0
        %826 = vmatpush1.msra.mxu0 0.0
        %827 = vmatprep.subr.mxu0 0.0
        %828 = vmatpush1.msra.mxu0 0.0
        %829 = vmatprep.subr.mxu0 0.0
        %830 = vmatpush1.msra.mxu0 0.0
        %831 = vmatprep.subr.mxu0 0.0
        %832 = vmatpush1.msra.mxu0 0.0
        %833 = vmatprep.subr.mxu0 0.0
        %834 = vmatpush1.msra.mxu0 0.0
        %835 = vmatprep.subr.mxu0 0.0
        %836 = vmatpush1.msra.mxu0 0.0
        %837 = vmatprep.subr.mxu0 0.0
        %838 = vmatpush1.msra.mxu0 0.0
        %839 = vmatprep.subr.mxu0 0.0
        %840 = vmatpush1.msra.mxu0 0.0
        %841 = vmatprep.subr.mxu0 0.0
        %842 = vmatpush1.msra.mxu0 0.0
        %843 = vmatprep.subr.mxu0 0.0
        %844 = vmatpush1.msra.mxu0 0.0
        %845 = vmatprep.mubr.f32.mxu0 0.0
        %846 = vmatmul.mubr.f32.gmra.mrb[0].mxu0 %v779
        %v847 = vpop.f32.mrb[0].mxu0
        %v848 = vadd.f32 0.0, %v847
        %v849 = vpop.f32.mrb[0].mxu0
        %850 = vdwg.mxu0
        %851 = vst [vmem:[#allocation3] sm:$0xff] %v848
        %v852 = vld [vmem:[#allocation2 + $0x8] sm:$0xff]
        %v853 = vld [vmem:[#allocation2 + $0x28] sm:$0xff]
        %v854 = vld [vmem:[#allocation2 + $0x48] sm:$0xff]
        %855 = vmatprep.subr.mxu0 0.0
        %856 = vmatpush1.xpose.msra.mxu0 %v853
        %857 = vmatprep.subr.mxu0 0.0
        %858 = vmatpush1.xpose.msra.mxu0 0.0
        %859 = vmatprep.subr.mxu0 0.0
        %860 = vmatpush1.xpose.msra.mxu0 0.0
        %861 = vmatprep.subr.mxu0 0.0
        %862 = vmatpush1.xpose.msra.mxu0 0.0
        %863 = vmatprep.subr.mxu0 0.0
        %864 = vmatpush1.xpose.msra.mxu0 0.0
        %865 = vmatprep.subr.mxu0 0.0
        %866 = vmatpush1.xpose.msra.mxu0 0.0
        %867 = vmatprep.subr.mxu0 0.0
        %868 = vmatpush1.xpose.msra.mxu0 0.0
        %869 = vmatprep.subr.mxu0 0.0
        %870 = vmatpush1.xpose.msra.mxu0 0.0
        %871 = vmatprep.subr.mxu0 0.0
        %872 = vmatpush1.xpose.msra.mxu0 0.0
        %873 = vmatprep.subr.mxu0 0.0
        %874 = vmatpush1.xpose.msra.mxu0 0.0
        %875 = vmatprep.subr.mxu0 0.0
        %876 = vmatpush1.xpose.msra.mxu0 0.0
        %877 = vmatprep.subr.mxu0 0.0
        %878 = vmatpush1.xpose.msra.mxu0 0.0
        %879 = vmatprep.subr.mxu0 0.0
        %880 = vmatpush1.xpose.msra.mxu0 0.0
        %881 = vmatprep.subr.mxu0 0.0
        %882 = vmatpush1.xpose.msra.mxu0 0.0
        %883 = vmatprep.subr.mxu0 0.0
        %884 = vmatpush1.xpose.msra.mxu0 0.0
        %885 = vmatprep.subr.mxu0 0.0
        %886 = vmatpush1.xpose.msra.mxu0 0.0
        %887 = vmatprep.subr.mxu0 0.0
        %888 = vmatpush1.xpose.msra.mxu0 0.0
        %889 = vmatprep.subr.mxu0 0.0
        %890 = vmatpush1.xpose.msra.mxu0 0.0
        %891 = vmatprep.subr.mxu0 0.0
        %892 = vmatpush1.xpose.msra.mxu0 0.0
        %893 = vmatprep.subr.mxu0 0.0
        %894 = vmatpush1.xpose.msra.mxu0 0.0
        %895 = vmatprep.subr.mxu0 0.0
        %896 = vmatpush1.xpose.msra.mxu0 0.0
        %897 = vmatprep.subr.mxu0 0.0
        %898 = vmatpush1.xpose.msra.mxu0 0.0
        %899 = vmatprep.subr.mxu0 0.0
        %900 = vmatpush1.xpose.msra.mxu0 0.0
        %901 = vmatprep.subr.mxu0 0.0
        %902 = vmatpush1.xpose.msra.mxu0 0.0
        %903 = vmatprep.subr.mxu0 0.0
        %904 = vmatpush1.xpose.msra.mxu0 0.0
        %905 = vmatprep.subr.mxu0 0.0
        %906 = vmatpush1.xpose.msra.mxu0 0.0
        %907 = vmatprep.subr.mxu0 0.0
        %908 = vmatpush1.xpose.msra.mxu0 0.0
        %909 = vmatprep.subr.mxu0 0.0
        %910 = vmatpush1.xpose.msra.mxu0 0.0
        %911 = vmatprep.subr.mxu0 0.0
        %912 = vmatpush1.xpose.msra.mxu0 0.0
        %913 = vmatprep.subr.mxu0 0.0
        %914 = vmatpush1.xpose.msra.mxu0 0.0
        %915 = vmatprep.subr.mxu0 0.0
        %916 = vmatpush1.xpose.msra.mxu0 0.0
        %917 = vmatprep.subr.mxu0 0.0
        %918 = vmatpush1.xpose.msra.mxu0 0.0
        %919 = vmatprep.mubr.f32.mxu0 0.0
        %920 = vmatmul.mubr.f32.gmra.mrb[0].mxu0 %v852
        %v921 = vpop.f32.mrb[0].mxu0
        %v922 = vadd.f32 %v689, %v921
        %v923 = vpop.f32.mrb[0].mxu0
        %924 = vdwg.mxu0
        %v925 = vsel %vm763, %v922, -inf
        %926 = vmax.xlane.f32.xlu0 %v925
        %v927 = vpop.xlane.xlu0 %926
        %v928 = vsub.f32 %v922, %v927
        %v929 = vmul.f32 %v928, 1.442695
        %v930 = vpow.pop %v929
        %v931 = vsel %vm763, %v930, 0.0
        %932 = vadd.xlane.f32.xlu0 %v931
        %v933 = vpop.xlane.xlu0 %932
        %v934 = vrcp.pop %v933
        %v935 = vmul.f32 %v933, %v934
        %v936 = vsub.f32 2.0, %v935
        %v937 = vmul.f32 %v934, %v936
        %v938 = vmul.f32 %v930, %v937
        %v940 = vsel %vm763, %v938, 0
        %942 = vmatprep.subr.mxu0 0.0
        %943 = vmatpush1.msra.mxu0 %v854
        %944 = vmatprep.subr.mxu0 0.0
        %945 = vmatpush1.msra.mxu0 0.0
        %946 = vmatprep.subr.mxu0 0.0
        %947 = vmatpush1.msra.mxu0 0.0
        %948 = vmatprep.subr.mxu0 0.0
        %949 = vmatpush1.msra.mxu0 0.0
        %950 = vmatprep.subr.mxu0 0.0
        %951 = vmatpush1.msra.mxu0 0.0
        %952 = vmatprep.subr.mxu0 0.0
        %953 = vmatpush1.msra.mxu0 0.0
        %954 = vmatprep.subr.mxu0 0.0
        %955 = vmatpush1.msra.mxu0 0.0
        %956 = vmatprep.subr.mxu0 0.0
        %957 = vmatpush1.msra.mxu0 0.0
        %958 = vmatprep.subr.mxu0 0.0
        %959 = vmatpush1.msra.mxu0 0.0
        %960 = vmatprep.subr.mxu0 0.0
        %961 = vmatpush1.msra.mxu0 0.0
        %962 = vmatprep.subr.mxu0 0.0
        %963 = vmatpush1.msra.mxu0 0.0
        %964 = vmatprep.subr.mxu0 0.0
        %965 = vmatpush1.msra.mxu0 0.0
        %966 = vmatprep.subr.mxu0 0.0
        %967 = vmatpush1.msra.mxu0 0.0
        %968 = vmatprep.subr.mxu0 0.0
        %969 = vmatpush1.msra.mxu0 0.0
        %970 = vmatprep.subr.mxu0 0.0
        %971 = vmatpush1.msra.mxu0 0.0
        %972 = vmatprep.subr.mxu0 0.0
        %973 = vmatpush1.msra.mxu0 0.0
        %974 = vmatprep.subr.mxu0 0.0
        %975 = vmatpush1.msra.mxu0 0.0
        %976 = vmatprep.subr.mxu0 0.0
        %977 = vmatpush1.msra.mxu0 0.0
        %978 = vmatprep.subr.mxu0 0.0
        %979 = vmatpush1.msra.mxu0 0.0
        %980 = vmatprep.subr.mxu0 0.0
        %981 = vmatpush1.msra.mxu0 0.0
        %982 = vmatprep.subr.mxu0 0.0
        %983 = vmatpush1.msra.mxu0 0.0
        %984 = vmatprep.subr.mxu0 0.0
        %985 = vmatpush1.msra.mxu0 0.0
        %986 = vmatprep.subr.mxu0 0.0
        %987 = vmatpush1.msra.mxu0 0.0
        %988 = vmatprep.subr.mxu0 0.0
        %989 = vmatpush1.msra.mxu0 0.0
        %990 = vmatprep.subr.mxu0 0.0
        %991 = vmatpush1.msra.mxu0 0.0
        %992 = vmatprep.subr.mxu0 0.0
        %993 = vmatpush1.msra.mxu0 0.0
        %994 = vmatprep.subr.mxu0 0.0
        %995 = vmatpush1.msra.mxu0 0.0
        %996 = vmatprep.subr.mxu0 0.0
        %997 = vmatpush1.msra.mxu0 0.0
        %998 = vmatprep.subr.mxu0 0.0
        %999 = vmatpush1.msra.mxu0 0.0
        %1000 = vmatprep.subr.mxu0 0.0
        %1001 = vmatpush1.msra.mxu0 0.0
        %1002 = vmatprep.subr.mxu0 0.0
        %1003 = vmatpush1.msra.mxu0 0.0
        %1004 = vmatprep.subr.mxu0 0.0
        %1005 = vmatpush1.msra.mxu0 0.0
        %1006 = vmatprep.mubr.f32.mxu0 0.0
        %1007 = vmatmul.mubr.f32.gmra.mrb[0].mxu0 %v940
        %v1008 = vpop.f32.mrb[0].mxu0
        %v1009 = vadd.f32 0.0, %v1008
        %v1010 = vpop.f32.mrb[0].mxu0
        %1011 = vdwg.mxu0
        %1012 = vst [vmem:[#allocation3 + $0x8] sm:$0xff] %v1009
        %v1013 = vld [vmem:[#allocation2 + $0x10] sm:$0xff]
        %v1014 = vld [vmem:[#allocation2 + $0x30] sm:$0xff]
        %v1015 = vld [vmem:[#allocation2 + $0x50] sm:$0xff]
        %1016 = vmatprep.subr.mxu0 0.0
        %1017 = vmatpush1.xpose.msra.mxu0 %v1014
        %1018 = vmatprep.subr.mxu0 0.0
        %1019 = vmatpush1.xpose.msra.mxu0 0.0
        %1020 = vmatprep.subr.mxu0 0.0
        %1021 = vmatpush1.xpose.msra.mxu0 0.0
        %1022 = vmatprep.subr.mxu0 0.0
        %1023 = vmatpush1.xpose.msra.mxu0 0.0
        %1024 = vmatprep.subr.mxu0 0.0
        %1025 = vmatpush1.xpose.msra.mxu0 0.0
        %1026 = vmatprep.subr.mxu0 0.0
        %1027 = vmatpush1.xpose.msra.mxu0 0.0
        %1028 = vmatprep.subr.mxu0 0.0
        %1029 = vmatpush1.xpose.msra.mxu0 0.0
        %1030 = vmatprep.subr.mxu0 0.0
        %1031 = vmatpush1.xpose.msra.mxu0 0.0
        %1032 = vmatprep.subr.mxu0 0.0
        %1033 = vmatpush1.xpose.msra.mxu0 0.0
        %1034 = vmatprep.subr.mxu0 0.0
        %1035 = vmatpush1.xpose.msra.mxu0 0.0
        %1036 = vmatprep.subr.mxu0 0.0
        %1037 = vmatpush1.xpose.msra.mxu0 0.0
        %1038 = vmatprep.subr.mxu0 0.0
        %1039 = vmatpush1.xpose.msra.mxu0 0.0
        %1040 = vmatprep.subr.mxu0 0.0
        %1041 = vmatpush1.xpose.msra.mxu0 0.0
        %1042 = vmatprep.subr.mxu0 0.0
        %1043 = vmatpush1.xpose.msra.mxu0 0.0
        %1044 = vmatprep.subr.mxu0 0.0
        %1045 = vmatpush1.xpose.msra.mxu0 0.0
        %1046 = vmatprep.subr.mxu0 0.0
        %1047 = vmatpush1.xpose.msra.mxu0 0.0
        %1048 = vmatprep.subr.mxu0 0.0
        %1049 = vmatpush1.xpose.msra.mxu0 0.0
        %1050 = vmatprep.subr.mxu0 0.0
        %1051 = vmatpush1.xpose.msra.mxu0 0.0
        %1052 = vmatprep.subr.mxu0 0.0
        %1053 = vmatpush1.xpose.msra.mxu0 0.0
        %1054 = vmatprep.subr.mxu0 0.0
        %1055 = vmatpush1.xpose.msra.mxu0 0.0
        %1056 = vmatprep.subr.mxu0 0.0
        %1057 = vmatpush1.xpose.msra.mxu0 0.0
        %1058 = vmatprep.subr.mxu0 0.0
        %1059 = vmatpush1.xpose.msra.mxu0 0.0
        %1060 = vmatprep.subr.mxu0 0.0
        %1061 = vmatpush1.xpose.msra.mxu0 0.0
        %1062 = vmatprep.subr.mxu0 0.0
        %1063 = vmatpush1.xpose.msra.mxu0 0.0
        %1064 = vmatprep.subr.mxu0 0.0
        %1065 = vmatpush1.xpose.msra.mxu0 0.0
        %1066 = vmatprep.subr.mxu0 0.0
        %1067 = vmatpush1.xpose.msra.mxu0 0.0
        %1068 = vmatprep.subr.mxu0 0.0
        %1069 = vmatpush1.xpose.msra.mxu0 0.0
        %1070 = vmatprep.subr.mxu0 0.0
        %1071 = vmatpush1.xpose.msra.mxu0 0.0
        %1072 = vmatprep.subr.mxu0 0.0
        %1073 = vmatpush1.xpose.msra.mxu0 0.0
        %1074 = vmatprep.subr.mxu0 0.0
        %1075 = vmatpush1.xpose.msra.mxu0 0.0
        %1076 = vmatprep.subr.mxu0 0.0
        %1077 = vmatpush1.xpose.msra.mxu0 0.0
        %1078 = vmatprep.subr.mxu0 0.0
        %1079 = vmatpush1.xpose.msra.mxu0 0.0
        %1080 = vmatprep.mubr.f32.mxu0 0.0
        %1081 = vmatmul.mubr.f32.gmra.mrb[0].mxu0 %v1013
        %v1082 = vpop.f32.mrb[0].mxu0
        %v1083 = vadd.f32 %v689, %v1082
        %v1084 = vpop.f32.mrb[0].mxu0
        %1085 = vdwg.mxu0
        %v1086 = vsel %vm763, %v1083, -inf
        %1087 = vmax.xlane.f32.xlu0 %v1086
        %v1088 = vpop.xlane.xlu0 %1087
        %v1089 = vsub.f32 %v1083, %v1088
        %v1090 = vmul.f32 %v1089, 1.442695
        %v1091 = vpow.pop %v1090
        %v1092 = vsel %vm763, %v1091, 0.0
        %1093 = vadd.xlane.f32.xlu0 %v1092
        %v1094 = vpop.xlane.xlu0 %1093
        %v1095 = vrcp.pop %v1094
        %v1096 = vmul.f32 %v1094, %v1095
        %v1097 = vsub.f32 2.0, %v1096
        %v1098 = vmul.f32 %v1095, %v1097
        %v1099 = vmul.f32 %v1091, %v1098
        %v1101 = vsel %vm763, %v1099, 0
        %1103 = vmatprep.subr.mxu0 0.0
        %1104 = vmatpush1.msra.mxu0 %v1015
        %1105 = vmatprep.subr.mxu0 0.0
        %1106 = vmatpush1.msra.mxu0 0.0
        %1107 = vmatprep.subr.mxu0 0.0
        %1108 = vmatpush1.msra.mxu0 0.0
        %1109 = vmatprep.subr.mxu0 0.0
        %1110 = vmatpush1.msra.mxu0 0.0
        %1111 = vmatprep.subr.mxu0 0.0
        %1112 = vmatpush1.msra.mxu0 0.0
        %1113 = vmatprep.subr.mxu0 0.0
        %1114 = vmatpush1.msra.mxu0 0.0
        %1115 = vmatprep.subr.mxu0 0.0
        %1116 = vmatpush1.msra.mxu0 0.0
        %1117 = vmatprep.subr.mxu0 0.0
        %1118 = vmatpush1.msra.mxu0 0.0
        %1119 = vmatprep.subr.mxu0 0.0
        %1120 = vmatpush1.msra.mxu0 0.0
        %1121 = vmatprep.subr.mxu0 0.0
        %1122 = vmatpush1.msra.mxu0 0.0
        %1123 = vmatprep.subr.mxu0 0.0
        %1124 = vmatpush1.msra.mxu0 0.0
        %1125 = vmatprep.subr.mxu0 0.0
        %1126 = vmatpush1.msra.mxu0 0.0
        %1127 = vmatprep.subr.mxu0 0.0
        %1128 = vmatpush1.msra.mxu0 0.0
        %1129 = vmatprep.subr.mxu0 0.0
        %1130 = vmatpush1.msra.mxu0 0.0
        %1131 = vmatprep.subr.mxu0 0.0
        %1132 = vmatpush1.msra.mxu0 0.0
        %1133 = vmatprep.subr.mxu0 0.0
        %1134 = vmatpush1.msra.mxu0 0.0
        %1135 = vmatprep.subr.mxu0 0.0
        %1136 = vmatpush1.msra.mxu0 0.0
        %1137 = vmatprep.subr.mxu0 0.0
        %1138 = vmatpush1.msra.mxu0 0.0
        %1139 = vmatprep.subr.mxu0 0.0
        %1140 = vmatpush1.msra.mxu0 0.0
        %1141 = vmatprep.subr.mxu0 0.0
        %1142 = vmatpush1.msra.mxu0 0.0
        %1143 = vmatprep.subr.mxu0 0.0
        %1144 = vmatpush1.msra.mxu0 0.0
        %1145 = vmatprep.subr.mxu0 0.0
        %1146 = vmatpush1.msra.mxu0 0.0
        %1147 = vmatprep.subr.mxu0 0.0
        %1148 = vmatpush1.msra.mxu0 0.0
        %1149 = vmatprep.subr.mxu0 0.0
        %1150 = vmatpush1.msra.mxu0 0.0
        %1151 = vmatprep.subr.mxu0 0.0
        %1152 = vmatpush1.msra.mxu0 0.0
        %1153 = vmatprep.subr.mxu0 0.0
        %1154 = vmatpush1.msra.mxu0 0.0
        %1155 = vmatprep.subr.mxu0 0.0
        %1156 = vmatpush1.msra.mxu0 0.0
        %1157 = vmatprep.subr.mxu0 0.0
        %1158 = vmatpush1.msra.mxu0 0.0
        %1159 = vmatprep.subr.mxu0 0.0
        %1160 = vmatpush1.msra.mxu0 0.0
        %1161 = vmatprep.subr.mxu0 0.0
        %1162 = vmatpush1.msra.mxu0 0.0
        %1163 = vmatprep.subr.mxu0 0.0
        %1164 = vmatpush1.msra.mxu0 0.0
        %1165 = vmatprep.subr.mxu0 0.0
        %1166 = vmatpush1.msra.mxu0 0.0
        %1167 = vmatprep.mubr.f32.mxu0 0.0
        %1168 = vmatmul.mubr.f32.gmra.mrb[0].mxu0 %v1101
        %v1169 = vpop.f32.mrb[0].mxu0
        %v1170 = vadd.f32 0.0, %v1169
        %v1171 = vpop.f32.mrb[0].mxu0
        %1172 = vdwg.mxu0
        %1173 = vst [vmem:[#allocation3 + $0x10] sm:$0xff] %v1170
        %v1174 = vld [vmem:[#allocation2 + $0x18] sm:$0xff]
        %v1175 = vld [vmem:[#allocation2 + $0x38] sm:$0xff]
        %v1176 = vld [vmem:[#allocation2 + $0x58] sm:$0xff]
        %1177 = vmatprep.subr.mxu0 0.0
        %1178 = vmatpush1.xpose.msra.mxu0 %v1175
        %1179 = vmatprep.subr.mxu0 0.0
        %1180 = vmatpush1.xpose.msra.mxu0 0.0
        %1181 = vmatprep.subr.mxu0 0.0
        %1182 = vmatpush1.xpose.msra.mxu0 0.0
        %1183 = vmatprep.subr.mxu0 0.0
        %1184 = vmatpush1.xpose.msra.mxu0 0.0
        %1185 = vmatprep.subr.mxu0 0.0
        %1186 = vmatpush1.xpose.msra.mxu0 0.0
        %1187 = vmatprep.subr.mxu0 0.0
        %1188 = vmatpush1.xpose.msra.mxu0 0.0
        %1189 = vmatprep.subr.mxu0 0.0
        %1190 = vmatpush1.xpose.msra.mxu0 0.0
        %1191 = vmatprep.subr.mxu0 0.0
        %1192 = vmatpush1.xpose.msra.mxu0 0.0
        %1193 = vmatprep.subr.mxu0 0.0
        %1194 = vmatpush1.xpose.msra.mxu0 0.0
        %1195 = vmatprep.subr.mxu0 0.0
        %1196 = vmatpush1.xpose.msra.mxu0 0.0
        %1197 = vmatprep.subr.mxu0 0.0
        %1198 = vmatpush1.xpose.msra.mxu0 0.0
        %1199 = vmatprep.subr.mxu0 0.0
        %1200 = vmatpush1.xpose.msra.mxu0 0.0
        %1201 = vmatprep.subr.mxu0 0.0
        %1202 = vmatpush1.xpose.msra.mxu0 0.0
        %1203 = vmatprep.subr.mxu0 0.0
        %1204 = vmatpush1.xpose.msra.mxu0 0.0
        %1205 = vmatprep.subr.mxu0 0.0
        %1206 = vmatpush1.xpose.msra.mxu0 0.0
        %1207 = vmatprep.subr.mxu0 0.0
        %1208 = vmatpush1.xpose.msra.mxu0 0.0
        %1209 = vmatprep.subr.mxu0 0.0
        %1210 = vmatpush1.xpose.msra.mxu0 0.0
        %1211 = vmatprep.subr.mxu0 0.0
        %1212 = vmatpush1.xpose.msra.mxu0 0.0
        %1213 = vmatprep.subr.mxu0 0.0
        %1214 = vmatpush1.xpose.msra.mxu0 0.0
        %1215 = vmatprep.subr.mxu0 0.0
        %1216 = vmatpush1.xpose.msra.mxu0 0.0
        %1217 = vmatprep.subr.mxu0 0.0
        %1218 = vmatpush1.xpose.msra.mxu0 0.0
        %1219 = vmatprep.subr.mxu0 0.0
        %1220 = vmatpush1.xpose.msra.mxu0 0.0
        %1221 = vmatprep.subr.mxu0 0.0
        %1222 = vmatpush1.xpose.msra.mxu0 0.0
        %1223 = vmatprep.subr.mxu0 0.0
        %1224 = vmatpush1.xpose.msra.mxu0 0.0
        %1225 = vmatprep.subr.mxu0 0.0
        %1226 = vmatpush1.xpose.msra.mxu0 0.0
        %1227 = vmatprep.subr.mxu0 0.0
        %1228 = vmatpush1.xpose.msra.mxu0 0.0
        %1229 = vmatprep.subr.mxu0 0.0
        %1230 = vmatpush1.xpose.msra.mxu0 0.0
        %1231 = vmatprep.subr.mxu0 0.0
        %1232 = vmatpush1.xpose.msra.mxu0 0.0
        %1233 = vmatprep.subr.mxu0 0.0
        %1234 = vmatpush1.xpose.msra.mxu0 0.0
        %1235 = vmatprep.subr.mxu0 0.0
        %1236 = vmatpush1.xpose.msra.mxu0 0.0
        %1237 = vmatprep.subr.mxu0 0.0
        %1238 = vmatpush1.xpose.msra.mxu0 0.0
        %1239 = vmatprep.subr.mxu0 0.0
        %1240 = vmatpush1.xpose.msra.mxu0 0.0
        %1241 = vmatprep.mubr.f32.mxu0 0.0
        %1242 = vmatmul.mubr.f32.gmra.mrb[0].mxu0 %v1174
        %v1243 = vpop.f32.mrb[0].mxu0
        %v1244 = vadd.f32 %v689, %v1243
        %v1245 = vpop.f32.mrb[0].mxu0
        %1246 = vdwg.mxu0
        %v1247 = vsel %vm763, %v1244, -inf
        %1248 = vmax.xlane.f32.xlu0 %v1247
        %v1249 = vpop.xlane.xlu0 %1248
        %v1250 = vsub.f32 %v1244, %v1249
        %v1251 = vmul.f32 %v1250, 1.442695
        %v1252 = vpow.pop %v1251
        %v1253 = vsel %vm763, %v1252, 0.0
        %1254 = vadd.xlane.f32.xlu0 %v1253
        %v1255 = vpop.xlane.xlu0 %1254
        %v1256 = vrcp.pop %v1255
        %v1257 = vmul.f32 %v1255, %v1256
        %v1258 = vsub.f32 2.0, %v1257
        %v1259 = vmul.f32 %v1256, %v1258
        %v1260 = vmul.f32 %v1252, %v1259
        %v1262 = vsel %vm763, %v1260, 0
        %1264 = vmatprep.subr.mxu0 0.0
        %1265 = vmatpush1.msra.mxu0 %v1176
        %1266 = vmatprep.subr.mxu0 0.0
        %1267 = vmatpush1.msra.mxu0 0.0
        %1268 = vmatprep.subr.mxu0 0.0
        %1269 = vmatpush1.msra.mxu0 0.0
        %1270 = vmatprep.subr.mxu0 0.0
        %1271 = vmatpush1.msra.mxu0 0.0
        %1272 = vmatprep.subr.mxu0 0.0
        %1273 = vmatpush1.msra.mxu0 0.0
        %1274 = vmatprep.subr.mxu0 0.0
        %1275 = vmatpush1.msra.mxu0 0.0
        %1276 = vmatprep.subr.mxu0 0.0
        %1277 = vmatpush1.msra.mxu0 0.0
        %1278 = vmatprep.subr.mxu0 0.0
        %1279 = vmatpush1.msra.mxu0 0.0
        %1280 = vmatprep.subr.mxu0 0.0
        %1281 = vmatpush1.msra.mxu0 0.0
        %1282 = vmatprep.subr.mxu0 0.0
        %1283 = vmatpush1.msra.mxu0 0.0
        %1284 = vmatprep.subr.mxu0 0.0
        %1285 = vmatpush1.msra.mxu0 0.0
        %1286 = vmatprep.subr.mxu0 0.0
        %1287 = vmatpush1.msra.mxu0 0.0
        %1288 = vmatprep.subr.mxu0 0.0
        %1289 = vmatpush1.msra.mxu0 0.0
        %1290 = vmatprep.subr.mxu0 0.0
        %1291 = vmatpush1.msra.mxu0 0.0
        %1292 = vmatprep.subr.mxu0 0.0
        %1293 = vmatpush1.msra.mxu0 0.0
        %1294 = vmatprep.subr.mxu0 0.0
        %1295 = vmatpush1.msra.mxu0 0.0
        %1296 = vmatprep.subr.mxu0 0.0
        %1297 = vmatpush1.msra.mxu0 0.0
        %1298 = vmatprep.subr.mxu0 0.0
        %1299 = vmatpush1.msra.mxu0 0.0
        %1300 = vmatprep.subr.mxu0 0.0
        %1301 = vmatpush1.msra.mxu0 0.0
        %1302 = vmatprep.subr.mxu0 0.0
        %1303 = vmatpush1.msra.mxu0 0.0
        %1304 = vmatprep.subr.mxu0 0.0
        %1305 = vmatpush1.msra.mxu0 0.0
        %1306 = vmatprep.subr.mxu0 0.0
        %1307 = vmatpush1.msra.mxu0 0.0
        %1308 = vmatprep.subr.mxu0 0.0
        %1309 = vmatpush1.msra.mxu0 0.0
        %1310 = vmatprep.subr.mxu0 0.0
        %1311 = vmatpush1.msra.mxu0 0.0
        %1312 = vmatprep.subr.mxu0 0.0
        %1313 = vmatpush1.msra.mxu0 0.0
        %1314 = vmatprep.subr.mxu0 0.0
        %1315 = vmatpush1.msra.mxu0 0.0
        %1316 = vmatprep.subr.mxu0 0.0
        %1317 = vmatpush1.msra.mxu0 0.0
        %1318 = vmatprep.subr.mxu0 0.0
        %1319 = vmatpush1.msra.mxu0 0.0
        %1320 = vmatprep.subr.mxu0 0.0
        %1321 = vmatpush1.msra.mxu0 0.0
        %1322 = vmatprep.subr.mxu0 0.0
        %1323 = vmatpush1.msra.mxu0 0.0
        %1324 = vmatprep.subr.mxu0 0.0
        %1325 = vmatpush1.msra.mxu0 0.0
        %1326 = vmatprep.subr.mxu0 0.0
        %1327 = vmatpush1.msra.mxu0 0.0
        %1328 = vmatprep.mubr.f32.mxu0 0.0
        %1329 = vmatmul.mubr.f32.gmra.mrb[0].mxu0 %v1262
        %v1330 = vpop.f32.mrb[0].mxu0
        %v1331 = vadd.f32 0.0, %v1330
        %v1332 = vpop.f32.mrb[0].mxu0
        %1333 = vdwg.mxu0
        %1334 = vst [vmem:[#allocation3 + $0x18] sm:$0xff] %v1331
        %v1335 = vld [vmem:[#allocation3] sm:$0xff]
        %v1336 = vld [vmem:[#allocation3 + $0x8] sm:$0xff]
        %v1337 = vld [vmem:[#allocation3 + $0x10] sm:$0xff]
        %v1338 = vld [vmem:[#allocation3 + $0x18] sm:$0xff]
        %v1339 = vld [vmem:[%s2] sm:$0xff]
        %v1340 = vld [vmem:[%s2 + $0x8] sm:$0xff]
        %v1341 = vld [vmem:[%s2 + $0x10] sm:$0xff]
        %v1342 = vld [vmem:[%s2 + $0x18] sm:$0xff]
        %v1343 = vld [vmem:[%s2 + $0x20] sm:$0xff]
        %v1344 = vld [vmem:[%s2 + $0x28] sm:$0xff]
        %v1345 = vld [vmem:[%s2 + $0x30] sm:$0xff]
        %v1346 = vld [vmem:[%s2 + $0x38] sm:$0xff]
        %v1347 = vld [vmem:[%s2 + $0x40] sm:$0xff]
        %v1348 = vld [vmem:[%s2 + $0x48] sm:$0xff]
        %v1349 = vld [vmem:[%s2 + $0x50] sm:$0xff]
        %v1350 = vld [vmem:[%s2 + $0x58] sm:$0xff]
        %v1351 = vld [vmem:[%s2 + $0x60] sm:$0xff]
        %v1352 = vld [vmem:[%s2 + $0x68] sm:$0xff]
        %v1353 = vld [vmem:[%s2 + $0x70] sm:$0xff]
        %v1354 = vld [vmem:[%s2 + $0x78] sm:$0xff]
        %v1355 = vld [vmem:[%s2 + $0x80] sm:$0xff]
        %v1356 = vld [vmem:[%s2 + $0x88] sm:$0xff]
        %v1357 = vld [vmem:[%s2 + $0x90] sm:$0xff]
        %v1358 = vld [vmem:[%s2 + $0x98] sm:$0xff]
        %v1359 = vld [vmem:[%s2 + $0xa0] sm:$0xff]
        %v1360 = vld [vmem:[%s2 + $0xa8] sm:$0xff]
        %v1361 = vld [vmem:[%s2 + $0xb0] sm:$0xff]
        %v1362 = vld [vmem:[%s2 + $0xb8] sm:$0xff]
        %v1363 = vld [vmem:[%s2 + $0xc0] sm:$0xff]
        %v1364 = vld [vmem:[%s2 + $0xc8] sm:$0xff]
        %v1365 = vld [vmem:[%s2 + $0xd0] sm:$0xff]
        %v1366 = vld [vmem:[%s2 + $0xd8] sm:$0xff]
        %v1367 = vld [vmem:[%s2 + $0xe0] sm:$0xff]
        %v1368 = vld [vmem:[%s2 + $0xe8] sm:$0xff]
        %v1369 = vld [vmem:[%s2 + $0xf0] sm:$0xff]
        %v1370 = vld [vmem:[%s2 + $0xf8] sm:$0xff]
        %v1371 = vld [vmem:[%s2 + $0x100] sm:$0xff]
        %v1372 = vld [vmem:[%s2 + $0x108] sm:$0xff]
        %v1373 = vld [vmem:[%s2 + $0x110] sm:$0xff]
        %v1374 = vld [vmem:[%s2 + $0x118] sm:$0xff]
        %v1375 = vld [vmem:[%s2 + $0x120] sm:$0xff]
        %v1376 = vld [vmem:[%s2 + $0x128] sm:$0xff]
        %v1377 = vld [vmem:[%s2 + $0x130] sm:$0xff]
        %v1378 = vld [vmem:[%s2 + $0x138] sm:$0xff]
        %v1379 = vld [vmem:[%s2 + $0x140] sm:$0xff]
        %v1380 = vld [vmem:[%s2 + $0x148] sm:$0xff]
        %v1381 = vld [vmem:[%s2 + $0x150] sm:$0xff]
        %v1382 = vld [vmem:[%s2 + $0x158] sm:$0xff]
        %v1383 = vld [vmem:[%s2 + $0x160] sm:$0xff]
        %v1384 = vld [vmem:[%s2 + $0x168] sm:$0xff]
        %v1385 = vld [vmem:[%s2 + $0x170] sm:$0xff]
        %v1386 = vld [vmem:[%s2 + $0x178] sm:$0xff]
        %v1387 = vld [vmem:[%s2 + $0x180] sm:$0xff]
        %v1388 = vld [vmem:[%s2 + $0x188] sm:$0xff]
        %v1389 = vld [vmem:[%s2 + $0x190] sm:$0xff]
        %v1390 = vld [vmem:[%s2 + $0x198] sm:$0xff]
        %v1391 = vld [vmem:[%s2 + $0x1a0] sm:$0xff]
        %v1392 = vld [vmem:[%s2 + $0x1a8] sm:$0xff]
        %v1393 = vld [vmem:[%s2 + $0x1b0] sm:$0xff]
        %v1394 = vld [vmem:[%s2 + $0x1b8] sm:$0xff]
        %v1395 = vld [vmem:[%s2 + $0x1c0] sm:$0xff]
        %v1396 = vld [vmem:[%s2 + $0x1c8] sm:$0xff]
        %v1397 = vld [vmem:[%s2 + $0x1d0] sm:$0xff]
        %v1398 = vld [vmem:[%s2 + $0x1d8] sm:$0xff]
        %v1399 = vld [vmem:[%s2 + $0x1e0] sm:$0xff]
        %v1400 = vld [vmem:[%s2 + $0x1e8] sm:$0xff]
        %v1401 = vld [vmem:[%s2 + $0x1f0] sm:$0xff]
        %v1402 = vld [vmem:[%s2 + $0x1f8] sm:$0xff]
        %v1403 = vld [vmem:[%s3] sm:$0x1]
        %v1405 = vlaneseq
        %v1406 = vshrl.u32 %v1405, 7
        %v1407 = vsub.s32 0, %v1406
        %v1408 = vrot.slane %v1403, %v1407
        %1410 = vmatprep.subr.mxu0 0.0
        %1411 = vmatpush1.msra.mxu0 %v1339
        %1412 = vmatprep.subr.mxu0 0.0
        %1413 = vmatpush1.msra.mxu0 %v1340
        %1414 = vmatprep.subr.mxu0 0.0
        %1415 = vmatpush1.msra.mxu0 %v1341
        %1416 = vmatprep.subr.mxu0 0.0
        %1417 = vmatpush1.msra.mxu0 %v1342
        %1418 = vmatprep.subr.mxu0 0.0
        %1419 = vmatpush1.msra.mxu0 %v1343
        %1420 = vmatprep.subr.mxu0 0.0
        %1421 = vmatpush1.msra.mxu0 %v1344
        %1422 = vmatprep.subr.mxu0 0.0
        %1423 = vmatpush1.msra.mxu0 %v1345
        %1424 = vmatprep.subr.mxu0 0.0
        %1425 = vmatpush1.msra.mxu0 %v1346
        %1426 = vmatprep.subr.mxu0 0.0
        %1427 = vmatpush1.msra.mxu0 %v1347
        %1428 = vmatprep.subr.mxu0 0.0
        %1429 = vmatpush1.msra.mxu0 %v1348
        %1430 = vmatprep.subr.mxu0 0.0
        %1431 = vmatpush1.msra.mxu0 %v1349
        %1432 = vmatprep.subr.mxu0 0.0
        %1433 = vmatpush1.msra.mxu0 %v1350
        %1434 = vmatprep.subr.mxu0 0.0
        %1435 = vmatpush1.msra.mxu0 %v1351
        %1436 = vmatprep.subr.mxu0 0.0
        %1437 = vmatpush1.msra.mxu0 %v1352
        %1438 = vmatprep.subr.mxu0 0.0
        %1439 = vmatpush1.msra.mxu0 %v1353
        %1440 = vmatprep.subr.mxu0 0.0
        %1441 = vmatpush1.msra.mxu0 %v1354
        %1442 = vmatprep.subr.mxu0 0.0
        %1443 = vmatpush1.msra.mxu0 %v1355
        %1444 = vmatprep.subr.mxu0 0.0
        %1445 = vmatpush1.msra.mxu0 %v1356
        %1446 = vmatprep.subr.mxu0 0.0
        %1447 = vmatpush1.msra.mxu0 %v1357
        %1448 = vmatprep.subr.mxu0 0.0
        %1449 = vmatpush1.msra.mxu0 %v1358
        %1450 = vmatprep.subr.mxu0 0.0
        %1451 = vmatpush1.msra.mxu0 %v1359
        %1452 = vmatprep.subr.mxu0 0.0
        %1453 = vmatpush1.msra.mxu0 %v1360
        %1454 = vmatprep.subr.mxu0 0.0
        %1455 = vmatpush1.msra.mxu0 %v1361
        %1456 = vmatprep.subr.mxu0 0.0
        %1457 = vmatpush1.msra.mxu0 %v1362
        %1458 = vmatprep.subr.mxu0 0.0
        %1459 = vmatpush1.msra.mxu0 %v1363
        %1460 = vmatprep.subr.mxu0 0.0
        %1461 = vmatpush1.msra.mxu0 %v1364
        %1462 = vmatprep.subr.mxu0 0.0
        %1463 = vmatpush1.msra.mxu0 %v1365
        %1464 = vmatprep.subr.mxu0 0.0
        %1465 = vmatpush1.msra.mxu0 %v1366
        %1466 = vmatprep.subr.mxu0 0.0
        %1467 = vmatpush1.msra.mxu0 %v1367
        %1468 = vmatprep.subr.mxu0 0.0
        %1469 = vmatpush1.msra.mxu0 %v1368
        %1470 = vmatprep.subr.mxu0 0.0
        %1471 = vmatpush1.msra.mxu0 %v1369
        %1472 = vmatprep.subr.mxu0 0.0
        %1473 = vmatpush1.msra.mxu0 %v1370
        %1474 = vmatprep.mubr.f32.mxu0 %v1336
        %1475 = vmatmul.mubr.f32.gmra.mrb[0].mxu0 %v1335
        %v1476 = vpop.f32.mrb[0].mxu0
        %v1477 = vadd.f32 %v1408, %v1476
        %v1478 = vpop.f32.mrb[0].mxu0
        %1479 = vdwg.mxu0
        %1480 = vmatprep.subr.mxu0 0.0
        %1481 = vmatpush1.msra.mxu0 %v1371
        %1482 = vmatprep.subr.mxu0 0.0
        %1483 = vmatpush1.msra.mxu0 %v1372
        %1484 = vmatprep.subr.mxu0 0.0
        %1485 = vmatpush1.msra.mxu0 %v1373
        %1486 = vmatprep.subr.mxu0 0.0
        %1487 = vmatpush1.msra.mxu0 %v1374
        %1488 = vmatprep.subr.mxu0 0.0
        %1489 = vmatpush1.msra.mxu0 %v1375
        %1490 = vmatprep.subr.mxu0 0.0
        %1491 = vmatpush1.msra.mxu0 %v1376
        %1492 = vmatprep.subr.mxu0 0.0
        %1493 = vmatpush1.msra.mxu0 %v1377
        %1494 = vmatprep.subr.mxu0 0.0
        %1495 = vmatpush1.msra.mxu0 %v1378
        %1496 = vmatprep.subr.mxu0 0.0
        %1497 = vmatpush1.msra.mxu0 %v1379
        %1498 = vmatprep.subr.mxu0 0.0
        %1499 = vmatpush1.msra.mxu0 %v1380
        %1500 = vmatprep.subr.mxu0 0.0
        %1501 = vmatpush1.msra.mxu0 %v1381
        %1502 = vmatprep.subr.mxu0 0.0
        %1503 = vmatpush1.msra.mxu0 %v1382
        %1504 = vmatprep.subr.mxu0 0.0
        %1505 = vmatpush1.msra.mxu0 %v1383
        %1506 = vmatprep.subr.mxu0 0.0
        %1507 = vmatpush1.msra.mxu0 %v1384
        %1508 = vmatprep.subr.mxu0 0.0
        %1509 = vmatpush1.msra.mxu0 %v1385
        %1510 = vmatprep.subr.mxu0 0.0
        %1511 = vmatpush1.msra.mxu0 %v1386
        %1512 = vmatprep.subr.mxu0 0.0
        %1513 = vmatpush1.msra.mxu0 %v1387
        %1514 = vmatprep.subr.mxu0 0.0
        %1515 = vmatpush1.msra.mxu0 %v1388
        %1516 = vmatprep.subr.mxu0 0.0
        %1517 = vmatpush1.msra.mxu0 %v1389
        %1518 = vmatprep.subr.mxu0 0.0
        %1519 = vmatpush1.msra.mxu0 %v1390
        %1520 = vmatprep.subr.mxu0 0.0
        %1521 = vmatpush1.msra.mxu0 %v1391
        %1522 = vmatprep.subr.mxu0 0.0
        %1523 = vmatpush1.msra.mxu0 %v1392
        %1524 = vmatprep.subr.mxu0 0.0
        %1525 = vmatpush1.msra.mxu0 %v1393
        %1526 = vmatprep.subr.mxu0 0.0
        %1527 = vmatpush1.msra.mxu0 %v1394
        %1528 = vmatprep.subr.mxu0 0.0
        %1529 = vmatpush1.msra.mxu0 %v1395
        %1530 = vmatprep.subr.mxu0 0.0
        %1531 = vmatpush1.msra.mxu0 %v1396
        %1532 = vmatprep.subr.mxu0 0.0
        %1533 = vmatpush1.msra.mxu0 %v1397
        %1534 = vmatprep.subr.mxu0 0.0
        %1535 = vmatpush1.msra.mxu0 %v1398
        %1536 = vmatprep.subr.mxu0 0.0
        %1537 = vmatpush1.msra.mxu0 %v1399
        %1538 = vmatprep.subr.mxu0 0.0
        %1539 = vmatpush1.msra.mxu0 %v1400
        %1540 = vmatprep.subr.mxu0 0.0
        %1541 = vmatpush1.msra.mxu0 %v1401
        %1542 = vmatprep.subr.mxu0 0.0
        %1543 = vmatpush1.msra.mxu0 %v1402
        %1544 = vmatprep.mubr.f32.mxu0 %v1338
        %1545 = vmatmul.mubr.f32.gmra.mrb[0].mxu0 %v1337
        %v1546 = vpop.f32.mrb[0].mxu0
        %v1547 = vadd.f32 %v1477, %v1546
        %v1548 = vpop.f32.mrb[0].mxu0
        %1549 = vdwg.mxu0
        %1550 = vst.msk [vmem:[%s188] sm:$0xff] %vm242, %v1547
        %s1551 = sand.u32 %s115, 1
        %s1552 = scalar_lea.sflag [#allocation5], %s1551
        %s1553 = sand.u32 %s115, 1
        %s1554 = smul.addr %s1553, 8
        %s1555 = scalar_lea.vmem [#allocation4], %s1554
        // Predicated region
        $region37: #{tpu_custom_call.1} parent=35 // pred_check
          %p1556 = pneg %p125
        $region38: #{tpu_custom_call.1} parent=35 // pred_check_branch
          %1558 = sbr.rel (%p1556) target = $region40
        $region39: #{tpu_custom_call.1} parent=35 // pred_region
          %s1560 = ssub.s32 128, 128
          %1561 = vsyncadd %s1552, %s1560
          %s1562 = smul.addr %s18, 128
          %s1563 = scalar_lea.hbm %s4, %s1562
          %s1565 = sshll.u32 %s1555, 4
          %s1566 = int_to_ptr.vmem [resolvable:$true] %s1565
          %1568 = dma.vmem_to_hbm [thread:$0]  %s1566, 128, %s1563, %s1552
        $region40: #{tpu_custom_call.1} parent=35 // pred_fallthru
          _
      $region36: #{tpu_custom_call.1} parent=5 // pred_fallthru
        _
      %p1569 = scmp.le.s32.totalorder 2, %s13
      // Predicated region
      $region41: #{tpu_custom_call.1} parent=5 // pred_check
        %p1570 = pneg %p1569
      $region42: #{tpu_custom_call.1} parent=5 // pred_check_branch
        %1572 = sbr.rel (%p1570) target = $region44
      $region43: #{tpu_custom_call.1} parent=5 // pred_region
        %s1573 = ssub.s32 %s13, 2
        // Predicated region
        $region45: #{tpu_custom_call.1} parent=43 // pred_check
          %p1574 = pneg %p131
        $region46: #{tpu_custom_call.1} parent=43 // pred_check_branch
          %1576 = sbr.rel (%p1574) target = $region48
        $region47: #{tpu_custom_call.1} parent=43 // pred_region
          %s1577 = sand.u32 %s116, 1
          %s1578 = scalar_lea.sflag [#allocation5], %s1577
          %s1579 = sand.u32 %s116, 1
          %s1580 = smul.addr %s1579, 8
          %s1581 = scalar_lea.vmem [#allocation4], %s1580
          %1582 = dma.done %s1578, 128
        $region48: #{tpu_custom_call.1} parent=43 // pred_fallthru
          _
      $region44: #{tpu_custom_call.1} parent=5 // pred_fallthru
        _
    $region6: #{tpu_custom_call.1} parent=1 // loop_footer
      %s17 = sadd.s32 1, %s13
    $region7: #{tpu_custom_call.1} parent=1 // loop_footer_branch
      %12 = sbr.rel target = $region3
    $region8: #{tpu_custom_call.1} parent=1 // loop_exit
      _
    %1583 = vsyncpa [#allocation5], 1
    %s1584 = scalar_lea.sflag [#allocation5], 1
    %1585 = vsyncpa %s1584, 1

// kernel: tpu_custom_call.1
$region0: #{tpu_custom_call.1}
  #allocation0 [shape = 'u32[]', space=smem, size = 0x4, offset = 0x4, fixed_abs, tag = 'smem constant byte address 0x4 - core index']
  #allocation1 [shape = 'u32[144,128]{1,0:T(1,128)}', space=vmem, size = 0x12000, scoped, tag = 'internal scratch']
  #allocation2 [shape = 'f32[1,8,1536]{2,1,0:T(8,128)}', space=vmem, size = 0xc000, scoped, tag = 'scratch operand']
  #allocation3 [shape = 'f32[1,8,512]{2,1,0:T(8,128)}', space=vmem, size = 0x4000, scoped, tag = 'scratch operand']
  %s0 = inlined_call_operand.vmem [shape: f32[2,8,32], index: 0, kind: input, shape index: {}]
  %s1 = inlined_call_operand.vmem [shape: f32[32,1536], index: 1, kind: input, shape index: {}]
  %s2 = inlined_call_operand.vmem [shape: f32[512,32], index: 2, kind: input, shape index: {}]
  %s3 = inlined_call_operand.vmem [shape: f32[1,32], index: 3, kind: input, shape index: {}]
  %s4 = inlined_call_operand.hbm [shape: f32[2,8,32], index: 4, kind: output, shape index: {}]
  %s5 = sld [smem:[#allocation0]]
  $region49: #{tpu_custom_call.1} parent=0
    _
  %s7 = ssub.s32 1, %s5
  %s8 = scalar_select 0, %s7, %s5
  $region1: #{tpu_custom_call.1} parent=0
    #allocation4 [shape = 'u8[8192]{0}', space=vmem, size = 0x2000, scoped, tag = 'output window, operand 0']
    #allocation5 [shape = 's32[2]{0}', space=sflag, size = 0x8, scoped, tag = 'scoped memory for tpu_custom_call.1']
    %9 = vsyncpa [#allocation5], 0
    %s10 = scalar_lea.sflag [#allocation5], 1
    %11 = vsyncpa %s10, 0
    loop: start=0, step=1, limit=4
    $region2: #{tpu_custom_call.1} parent=1 // loop_pre_header
      _
    $region3: #{tpu_custom_call.1} parent=1 // loop_header
      %s13 = sphi 0, %s17
      %p14 = scmp.ge.s32.totalorder %s13, 4
      %s23 = sphi 0, %s25
      %s26 = sphi 0, %s23
      %s27 = sphi 0, %s26
      %s43 = sphi 0, %s27
      %s47 = sphi 0, %s47
      %s49 = sphi 0, %s47
      %s50 = sphi 0, %s49
      %s64 = sphi 0, %s50
      %s68 = sphi 0, %s68
      %s70 = sphi 0, %s68
      %s71 = sphi 0, %s70
      %s85 = sphi 0, %s71
      %s89 = sphi 0, %s89
      %s91 = sphi 0, %s89
      %s92 = sphi 0, %s91
      %s106 = sphi 0, %s92
      %s112 = sphi 0, %s114
      %s115 = sphi 0, %s112
      %s116 = sphi 0, %s115
      %s132 = sphi 0, %s116
    $region4: #{tpu_custom_call.1} parent=1 // loop_header_branch
      %16 = sbr.rel (%p14) target = $region8
    $region5: #{tpu_custom_call.1} parent=1 // loop_body
      %s18 = ssub.s32 %s13, 1
      %s19 = ssub.s32 %s13, 2
      %s20 = sadd.s32 %s13, 1
      %s21 = ssub.s32 %s13, %s20
      %p22 = scmp.eq.s32.totalorder %s21, 0
      %s24 = sadd.s32 %s23, 1
      %s25 = scalar_select %p22, %s23, %s24
      %p28 = pneg %p22
      %p29 = scmp.eq.s32.totalorder %s13, 1
      %p30 = por %p28, %p29
      %p31 = scmp.ne.s32.totalorder %s23, %s26
      %p32 = scmp.eq.s32.totalorder %s13, 0
      %p33 = por %p31, %p32
      %p34 = scmp.ne.s32.totalorder %s23, %s26
      %p35 = scmp.eq.s32.totalorder %s18, 1
      %p36 = por %p34, %p35
      %p37 = scmp.ne.s32.totalorder %s26, %s27
      %p38 = scmp.eq.s32.totalorder %s18, 0
      %p39 = por %p37, %p38
      %p40 = scmp.ne.s32.totalorder %s26, %s27
      %p41 = scmp.eq.s32.totalorder %s19, 1
      %p42 = por %p40, %p41
      %p44 = scmp.ne.s32.totalorder %s27, %s43
      %p45 = scmp.eq.s32.totalorder %s19, 0
      %p46 = por %p44, %p45
      %s48 = sadd.s32 %s47, 1
      %p51 = scmp.eq.s32.totalorder %s13, 1
      %p52 = scmp.ne.s32.totalorder %s47, %s49
      %p53 = scmp.eq.s32.totalorder %s13, 0
      %p54 = por %p52, %p53
      %p55 = scmp.ne.s32.totalorder %s47, %s49
      %p56 = scmp.eq.s32.totalorder %s18, 1
      %p57 = por %p55, %p56
      %p58 = scmp.ne.s32.totalorder %s49, %s50
      %p59 = scmp.eq.s32.totalorder %s18, 0
      %p60 = por %p58, %p59
      %p61 = scmp.ne.s32.totalorder %s49, %s50
      %p62 = scmp.eq.s32.totalorder %s19, 1
      %p63 = por %p61, %p62
      %p65 = scmp.ne.s32.totalorder %s50, %s64
      %p66 = scmp.eq.s32.totalorder %s19, 0
      %p67 = por %p65, %p66
      %s69 = sadd.s32 %s68, 1
      %p72 = scmp.eq.s32.totalorder %s13, 1
      %p73 = scmp.ne.s32.totalorder %s68, %s70
      %p74 = scmp.eq.s32.totalorder %s13, 0
      %p75 = por %p73, %p74
      %p76 = scmp.ne.s32.totalorder %s68, %s70
      %p77 = scmp.eq.s32.totalorder %s18, 1
      %p78 = por %p76, %p77
      %p79 = scmp.ne.s32.totalorder %s70, %s71
      %p80 = scmp.eq.s32.totalorder %s18, 0
      %p81 = por %p79, %p80
      %p82 = scmp.ne.s32.totalorder %s70, %s71
      %p83 = scmp.eq.s32.totalorder %s19, 1
      %p84 = por %p82, %p83
      %p86 = scmp.ne.s32.totalorder %s71, %s85
      %p87 = scmp.eq.s32.totalorder %s19, 0
      %p88 = por %p86, %p87
      %s90 = sadd.s32 %s89, 1
      %p93 = scmp.eq.s32.totalorder %s13, 1
      %p94 = scmp.ne.s32.totalorder %s89, %s91
      %p95 = scmp.eq.s32.totalorder %s13, 0
      %p96 = por %p94, %p95
      %p97 = scmp.ne.s32.totalorder %s89, %s91
      %p98 = scmp.eq.s32.totalorder %s18, 1
      %p99 = por %p97, %p98
      %p100 = scmp.ne.s32.totalorder %s91, %s92
      %p101 = scmp.eq.s32.totalorder %s18, 0
      %p102 = por %p100, %p101
      %p103 = scmp.ne.s32.totalorder %s91, %s92
      %p104 = scmp.eq.s32.totalorder %s19, 1
      %p105 = por %p103, %p104
      %p107 = scmp.ne.s32.totalorder %s92, %s106
      %p108 = scmp.eq.s32.totalorder %s19, 0
      %p109 = por %p107, %p108
      %s110 = ssub.s32 %s13, %s20
      %p111 = scmp.eq.s32.totalorder %s110, 0
      %s113 = sadd.s32 %s112, 1
      %s114 = scalar_select %p111, %s112, %s113
      %p117 = pneg %p111
      %p118 = scmp.eq.s32.totalorder %s13, 1
      %p119 = por %p117, %p118
      %p120 = scmp.ne.s32.totalorder %s112, %s115
      %p121 = scmp.eq.s32.totalorder %s13, 0
      %p122 = por %p120, %p121
      %p123 = scmp.ne.s32.totalorder %s112, %s115
      %p124 = scmp.eq.s32.totalorder %s18, 1
      %p125 = por %p123, %p124
      %p126 = scmp.ne.s32.totalorder %s115, %s116
      %p127 = scmp.eq.s32.totalorder %s18, 0
      %p128 = por %p126, %p127
      %p129 = scmp.ne.s32.totalorder %s115, %s116
      %p130 = scmp.eq.s32.totalorder %s19, 1
      %p131 = por %p129, %p130
      %p133 = scmp.ne.s32.totalorder %s116, %s132
      %p134 = scmp.eq.s32.totalorder %s19, 0
      %p135 = por %p133, %p134
      %p136 = scmp.le.s32.totalorder 1, %s13
      %p137 = scmp.lt.s32.totalorder %s13, 3
      %p138 = pnand %p136, %p137
      %p139 = pneg %p138
      // Predicated region
      $region9: #{tpu_custom_call.1} parent=5 // pred_check
        _
      $region10: #{tpu_custom_call.1} parent=5 // pred_check_branch
        %141 = sbr.rel (%p138) target = $region12
      $region11: #{tpu_custom_call.1} parent=5 // pred_region
        %s142 = ssub.s32 %s13, 1
        // Predicated region
        $region13: #{tpu_custom_call.1} parent=11 // pred_check
          %p143 = pneg %p60
        $region14: #{tpu_custom_call.1} parent=11 // pred_check_branch
          %145 = sbr.rel (%p143) target = $region16
        $region15: #{tpu_custom_call.1} parent=11 // pred_region
          _
        $region16: #{tpu_custom_call.1} parent=11 // pred_fallthru
          _
        // Predicated region
        $region17: #{tpu_custom_call.1} parent=11 // pred_check
          %p146 = pneg %p81
        $region18: #{tpu_custom_call.1} parent=11 // pred_check_branch
          %148 = sbr.rel (%p146) target = $region20
        $region19: #{tpu_custom_call.1} parent=11 // pred_region
          _
        $region20: #{tpu_custom_call.1} parent=11 // pred_fallthru
          _
        // Predicated region
        $region21: #{tpu_custom_call.1} parent=11 // pred_check
          %p149 = pneg %p102
        $region22: #{tpu_custom_call.1} parent=11 // pred_check_branch
          %151 = sbr.rel (%p149) target = $region24
        $region23: #{tpu_custom_call.1} parent=11 // pred_region
          _
        $region24: #{tpu_custom_call.1} parent=11 // pred_fallthru
          _
      $region12: #{tpu_custom_call.1} parent=5 // pred_fallthru
        _
      %p152 = scmp.lt.s32.totalorder %s13, 2
      // Predicated region
      $region25: #{tpu_custom_call.1} parent=5 // pred_check
        %p153 = pneg %p152
      $region26: #{tpu_custom_call.1} parent=5 // pred_check_branch
        %155 = sbr.rel (%p153) target = $region28
      $region27: #{tpu_custom_call.1} parent=5 // pred_region
        // Predicated region
        $region29: #{tpu_custom_call.1} parent=27 // pred_check
          %p156 = pneg %p33
        $region30: #{tpu_custom_call.1} parent=27 // pred_check_branch
          %158 = sbr.rel (%p156) target = $region32
        $region31: #{tpu_custom_call.1} parent=27 // pred_region
          %p159 = scmp.lt.s32.totalorder %s13, 1
          %s160 = scalar_select %p159, %s13, 1
          %s161 = smul.addr %s160, 8
          %s162 = scalar_lea.vmem %s0, %s161
        $region32: #{tpu_custom_call.1} parent=27 // pred_fallthru
          _
      $region28: #{tpu_custom_call.1} parent=5 // pred_fallthru
        _
      %p163 = scmp.le.s32.totalorder 1, %s13
      %p164 = scmp.lt.s32.totalorder %s13, 3
      %p165 = pnand %p163, %p164
      %p166 = pneg %p165
      // Predicated region
      $region33: #{tpu_custom_call.1} parent=5 // pred_check
        _
      $region34: #{tpu_custom_call.1} parent=5 // pred_check_branch
        %168 = sbr.rel (%p165) target = $region36
      $region35: #{tpu_custom_call.1} parent=5 // pred_region
        %s169 = ssub.s32 %s13, 1
        %p170 = scmp.lt.s32.totalorder %s18, 1
        %s171 = scalar_select %p170, %s18, 1
        %s172 = smul.addr %s171, 8
        %s173 = scalar_lea.vmem %s0, %s172
        %p174 = pneg %p39
        %p175 = pneg %p36
        %p176 = pneg %p60
        %p177 = pneg %p57
        %p178 = pneg %p81
        %p179 = pneg %p78
        %p180 = pneg %p102
        %p181 = pneg %p99
        %p182 = pneg %p128
        %p183 = pneg %p125
        %s184 = sand.u32 %s115, 1
        %s185 = scalar_lea.sflag [#allocation5], %s184
        %s186 = sand.u32 %s115, 1
        %s187 = smul.addr %s186, 8
        %s188 = scalar_lea.vmem [#allocation4], %s187
        %p189 = scmp.lt.s32.totalorder %s18, 1
        %s190 = scalar_select %p189, %s18, 1
        %s191 = smul.addr %s190, 8
        %s192 = scalar_lea.vmem %s0, %s191
        %v193 = vld [vmem:[%s192] sm:$0xff]
        %v194 = vld [vmem:[%s1] sm:$0xff]
        %v195 = vld [vmem:[%s1 + $0x8] sm:$0xff]
        %v196 = vld [vmem:[%s1 + $0x10] sm:$0xff]
        %v197 = vld [vmem:[%s1 + $0x18] sm:$0xff]
        %v198 = vld [vmem:[%s1 + $0x20] sm:$0xff]
        %v199 = vld [vmem:[%s1 + $0x28] sm:$0xff]
        %v200 = vld [vmem:[%s1 + $0x30] sm:$0xff]
        %v201 = vld [vmem:[%s1 + $0x38] sm:$0xff]
        %v202 = vld [vmem:[%s1 + $0x40] sm:$0xff]
        %v203 = vld [vmem:[%s1 + $0x48] sm:$0xff]
        %v204 = vld [vmem:[%s1 + $0x50] sm:$0xff]
        %v205 = vld [vmem:[%s1 + $0x58] sm:$0xff]
        %v206 = vld [vmem:[%s1 + $0x60] sm:$0xff]
        %v207 = vld [vmem:[%s1 + $0x68] sm:$0xff]
        %v208 = vld [vmem:[%s1 + $0x70] sm:$0xff]
        %v209 = vld [vmem:[%s1 + $0x78] sm:$0xff]
        %v210 = vld [vmem:[%s1 + $0x80] sm:$0xff]
        %v211 = vld [vmem:[%s1 + $0x88] sm:$0xff]
        %v212 = vld [vmem:[%s1 + $0x90] sm:$0xff]
        %v213 = vld [vmem:[%s1 + $0x98] sm:$0xff]
        %v214 = vld [vmem:[%s1 + $0xa0] sm:$0xff]
        %v215 = vld [vmem:[%s1 + $0xa8] sm:$0xff]
        %v216 = vld [vmem:[%s1 + $0xb0] sm:$0xff]
        %v217 = vld [vmem:[%s1 + $0xb8] sm:$0xff]
        %v218 = vld [vmem:[%s1 + $0xc0] sm:$0xff]
        %v219 = vld [vmem:[%s1 + $0xc8] sm:$0xff]
        %v220 = vld [vmem:[%s1 + $0xd0] sm:$0xff]
        %v221 = vld [vmem:[%s1 + $0xd8] sm:$0xff]
        %v222 = vld [vmem:[%s1 + $0xe0] sm:$0xff]
        %v223 = vld [vmem:[%s1 + $0xe8] sm:$0xff]
        %v224 = vld [vmem:[%s1 + $0xf0] sm:$0xff]
        %v225 = vld [vmem:[%s1 + $0xf8] sm:$0xff]
        %v226 = vld [vmem:[%s1 + $0x100] sm:$0xff]
        %v227 = vld [vmem:[%s1 + $0x108] sm:$0xff]
        %v228 = vld [vmem:[%s1 + $0x110] sm:$0xff]
        %v229 = vld [vmem:[%s1 + $0x118] sm:$0xff]
        %v230 = vld [vmem:[%s1 + $0x120] sm:$0xff]
        %v231 = vld [vmem:[%s1 + $0x128] sm:$0xff]
        %v232 = vld [vmem:[%s1 + $0x130] sm:$0xff]
        %v233 = vld [vmem:[%s1 + $0x138] sm:$0xff]
        %v234 = vld [vmem:[%s1 + $0x140] sm:$0xff]
        %v235 = vld [vmem:[%s1 + $0x148] sm:$0xff]
        %v236 = vld [vmem:[%s1 + $0x150] sm:$0xff]
        %v237 = vld [vmem:[%s1 + $0x158] sm:$0xff]
        %v238 = vld [vmem:[%s1 + $0x160] sm:$0xff]
        %v239 = vld [vmem:[%s1 + $0x168] sm:$0xff]
        %v240 = vld [vmem:[%s1 + $0x170] sm:$0xff]
        %v241 = vld [vmem:[%s1 + $0x178] sm:$0xff]
        %vm242 = vcmask 261120
        %v244 = vsel %vm242, %v193, 0
        %246 = vmatprep.subr.mxu0 %v195
        %247 = vmatpush1.msra.mxu0 %v194
        %248 = vmatprep.subr.mxu0 %v207
        %249 = vmatpush1.msra.mxu0 %v206
        %250 = vmatprep.subr.mxu0 %v219
        %251 = vmatpush1.msra.mxu0 %v218
        %252 = vmatprep.subr.mxu0 %v231
        %253 = vmatpush1.msra.mxu0 %v230
        %254 = vmatprep.subr.mxu0 0.0
        %255 = vmatpush1.msra.mxu0 0.0
        %256 = vmatprep.subr.mxu0 0.0
        %257 = vmatpush1.msra.mxu0 0.0
        %258 = vmatprep.subr.mxu0 0.0
        %259 = vmatpush1.msra.mxu0 0.0
        %260 = vmatprep.subr.mxu0 0.0
        %261 = vmatpush1.msra.mxu0 0.0
        %262 = vmatprep.subr.mxu0 0.0
        %263 = vmatpush1.msra.mxu0 0.0
        %264 = vmatprep.subr.mxu0 0.0
        %265 = vmatpush1.msra.mxu0 0.0
        %266 = vmatprep.subr.mxu0 0.0
        %267 = vmatpush1.msra.mxu0 0.0
        %268 = vmatprep.subr.mxu0 0.0
        %269 = vmatpush1.msra.mxu0 0.0
        %270 = vmatprep.subr.mxu0 0.0
        %271 = vmatpush1.msra.mxu0 0.0
        %272 = vmatprep.subr.mxu0 0.0
        %273 = vmatpush1.msra.mxu0 0.0
        %274 = vmatprep.subr.mxu0 0.0
        %275 = vmatpush1.msra.mxu0 0.0
        %276 = vmatprep.subr.mxu0 0.0
        %277 = vmatpush1.msra.mxu0 0.0
        %278 = vmatprep.subr.mxu0 0.0
        %279 = vmatpush1.msra.mxu0 0.0
        %280 = vmatprep.subr.mxu0 0.0
        %281 = vmatpush1.msra.mxu0 0.0
        %282 = vmatprep.subr.mxu0 0.0
        %283 = vmatpush1.msra.mxu0 0.0
        %284 = vmatprep.subr.mxu0 0.0
        %285 = vmatpush1.msra.mxu0 0.0
        %286 = vmatprep.subr.mxu0 0.0
        %287 = vmatpush1.msra.mxu0 0.0
        %288 = vmatprep.subr.mxu0 0.0
        %289 = vmatpush1.msra.mxu0 0.0
        %290 = vmatprep.subr.mxu0 0.0
        %291 = vmatpush1.msra.mxu0 0.0
        %292 = vmatprep.subr.mxu0 0.0
        %293 = vmatpush1.msra.mxu0 0.0
        %294 = vmatprep.subr.mxu0 0.0
        %295 = vmatpush1.msra.mxu0 0.0
        %296 = vmatprep.subr.mxu0 0.0
        %297 = vmatpush1.msra.mxu0 0.0
        %298 = vmatprep.subr.mxu0 0.0
        %299 = vmatpush1.msra.mxu0 0.0
        %300 = vmatprep.subr.mxu0 0.0
        %301 = vmatpush1.msra.mxu0 0.0
        %302 = vmatprep.subr.mxu0 0.0
        %303 = vmatpush1.msra.mxu0 0.0
        %304 = vmatprep.subr.mxu0 0.0
        %305 = vmatpush1.msra.mxu0 0.0
        %306 = vmatprep.subr.mxu0 0.0
        %307 = vmatpush1.msra.mxu0 0.0
        %308 = vmatprep.subr.mxu0 0.0
        %309 = vmatpush1.msra.mxu0 0.0
        %310 = vmatprep.mubr.f32.mxu0 0.0
        %311 = vmatmul.mubr.f32.gmra.mrb[0].mxu0 %v244
        %v312 = vpop.f32.mrb[0].mxu0
        %v313 = vadd.f32 0.0, %v312
        %v314 = vpop.f32.mrb[0].mxu0
        %v315 = vadd.f32 0.0, %v314
        %316 = vdwg.mxu0
        %317 = vmatprep.subr.mxu0 %v197
        %318 = vmatpush1.msra.mxu0 %v196
        %319 = vmatprep.subr.mxu0 %v209
        %320 = vmatpush1.msra.mxu0 %v208
        %321 = vmatprep.subr.mxu0 %v221
        %322 = vmatpush1.msra.mxu0 %v220
        %323 = vmatprep.subr.mxu0 %v233
        %324 = vmatpush1.msra.mxu0 %v232
        %325 = vmatprep.subr.mxu0 0.0
        %326 = vmatpush1.msra.mxu0 0.0
        %327 = vmatprep.subr.mxu0 0.0
        %328 = vmatpush1.msra.mxu0 0.0
        %329 = vmatprep.subr.mxu0 0.0
        %330 = vmatpush1.msra.mxu0 0.0
        %331 = vmatprep.subr.mxu0 0.0
        %332 = vmatpush1.msra.mxu0 0.0
        %333 = vmatprep.subr.mxu0 0.0
        %334 = vmatpush1.msra.mxu0 0.0
        %335 = vmatprep.subr.mxu0 0.0
        %336 = vmatpush1.msra.mxu0 0.0
        %337 = vmatprep.subr.mxu0 0.0
        %338 = vmatpush1.msra.mxu0 0.0
        %339 = vmatprep.subr.mxu0 0.0
        %340 = vmatpush1.msra.mxu0 0.0
        %341 = vmatprep.subr.mxu0 0.0
        %342 = vmatpush1.msra.mxu0 0.0
        %343 = vmatprep.subr.mxu0 0.0
        %344 = vmatpush1.msra.mxu0 0.0
        %345 = vmatprep.subr.mxu0 0.0
        %346 = vmatpush1.msra.mxu0 0.0
        %347 = vmatprep.subr.mxu0 0.0
        %348 = vmatpush1.msra.mxu0 0.0
        %349 = vmatprep.subr.mxu0 0.0
        %350 = vmatpush1.msra.mxu0 0.0
        %351 = vmatprep.subr.mxu0 0.0
        %352 = vmatpush1.msra.mxu0 0.0
        %353 = vmatprep.subr.mxu0 0.0
        %354 = vmatpush1.msra.mxu0 0.0
        %355 = vmatprep.subr.mxu0 0.0
        %356 = vmatpush1.msra.mxu0 0.0
        %357 = vmatprep.subr.mxu0 0.0
        %358 = vmatpush1.msra.mxu0 0.0
        %359 = vmatprep.subr.mxu0 0.0
        %360 = vmatpush1.msra.mxu0 0.0
        %361 = vmatprep.subr.mxu0 0.0
        %362 = vmatpush1.msra.mxu0 0.0
        %363 = vmatprep.subr.mxu0 0.0
        %364 = vmatpush1.msra.mxu0 0.0
        %365 = vmatprep.subr.mxu0 0.0
        %366 = vmatpush1.msra.mxu0 0.0
        %367 = vmatprep.subr.mxu0 0.0
        %368 = vmatpush1.msra.mxu0 0.0
        %369 = vmatprep.subr.mxu0 0.0
        %370 = vmatpush1.msra.mxu0 0.0
        %371 = vmatprep.subr.mxu0 0.0
        %372 = vmatpush1.msra.mxu0 0.0
        %373 = vmatprep.subr.mxu0 0.0
        %374 = vmatpush1.msra.mxu0 0.0
        %375 = vmatprep.subr.mxu0 0.0
        %376 = vmatpush1.msra.mxu0 0.0
        %377 = vmatprep.subr.mxu0 0.0
        %378 = vmatpush1.msra.mxu0 0.0
        %379 = vmatprep.subr.mxu0 0.0
        %380 = vmatpush1.msra.mxu0 0.0
        %381 = vmatprep.mubr.f32.mxu0 0.0
        %382 = vmatmul.mubr.f32.gmra.mrb[0].mxu0 %v244
        %v383 = vpop.f32.mrb[0].mxu0
        %v384 = vadd.f32 0.0, %v383
        %v385 = vpop.f32.mrb[0].mxu0
        %v386 = vadd.f32 0.0, %v385
        %387 = vdwg.mxu0
        %388 = vmatprep.subr.mxu0 %v199
        %389 = vmatpush1.msra.mxu0 %v198
        %390 = vmatprep.subr.mxu0 %v211
        %391 = vmatpush1.msra.mxu0 %v210
        %392 = vmatprep.subr.mxu0 %v223
        %393 = vmatpush1.msra.mxu0 %v222
        %394 = vmatprep.subr.mxu0 %v235
        %395 = vmatpush1.msra.mxu0 %v234
        %396 = vmatprep.subr.mxu0 0.0
        %397 = vmatpush1.msra.mxu0 0.0
        %398 = vmatprep.subr.mxu0 0.0
        %399 = vmatpush1.msra.mxu0 0.0
        %400 = vmatprep.subr.mxu0 0.0
        %401 = vmatpush1.msra.mxu0 0.0
        %402 = vmatprep.subr.mxu0 0.0
        %403 = vmatpush1.msra.mxu0 0.0
        %404 = vmatprep.subr.mxu0 0.0
        %405 = vmatpush1.msra.mxu0 0.0
        %406 = vmatprep.subr.mxu0 0.0
        %407 = vmatpush1.msra.mxu0 0.0
        %408 = vmatprep.subr.mxu0 0.0
        %409 = vmatpush1.msra.mxu0 0.0
        %410 = vmatprep.subr.mxu0 0.0
        %411 = vmatpush1.msra.mxu0 0.0
        %412 = vmatprep.subr.mxu0 0.0
        %413 = vmatpush1.msra.mxu0 0.0
        %414 = vmatprep.subr.mxu0 0.0
        %415 = vmatpush1.msra.mxu0 0.0
        %416 = vmatprep.subr.mxu0 0.0
        %417 = vmatpush1.msra.mxu0 0.0
        %418 = vmatprep.subr.mxu0 0.0
        %419 = vmatpush1.msra.mxu0 0.0
        %420 = vmatprep.subr.mxu0 0.0
        %421 = vmatpush1.msra.mxu0 0.0
        %422 = vmatprep.subr.mxu0 0.0
        %423 = vmatpush1.msra.mxu0 0.0
        %424 = vmatprep.subr.mxu0 0.0
        %425 = vmatpush1.msra.mxu0 0.0
        %426 = vmatprep.subr.mxu0 0.0
        %427 = vmatpush1.msra.mxu0 0.0
        %428 = vmatprep.subr.mxu0 0.0
        %429 = vmatpush1.msra.mxu0 0.0
        %430 = vmatprep.subr.mxu0 0.0
        %431 = vmatpush1.msra.mxu0 0.0
        %432 = vmatprep.subr.mxu0 0.0
        %433 = vmatpush1.msra.mxu0 0.0
        %434 = vmatprep.subr.mxu0 0.0
        %435 = vmatpush1.msra.mxu0 0.0
        %436 = vmatprep.subr.mxu0 0.0
        %437 = vmatpush1.msra.mxu0 0.0
        %438 = vmatprep.subr.mxu0 0.0
        %439 = vmatpush1.msra.mxu0 0.0
        %440 = vmatprep.subr.mxu0 0.0
        %441 = vmatpush1.msra.mxu0 0.0
        %442 = vmatprep.subr.mxu0 0.0
        %443 = vmatpush1.msra.mxu0 0.0
        %444 = vmatprep.subr.mxu0 0.0
        %445 = vmatpush1.msra.mxu0 0.0
        %446 = vmatprep.subr.mxu0 0.0
        %447 = vmatpush1.msra.mxu0 0.0
        %448 = vmatprep.subr.mxu0 0.0
        %449 = vmatpush1.msra.mxu0 0.0
        %450 = vmatprep.subr.mxu0 0.0
        %451 = vmatpush1.msra.mxu0 0.0
        %452 = vmatprep.mubr.f32.mxu0 0.0
        %453 = vmatmul.mubr.f32.gmra.mrb[0].mxu0 %v244
        %v454 = vpop.f32.mrb[0].mxu0
        %v455 = vadd.f32 0.0, %v454
        %v456 = vpop.f32.mrb[0].mxu0
        %v457 = vadd.f32 0.0, %v456
        %458 = vdwg.mxu0
        %459 = vmatprep.subr.mxu0 %v201
        %460 = vmatpush1.msra.mxu0 %v200
        %461 = vmatprep.subr.mxu0 %v213
        %462 = vmatpush1.msra.mxu0 %v212
        %463 = vmatprep.subr.mxu0 %v225
        %464 = vmatpush1.msra.mxu0 %v224
        %465 = vmatprep.subr.mxu0 %v237
        %466 = vmatpush1.msra.mxu0 %v236
        %467 = vmatprep.subr.mxu0 0.0
        %468 = vmatpush1.msra.mxu0 0.0
        %469 = vmatprep.subr.mxu0 0.0
        %470 = vmatpush1.msra.mxu0 0.0
        %471 = vmatprep.subr.mxu0 0.0
        %472 = vmatpush1.msra.mxu0 0.0
        %473 = vmatprep.subr.mxu0 0.0
        %474 = vmatpush1.msra.mxu0 0.0
        %475 = vmatprep.subr.mxu0 0.0
        %476 = vmatpush1.msra.mxu0 0.0
        %477 = vmatprep.subr.mxu0 0.0
        %478 = vmatpush1.msra.mxu0 0.0
        %479 = vmatprep.subr.mxu0 0.0
        %480 = vmatpush1.msra.mxu0 0.0
        %481 = vmatprep.subr.mxu0 0.0
        %482 = vmatpush1.msra.mxu0 0.0
        %483 = vmatprep.subr.mxu0 0.0
        %484 = vmatpush1.msra.mxu0 0.0
        %485 = vmatprep.subr.mxu0 0.0
        %486 = vmatpush1.msra.mxu0 0.0
        %487 = vmatprep.subr.mxu0 0.0
        %488 = vmatpush1.msra.mxu0 0.0
        %489 = vmatprep.subr.mxu0 0.0
        %490 = vmatpush1.msra.mxu0 0.0
        %491 = vmatprep.subr.mxu0 0.0
        %492 = vmatpush1.msra.mxu0 0.0
        %493 = vmatprep.subr.mxu0 0.0
        %494 = vmatpush1.msra.mxu0 0.0
        %495 = vmatprep.subr.mxu0 0.0
        %496 = vmatpush1.msra.mxu0 0.0
        %497 = vmatprep.subr.mxu0 0.0
        %498 = vmatpush1.msra.mxu0 0.0
        %499 = vmatprep.subr.mxu0 0.0
        %500 = vmatpush1.msra.mxu0 0.0
        %501 = vmatprep.subr.mxu0 0.0
        %502 = vmatpush1.msra.mxu0 0.0
        %503 = vmatprep.subr.mxu0 0.0
        %504 = vmatpush1.msra.mxu0 0.0
        %505 = vmatprep.subr.mxu0 0.0
        %506 = vmatpush1.msra.mxu0 0.0
        %507 = vmatprep.subr.mxu0 0.0
        %508 = vmatpush1.msra.mxu0 0.0
        %509 = vmatprep.subr.mxu0 0.0
        %510 = vmatpush1.msra.mxu0 0.0
        %511 = vmatprep.subr.mxu0 0.0
        %512 = vmatpush1.msra.mxu0 0.0
        %513 = vmatprep.subr.mxu0 0.0
        %514 = vmatpush1.msra.mxu0 0.0
        %515 = vmatprep.subr.mxu0 0.0
        %516 = vmatpush1.msra.mxu0 0.0
        %517 = vmatprep.subr.mxu0 0.0
        %518 = vmatpush1.msra.mxu0 0.0
        %519 = vmatprep.subr.mxu0 0.0
        %520 = vmatpush1.msra.mxu0 0.0
        %521 = vmatprep.subr.mxu0 0.0
        %522 = vmatpush1.msra.mxu0 0.0
        %523 = vmatprep.mubr.f32.mxu0 0.0
        %524 = vmatmul.mubr.f32.gmra.mrb[0].mxu0 %v244
        %v525 = vpop.f32.mrb[0].mxu0
        %v526 = vadd.f32 0.0, %v525
        %v527 = vpop.f32.mrb[0].mxu0
        %v528 = vadd.f32 0.0, %v527
        %529 = vdwg.mxu0
        %530 = vmatprep.subr.mxu0 %v203
        %531 = vmatpush1.msra.mxu0 %v202
        %532 = vmatprep.subr.mxu0 %v215
        %533 = vmatpush1.msra.mxu0 %v214
        %534 = vmatprep.subr.mxu0 %v227
        %535 = vmatpush1.msra.mxu0 %v226
        %536 = vmatprep.subr.mxu0 %v239
        %537 = vmatpush1.msra.mxu0 %v238
        %538 = vmatprep.subr.mxu0 0.0
        %539 = vmatpush1.msra.mxu0 0.0
        %540 = vmatprep.subr.mxu0 0.0
        %541 = vmatpush1.msra.mxu0 0.0
        %542 = vmatprep.subr.mxu0 0.0
        %543 = vmatpush1.msra.mxu0 0.0
        %544 = vmatprep.subr.mxu0 0.0
        %545 = vmatpush1.msra.mxu0 0.0
        %546 = vmatprep.subr.mxu0 0.0
        %547 = vmatpush1.msra.mxu0 0.0
        %548 = vmatprep.subr.mxu0 0.0
        %549 = vmatpush1.msra.mxu0 0.0
        %550 = vmatprep.subr.mxu0 0.0
        %551 = vmatpush1.msra.mxu0 0.0
        %552 = vmatprep.subr.mxu0 0.0
        %553 = vmatpush1.msra.mxu0 0.0
        %554 = vmatprep.subr.mxu0 0.0
        %555 = vmatpush1.msra.mxu0 0.0
        %556 = vmatprep.subr.mxu0 0.0
        %557 = vmatpush1.msra.mxu0 0.0
        %558 = vmatprep.subr.mxu0 0.0
        %559 = vmatpush1.msra.mxu0 0.0
        %560 = vmatprep.subr.mxu0 0.0
        %561 = vmatpush1.msra.mxu0 0.0
        %562 = vmatprep.subr.mxu0 0.0
        %563 = vmatpush1.msra.mxu0 0.0
        %564 = vmatprep.subr.mxu0 0.0
        %565 = vmatpush1.msra.mxu0 0.0
        %566 = vmatprep.subr.mxu0 0.0
        %567 = vmatpush1.msra.mxu0 0.0
        %568 = vmatprep.subr.mxu0 0.0
        %569 = vmatpush1.msra.mxu0 0.0
        %570 = vmatprep.subr.mxu0 0.0
        %571 = vmatpush1.msra.mxu0 0.0
        %572 = vmatprep.subr.mxu0 0.0
        %573 = vmatpush1.msra.mxu0 0.0
        %574 = vmatprep.subr.mxu0 0.0
        %575 = vmatpush1.msra.mxu0 0.0
        %576 = vmatprep.subr.mxu0 0.0
        %577 = vmatpush1.msra.mxu0 0.0
        %578 = vmatprep.subr.mxu0 0.0
        %579 = vmatpush1.msra.mxu0 0.0
        %580 = vmatprep.subr.mxu0 0.0
        %581 = vmatpush1.msra.mxu0 0.0
        %582 = vmatprep.subr.mxu0 0.0
        %583 = vmatpush1.msra.mxu0 0.0
        %584 = vmatprep.subr.mxu0 0.0
        %585 = vmatpush1.msra.mxu0 0.0
        %586 = vmatprep.subr.mxu0 0.0
        %587 = vmatpush1.msra.mxu0 0.0
        %588 = vmatprep.subr.mxu0 0.0
        %589 = vmatpush1.msra.mxu0 0.0
        %590 = vmatprep.subr.mxu0 0.0
        %591 = vmatpush1.msra.mxu0 0.0
        %592 = vmatprep.subr.mxu0 0.0
        %593 = vmatpush1.msra.mxu0 0.0
        %594 = vmatprep.mubr.f32.mxu0 0.0
        %595 = vmatmul.mubr.f32.gmra.mrb[0].mxu0 %v244
        %v596 = vpop.f32.mrb[0].mxu0
        %v597 = vadd.f32 0.0, %v596
        %v598 = vpop.f32.mrb[0].mxu0
        %v599 = vadd.f32 0.0, %v598
        %600 = vdwg.mxu0
        %601 = vmatprep.subr.mxu0 %v205
        %602 = vmatpush1.msra.mxu0 %v204
        %603 = vmatprep.subr.mxu0 %v217
        %604 = vmatpush1.msra.mxu0 %v216
        %605 = vmatprep.subr.mxu0 %v229
        %606 = vmatpush1.msra.mxu0 %v228
        %607 = vmatprep.subr.mxu0 %v241
        %608 = vmatpush1.msra.mxu0 %v240
        %609 = vmatprep.subr.mxu0 0.0
        %610 = vmatpush1.msra.mxu0 0.0
        %611 = vmatprep.subr.mxu0 0.0
        %612 = vmatpush1.msra.mxu0 0.0
        %613 = vmatprep.subr.mxu0 0.0
        %614 = vmatpush1.msra.mxu0 0.0
        %615 = vmatprep.subr.mxu0 0.0
        %616 = vmatpush1.msra.mxu0 0.0
        %617 = vmatprep.subr.mxu0 0.0
        %618 = vmatpush1.msra.mxu0 0.0
        %619 = vmatprep.subr.mxu0 0.0
        %620 = vmatpush1.msra.mxu0 0.0
        %621 = vmatprep.subr.mxu0 0.0
        %622 = vmatpush1.msra.mxu0 0.0
        %623 = vmatprep.subr.mxu0 0.0
        %624 = vmatpush1.msra.mxu0 0.0
        %625 = vmatprep.subr.mxu0 0.0
        %626 = vmatpush1.msra.mxu0 0.0
        %627 = vmatprep.subr.mxu0 0.0
        %628 = vmatpush1.msra.mxu0 0.0
        %629 = vmatprep.subr.mxu0 0.0
        %630 = vmatpush1.msra.mxu0 0.0
        %631 = vmatprep.subr.mxu0 0.0
        %632 = vmatpush1.msra.mxu0 0.0
        %633 = vmatprep.subr.mxu0 0.0
        %634 = vmatpush1.msra.mxu0 0.0
        %635 = vmatprep.subr.mxu0 0.0
        %636 = vmatpush1.msra.mxu0 0.0
        %637 = vmatprep.subr.mxu0 0.0
        %638 = vmatpush1.msra.mxu0 0.0
        %639 = vmatprep.subr.mxu0 0.0
        %640 = vmatpush1.msra.mxu0 0.0
        %641 = vmatprep.subr.mxu0 0.0
        %642 = vmatpush1.msra.mxu0 0.0
        %643 = vmatprep.subr.mxu0 0.0
        %644 = vmatpush1.msra.mxu0 0.0
        %645 = vmatprep.subr.mxu0 0.0
        %646 = vmatpush1.msra.mxu0 0.0
        %647 = vmatprep.subr.mxu0 0.0
        %648 = vmatpush1.msra.mxu0 0.0
        %649 = vmatprep.subr.mxu0 0.0
        %650 = vmatpush1.msra.mxu0 0.0
        %651 = vmatprep.subr.mxu0 0.0
        %652 = vmatpush1.msra.mxu0 0.0
        %653 = vmatprep.subr.mxu0 0.0
        %654 = vmatpush1.msra.mxu0 0.0
        %655 = vmatprep.subr.mxu0 0.0
        %656 = vmatpush1.msra.mxu0 0.0
        %657 = vmatprep.subr.mxu0 0.0
        %658 = vmatpush1.msra.mxu0 0.0
        %659 = vmatprep.subr.mxu0 0.0
        %660 = vmatpush1.msra.mxu0 0.0
        %661 = vmatprep.subr.mxu0 0.0
        %662 = vmatpush1.msra.mxu0 0.0
        %663 = vmatprep.subr.mxu0 0.0
        %664 = vmatpush1.msra.mxu0 0.0
        %665 = vmatprep.mubr.f32.mxu0 0.0
        %666 = vmatmul.mubr.f32.gmra.mrb[0].mxu0 %v244
        %v667 = vpop.f32.mrb[0].mxu0
        %v668 = vadd.f32 0.0, %v667
        %v669 = vpop.f32.mrb[0].mxu0
        %v670 = vadd.f32 0.0, %v669
        %671 = vdwg.mxu0
        %672 = vst [vmem:[#allocation2] sm:$0xff] %v313
        %673 = vst [vmem:[#allocation2 + $0x8] sm:$0xff] %v315
        %674 = vst [vmem:[#allocation2 + $0x10] sm:$0xff] %v384
        %675 = vst [vmem:[#allocation2 + $0x18] sm:$0xff] %v386
        %676 = vst [vmem:[#allocation2 + $0x20] sm:$0xff] %v455
        %677 = vst [vmem:[#allocation2 + $0x28] sm:$0xff] %v457
        %678 = vst [vmem:[#allocation2 + $0x30] sm:$0xff] %v526
        %679 = vst [vmem:[#allocation2 + $0x38] sm:$0xff] %v528
        %680 = vst [vmem:[#allocation2 + $0x40] sm:$0xff] %v597
        %681 = vst [vmem:[#allocation2 + $0x48] sm:$0xff] %v599
        %682 = vst [vmem:[#allocation2 + $0x50] sm:$0xff] %v668
        %683 = vst [vmem:[#allocation2 + $0x58] sm:$0xff] %v670
        %v684 = vlaneseq
        %v685 = vshrl.u32 %v684, 7
        %v686 = vlaneseq
        %v687 = vand.u32 %v686, 127
        %vm688 = vcmp.ge.s32.totalorder %v687, %v685
        %v689 = vsel %vm688, -3.5355338e+09, 0.0
        %v690 = vld [vmem:[#allocation2] sm:$0xff]
        %v691 = vld [vmem:[#allocation2 + $0x20] sm:$0xff]
        %v692 = vld [vmem:[#allocation2 + $0x40] sm:$0xff]
        %693 = vmatprep.subr.mxu0 0.0
        %694 = vmatpush1.xpose.msra.mxu0 %v691
        %695 = vmatprep.subr.mxu0 0.0
        %696 = vmatpush1.xpose.msra.mxu0 0.0
        %697 = vmatprep.subr.mxu0 0.0
        %698 = vmatpush1.xpose.msra.mxu0 0.0
        %699 = vmatprep.subr.mxu0 0.0
        %700 = vmatpush1.xpose.msra.mxu0 0.0
        %701 = vmatprep.subr.mxu0 0.0
        %702 = vmatpush1.xpose.msra.mxu0 0.0
        %703 = vmatprep.subr.mxu0 0.0
        %704 = vmatpush1.xpose.msra.mxu0 0.0
        %705 = vmatprep.subr.mxu0 0.0
        %706 = vmatpush1.xpose.msra.mxu0 0.0
        %707 = vmatprep.subr.mxu0 0.0
        %708 = vmatpush1.xpose.msra.mxu0 0.0
        %709 = vmatprep.subr.mxu0 0.0
        %710 = vmatpush1.xpose.msra.mxu0 0.0
        %711 = vmatprep.subr.mxu0 0.0
        %712 = vmatpush1.xpose.msra.mxu0 0.0
        %713 = vmatprep.subr.mxu0 0.0
        %714 = vmatpush1.xpose.msra.mxu0 0.0
        %715 = vmatprep.subr.mxu0 0.0
        %716 = vmatpush1.xpose.msra.mxu0 0.0
        %717 = vmatprep.subr.mxu0 0.0
        %718 = vmatpush1.xpose.msra.mxu0 0.0
        %719 = vmatprep.subr.mxu0 0.0
        %720 = vmatpush1.xpose.msra.mxu0 0.0
        %721 = vmatprep.subr.mxu0 0.0
        %722 = vmatpush1.xpose.msra.mxu0 0.0
        %723 = vmatprep.subr.mxu0 0.0
        %724 = vmatpush1.xpose.msra.mxu0 0.0
        %725 = vmatprep.subr.mxu0 0.0
        %726 = vmatpush1.xpose.msra.mxu0 0.0
        %727 = vmatprep.subr.mxu0 0.0
        %728 = vmatpush1.xpose.msra.mxu0 0.0
        %729 = vmatprep.subr.mxu0 0.0
        %730 = vmatpush1.xpose.msra.mxu0 0.0
        %731 = vmatprep.subr.mxu0 0.0
        %732 = vmatpush1.xpose.msra.mxu0 0.0
        %733 = vmatprep.subr.mxu0 0.0
        %734 = vmatpush1.xpose.msra.mxu0 0.0
        %735 = vmatprep.subr.mxu0 0.0
        %736 = vmatpush1.xpose.msra.mxu0 0.0
        %737 = vmatprep.subr.mxu0 0.0
        %738 = vmatpush1.xpose.msra.mxu0 0.0
        %739 = vmatprep.subr.mxu0 0.0
        %740 = vmatpush1.xpose.msra.mxu0 0.0
        %741 = vmatprep.subr.mxu0 0.0
        %742 = vmatpush1.xpose.msra.mxu0 0.0
        %743 = vmatprep.subr.mxu0 0.0
        %744 = vmatpush1.xpose.msra.mxu0 0.0
        %745 = vmatprep.subr.mxu0 0.0
        %746 = vmatpush1.xpose.msra.mxu0 0.0
        %747 = vmatprep.subr.mxu0 0.0
        %748 = vmatpush1.xpose.msra.mxu0 0.0
        %749 = vmatprep.subr.mxu0 0.0
        %750 = vmatpush1.xpose.msra.mxu0 0.0
        %751 = vmatprep.subr.mxu0 0.0
        %752 = vmatpush1.xpose.msra.mxu0 0.0
        %753 = vmatprep.subr.mxu0 0.0
        %754 = vmatpush1.xpose.msra.mxu0 0.0
        %755 = vmatprep.subr.mxu0 0.0
        %756 = vmatpush1.xpose.msra.mxu0 0.0
        %757 = vmatprep.mubr.f32.mxu0 0.0
        %758 = vmatmul.mubr.f32.gmra.mrb[0].mxu0 %v690
        %v759 = vpop.f32.mrb[0].mxu0
        %v760 = vadd.f32 %v689, %v759
        %v761 = vpop.f32.mrb[0].mxu0
        %762 = vdwg.mxu0
        %vm763 = vcmask 64512
        %v764 = vsel %vm763, %v760, -inf
        %765 = vmax.xlane.f32.xlu0 %v764
        %v766 = vpop.xlane.xlu0 %765
        %v767 = vsub.f32 %v760, %v766
        %v768 = vmul.f32 %v767, 1.442695
        %v769 = vpow.pop %v768
        %v770 = vsel %vm763, %v769, 0.0
        %771 = vadd.xlane.f32.xlu0 %v770
        %v772 = vpop.xlane.xlu0 %771
        %v773 = vrcp.pop %v772
        %v774 = vmul.f32 %v772, %v773
        %v775 = vsub.f32 2.0, %v774
        %v776 = vmul.f32 %v773, %v775
        %v777 = vmul.f32 %v769, %v776
        %v779 = vsel %vm763, %v777, 0
        %781 = vmatprep.subr.mxu0 0.0
        %782 = vmatpush1.msra.mxu0 %v692
        %783 = vmatprep.subr.mxu0 0.0
        %784 = vmatpush1.msra.mxu0 0.0
        %785 = vmatprep.subr.mxu0 0.0
        %786 = vmatpush1.msra.mxu0 0.0
        %787 = vmatprep.subr.mxu0 0.0
        %788 = vmatpush1.msra.mxu0 0.0
        %789 = vmatprep.subr.mxu0 0.0
        %790 = vmatpush1.msra.mxu0 0.0
        %791 = vmatprep.subr.mxu0 0.0
        %792 = vmatpush1.msra.mxu0 0.0
        %793 = vmatprep.subr.mxu0 0.0
        %794 = vmatpush1.msra.mxu0 0.0
        %795 = vmatprep.subr.mxu0 0.0
        %796 = vmatpush1.msra.mxu0 0.0
        %797 = vmatprep.subr.mxu0 0.0
        %798 = vmatpush1.msra.mxu0 0.0
        %799 = vmatprep.subr.mxu0 0.0
        %800 = vmatpush1.msra.mxu0 0.0
        %801 = vmatprep.subr.mxu0 0.0
        %802 = vmatpush1.msra.mxu0 0.0
        %803 = vmatprep.subr.mxu0 0.0
        %804 = vmatpush1.msra.mxu0 0.0
        %805 = vmatprep.subr.mxu0 0.0
        %806 = vmatpush1.msra.mxu0 0.0
        %807 = vmatprep.subr.mxu0 0.0
        %808 = vmatpush1.msra.mxu0 0.0
        %809 = vmatprep.subr.mxu0 0.0
        %810 = vmatpush1.msra.mxu0 0.0
        %811 = vmatprep.subr.mxu0 0.0
        %812 = vmatpush1.msra.mxu0 0.0
        %813 = vmatprep.subr.mxu0 0.0
        %814 = vmatpush1.msra.mxu0 0.0
        %815 = vmatprep.subr.mxu0 0.0
        %816 = vmatpush1.msra.mxu0 0.0
        %817 = vmatprep.subr.mxu0 0.0
        %818 = vmatpush1.msra.mxu0 0.0
        %819 = vmatprep.subr.mxu0 0.0
        %820 = vmatpush1.msra.mxu0 0.0
        %821 = vmatprep.subr.mxu0 0.0
        %822 = vmatpush1.msra.mxu0 0.0
        %823 = vmatprep.subr.mxu0 0.0
        %824 = vmatpush1.msra.mxu0 0.0
        %825 = vmatprep.subr.mxu0 0.0
        %826 = vmatpush1.msra.mxu0 0.0
        %827 = vmatprep.subr.mxu0 0.0
        %828 = vmatpush1.msra.mxu0 0.0
        %829 = vmatprep.subr.mxu0 0.0
        %830 = vmatpush1.msra.mxu0 0.0
        %831 = vmatprep.subr.mxu0 0.0
        %832 = vmatpush1.msra.mxu0 0.0
        %833 = vmatprep.subr.mxu0 0.0
        %834 = vmatpush1.msra.mxu0 0.0
        %835 = vmatprep.subr.mxu0 0.0
        %836 = vmatpush1.msra.mxu0 0.0
        %837 = vmatprep.subr.mxu0 0.0
        %838 = vmatpush1.msra.mxu0 0.0
        %839 = vmatprep.subr.mxu0 0.0
        %840 = vmatpush1.msra.mxu0 0.0
        %841 = vmatprep.subr.mxu0 0.0
        %842 = vmatpush1.msra.mxu0 0.0
        %843 = vmatprep.subr.mxu0 0.0
        %844 = vmatpush1.msra.mxu0 0.0
        %845 = vmatprep.mubr.f32.mxu0 0.0
        %846 = vmatmul.mubr.f32.gmra.mrb[0].mxu0 %v779
        %v847 = vpop.f32.mrb[0].mxu0
        %v848 = vadd.f32 0.0, %v847
        %v849 = vpop.f32.mrb[0].mxu0
        %850 = vdwg.mxu0
        %851 = vst [vmem:[#allocation3] sm:$0xff] %v848
        %v852 = vld [vmem:[#allocation2 + $0x8] sm:$0xff]
        %v853 = vld [vmem:[#allocation2 + $0x28] sm:$0xff]
        %v854 = vld [vmem:[#allocation2 + $0x48] sm:$0xff]
        %855 = vmatprep.subr.mxu0 0.0
        %856 = vmatpush1.xpose.msra.mxu0 %v853
        %857 = vmatprep.subr.mxu0 0.0
        %858 = vmatpush1.xpose.msra.mxu0 0.0
        %859 = vmatprep.subr.mxu0 0.0
        %860 = vmatpush1.xpose.msra.mxu0 0.0
        %861 = vmatprep.subr.mxu0 0.0
        %862 = vmatpush1.xpose.msra.mxu0 0.0
        %863 = vmatprep.subr.mxu0 0.0
        %864 = vmatpush1.xpose.msra.mxu0 0.0
        %865 = vmatprep.subr.mxu0 0.0
        %866 = vmatpush1.xpose.msra.mxu0 0.0
        %867 = vmatprep.subr.mxu0 0.0
        %868 = vmatpush1.xpose.msra.mxu0 0.0
        %869 = vmatprep.subr.mxu0 0.0
        %870 = vmatpush1.xpose.msra.mxu0 0.0
        %871 = vmatprep.subr.mxu0 0.0
        %872 = vmatpush1.xpose.msra.mxu0 0.0
        %873 = vmatprep.subr.mxu0 0.0
        %874 = vmatpush1.xpose.msra.mxu0 0.0
        %875 = vmatprep.subr.mxu0 0.0
        %876 = vmatpush1.xpose.msra.mxu0 0.0
        %877 = vmatprep.subr.mxu0 0.0
        %878 = vmatpush1.xpose.msra.mxu0 0.0
        %879 = vmatprep.subr.mxu0 0.0
        %880 = vmatpush1.xpose.msra.mxu0 0.0
        %881 = vmatprep.subr.mxu0 0.0
        %882 = vmatpush1.xpose.msra.mxu0 0.0
        %883 = vmatprep.subr.mxu0 0.0
        %884 = vmatpush1.xpose.msra.mxu0 0.0
        %885 = vmatprep.subr.mxu0 0.0
        %886 = vmatpush1.xpose.msra.mxu0 0.0
        %887 = vmatprep.subr.mxu0 0.0
        %888 = vmatpush1.xpose.msra.mxu0 0.0
        %889 = vmatprep.subr.mxu0 0.0
        %890 = vmatpush1.xpose.msra.mxu0 0.0
        %891 = vmatprep.subr.mxu0 0.0
        %892 = vmatpush1.xpose.msra.mxu0 0.0
        %893 = vmatprep.subr.mxu0 0.0
        %894 = vmatpush1.xpose.msra.mxu0 0.0
        %895 = vmatprep.subr.mxu0 0.0
        %896 = vmatpush1.xpose.msra.mxu0 0.0
        %897 = vmatprep.subr.mxu0 0.0
        %898 = vmatpush1.xpose.msra.mxu0 0.0
        %899 = vmatprep.subr.mxu0 0.0
        %900 = vmatpush1.xpose.msra.mxu0 0.0
        %901 = vmatprep.subr.mxu0 0.0
        %902 = vmatpush1.xpose.msra.mxu0 0.0
        %903 = vmatprep.subr.mxu0 0.0
        %904 = vmatpush1.xpose.msra.mxu0 0.0
        %905 = vmatprep.subr.mxu0 0.0
        %906 = vmatpush1.xpose.msra.mxu0 0.0
        %907 = vmatprep.subr.mxu0 0.0
        %908 = vmatpush1.xpose.msra.mxu0 0.0
        %909 = vmatprep.subr.mxu0 0.0
        %910 = vmatpush1.xpose.msra.mxu0 0.0
        %911 = vmatprep.subr.mxu0 0.0
        %912 = vmatpush1.xpose.msra.mxu0 0.0
        %913 = vmatprep.subr.mxu0 0.0
        %914 = vmatpush1.xpose.msra.mxu0 0.0
        %915 = vmatprep.subr.mxu0 0.0
        %916 = vmatpush1.xpose.msra.mxu0 0.0
        %917 = vmatprep.subr.mxu0 0.0
        %918 = vmatpush1.xpose.msra.mxu0 0.0
        %919 = vmatprep.mubr.f32.mxu0 0.0
        %920 = vmatmul.mubr.f32.gmra.mrb[0].mxu0 %v852
        %v921 = vpop.f32.mrb[0].mxu0
        %v922 = vadd.f32 %v689, %v921
        %v923 = vpop.f32.mrb[0].mxu0
        %924 = vdwg.mxu0
        %v925 = vsel %vm763, %v922, -inf
        %926 = vmax.xlane.f32.xlu0 %v925
        %v927 = vpop.xlane.xlu0 %926
        %v928 = vsub.f32 %v922, %v927
        %v929 = vmul.f32 %v928, 1.442695
        %v930 = vpow.pop %v929
        %v931 = vsel %vm763, %v930, 0.0
        %932 = vadd.xlane.f32.xlu0 %v931
        %v933 = vpop.xlane.xlu0 %932
        %v934 = vrcp.pop %v933
        %v935 = vmul.f32 %v933, %v934
        %v936 = vsub.f32 2.0, %v935
        %v937 = vmul.f32 %v934, %v936
        %v938 = vmul.f32 %v930, %v937
        %v940 = vsel %vm763, %v938, 0
        %942 = vmatprep.subr.mxu0 0.0
        %943 = vmatpush1.msra.mxu0 %v854
        %944 = vmatprep.subr.mxu0 0.0
        %945 = vmatpush1.msra.mxu0 0.0
        %946 = vmatprep.subr.mxu0 0.0
        %947 = vmatpush1.msra.mxu0 0.0
        %948 = vmatprep.subr.mxu0 0.0
        %949 = vmatpush1.msra.mxu0 0.0
        %950 = vmatprep.subr.mxu0 0.0
        %951 = vmatpush1.msra.mxu0 0.0
        %952 = vmatprep.subr.mxu0 0.0
        %953 = vmatpush1.msra.mxu0 0.0
        %954 = vmatprep.subr.mxu0 0.0
        %955 = vmatpush1.msra.mxu0 0.0
        %956 = vmatprep.subr.mxu0 0.0
        %957 = vmatpush1.msra.mxu0 0.0
        %958 = vmatprep.subr.mxu0 0.0
        %959 = vmatpush1.msra.mxu0 0.0
        %960 = vmatprep.subr.mxu0 0.0
        %961 = vmatpush1.msra.mxu0 0.0
        %962 = vmatprep.subr.mxu0 0.0
        %963 = vmatpush1.msra.mxu0 0.0
        %964 = vmatprep.subr.mxu0 0.0
        %965 = vmatpush1.msra.mxu0 0.0
        %966 = vmatprep.subr.mxu0 0.0
        %967 = vmatpush1.msra.mxu0 0.0
        %968 = vmatprep.subr.mxu0 0.0
        %969 = vmatpush1.msra.mxu0 0.0
        %970 = vmatprep.subr.mxu0 0.0
        %971 = vmatpush1.msra.mxu0 0.0
        %972 = vmatprep.subr.mxu0 0.0
        %973 = vmatpush1.msra.mxu0 0.0
        %974 = vmatprep.subr.mxu0 0.0
        %975 = vmatpush1.msra.mxu0 0.0
        %976 = vmatprep.subr.mxu0 0.0
        %977 = vmatpush1.msra.mxu0 0.0
        %978 = vmatprep.subr.mxu0 0.0
        %979 = vmatpush1.msra.mxu0 0.0
        %980 = vmatprep.subr.mxu0 0.0
        %981 = vmatpush1.msra.mxu0 0.0
        %982 = vmatprep.subr.mxu0 0.0
        %983 = vmatpush1.msra.mxu0 0.0
        %984 = vmatprep.subr.mxu0 0.0
        %985 = vmatpush1.msra.mxu0 0.0
        %986 = vmatprep.subr.mxu0 0.0
        %987 = vmatpush1.msra.mxu0 0.0
        %988 = vmatprep.subr.mxu0 0.0
        %989 = vmatpush1.msra.mxu0 0.0
        %990 = vmatprep.subr.mxu0 0.0
        %991 = vmatpush1.msra.mxu0 0.0
        %992 = vmatprep.subr.mxu0 0.0
        %993 = vmatpush1.msra.mxu0 0.0
        %994 = vmatprep.subr.mxu0 0.0
        %995 = vmatpush1.msra.mxu0 0.0
        %996 = vmatprep.subr.mxu0 0.0
        %997 = vmatpush1.msra.mxu0 0.0
        %998 = vmatprep.subr.mxu0 0.0
        %999 = vmatpush1.msra.mxu0 0.0
        %1000 = vmatprep.subr.mxu0 0.0
        %1001 = vmatpush1.msra.mxu0 0.0
        %1002 = vmatprep.subr.mxu0 0.0
        %1003 = vmatpush1.msra.mxu0 0.0
        %1004 = vmatprep.subr.mxu0 0.0
        %1005 = vmatpush1.msra.mxu0 0.0
        %1006 = vmatprep.mubr.f32.mxu0 0.0
        %1007 = vmatmul.mubr.f32.gmra.mrb[0].mxu0 %v940
        %v1008 = vpop.f32.mrb[0].mxu0
        %v1009 = vadd.f32 0.0, %v1008
        %v1010 = vpop.f32.mrb[0].mxu0
        %1011 = vdwg.mxu0
        %1012 = vst [vmem:[#allocation3 + $0x8] sm:$0xff] %v1009
        %v1013 = vld [vmem:[#allocation2 + $0x10] sm:$0xff]
        %v1014 = vld [vmem:[#allocation2 + $0x30] sm:$0xff]
        %v1015 = vld [vmem:[#allocation2 + $0x50] sm:$0xff]
        %1016 = vmatprep.subr.mxu0 0.0
        %1017 = vmatpush1.xpose.msra.mxu0 %v1014
        %1018 = vmatprep.subr.mxu0 0.0
        %1019 = vmatpush1.xpose.msra.mxu0 0.0
        %1020 = vmatprep.subr.mxu0 0.0
        %1021 = vmatpush1.xpose.msra.mxu0 0.0
        %1022 = vmatprep.subr.mxu0 0.0
        %1023 = vmatpush1.xpose.msra.mxu0 0.0
        %1024 = vmatprep.subr.mxu0 0.0
        %1025 = vmatpush1.xpose.msra.mxu0 0.0
        %1026 = vmatprep.subr.mxu0 0.0
        %1027 = vmatpush1.xpose.msra.mxu0 0.0
        %1028 = vmatprep.subr.mxu0 0.0
        %1029 = vmatpush1.xpose.msra.mxu0 0.0
        %1030 = vmatprep.subr.mxu0 0.0
        %1031 = vmatpush1.xpose.msra.mxu0 0.0
        %1032 = vmatprep.subr.mxu0 0.0
        %1033 = vmatpush1.xpose.msra.mxu0 0.0
        %1034 = vmatprep.subr.mxu0 0.0
        %1035 = vmatpush1.xpose.msra.mxu0 0.0
        %1036 = vmatprep.subr.mxu0 0.0
        %1037 = vmatpush1.xpose.msra.mxu0 0.0
        %1038 = vmatprep.subr.mxu0 0.0
        %1039 = vmatpush1.xpose.msra.mxu0 0.0
        %1040 = vmatprep.subr.mxu0 0.0
        %1041 = vmatpush1.xpose.msra.mxu0 0.0
        %1042 = vmatprep.subr.mxu0 0.0
        %1043 = vmatpush1.xpose.msra.mxu0 0.0
        %1044 = vmatprep.subr.mxu0 0.0
        %1045 = vmatpush1.xpose.msra.mxu0 0.0
        %1046 = vmatprep.subr.mxu0 0.0
        %1047 = vmatpush1.xpose.msra.mxu0 0.0
        %1048 = vmatprep.subr.mxu0 0.0
        %1049 = vmatpush1.xpose.msra.mxu0 0.0
        %1050 = vmatprep.subr.mxu0 0.0
        %1051 = vmatpush1.xpose.msra.mxu0 0.0
        %1052 = vmatprep.subr.mxu0 0.0
        %1053 = vmatpush1.xpose.msra.mxu0 0.0
        %1054 = vmatprep.subr.mxu0 0.0
        %1055 = vmatpush1.xpose.msra.mxu0 0.0
        %1056 = vmatprep.subr.mxu0 0.0
        %1057 = vmatpush1.xpose.msra.mxu0 0.0
        %1058 = vmatprep.subr.mxu0 0.0
        %1059 = vmatpush1.xpose.msra.mxu0 0.0
        %1060 = vmatprep.subr.mxu0 0.0
        %1061 = vmatpush1.xpose.msra.mxu0 0.0
        %1062 = vmatprep.subr.mxu0 0.0
        %1063 = vmatpush1.xpose.msra.mxu0 0.0
        %1064 = vmatprep.subr.mxu0 0.0
        %1065 = vmatpush1.xpose.msra.mxu0 0.0
        %1066 = vmatprep.subr.mxu0 0.0
        %1067 = vmatpush1.xpose.msra.mxu0 0.0
        %1068 = vmatprep.subr.mxu0 0.0
        %1069 = vmatpush1.xpose.msra.mxu0 0.0
        %1070 = vmatprep.subr.mxu0 0.0
        %1071 = vmatpush1.xpose.msra.mxu0 0.0
        %1072 = vmatprep.subr.mxu0 0.0
        %1073 = vmatpush1.xpose.msra.mxu0 0.0
        %1074 = vmatprep.subr.mxu0 0.0
        %1075 = vmatpush1.xpose.msra.mxu0 0.0
        %1076 = vmatprep.subr.mxu0 0.0
        %1077 = vmatpush1.xpose.msra.mxu0 0.0
        %1078 = vmatprep.subr.mxu0 0.0
        %1079 = vmatpush1.xpose.msra.mxu0 0.0
        %1080 = vmatprep.mubr.f32.mxu0 0.0
        %1081 = vmatmul.mubr.f32.gmra.mrb[0].mxu0 %v1013
        %v1082 = vpop.f32.mrb[0].mxu0
        %v1083 = vadd.f32 %v689, %v1082
        %v1084 = vpop.f32.mrb[0].mxu0
        %1085 = vdwg.mxu0
        %v1086 = vsel %vm763, %v1083, -inf
        %1087 = vmax.xlane.f32.xlu0 %v1086
        %v1088 = vpop.xlane.xlu0 %1087
        %v1089 = vsub.f32 %v1083, %v1088
        %v1090 = vmul.f32 %v1089, 1.442695
        %v1091 = vpow.pop %v1090
        %v1092 = vsel %vm763, %v1091, 0.0
        %1093 = vadd.xlane.f32.xlu0 %v1092
        %v1094 = vpop.xlane.xlu0 %1093
        %v1095 = vrcp.pop %v1094
        %v1096 = vmul.f32 %v1094, %v1095
        %v1097 = vsub.f32 2.0, %v1096
        %v1098 = vmul.f32 %v1095, %v1097
        %v1099 = vmul.f32 %v1091, %v1098
        %v1101 = vsel %vm763, %v1099, 0
        %1103 = vmatprep.subr.mxu0 0.0
        %1104 = vmatpush1.msra.mxu0 %v1015
        %1105 = vmatprep.subr.mxu0 0.0
        %1106 = vmatpush1.msra.mxu0 0.0
        %1107 = vmatprep.subr.mxu0 0.0
        %1108 = vmatpush1.msra.mxu0 0.0
        %1109 = vmatprep.subr.mxu0 0.0
        %1110 = vmatpush1.msra.mxu0 0.0
        %1111 = vmatprep.subr.mxu0 0.0
        %1112 = vmatpush1.msra.mxu0 0.0
        %1113 = vmatprep.subr.mxu0 0.0
        %1114 = vmatpush1.msra.mxu0 0.0
        %1115 = vmatprep.subr.mxu0 0.0
        %1116 = vmatpush1.msra.mxu0 0.0
        %1117 = vmatprep.subr.mxu0 0.0
        %1118 = vmatpush1.msra.mxu0 0.0
        %1119 = vmatprep.subr.mxu0 0.0
        %1120 = vmatpush1.msra.mxu0 0.0
        %1121 = vmatprep.subr.mxu0 0.0
        %1122 = vmatpush1.msra.mxu0 0.0
        %1123 = vmatprep.subr.mxu0 0.0
        %1124 = vmatpush1.msra.mxu0 0.0
        %1125 = vmatprep.subr.mxu0 0.0
        %1126 = vmatpush1.msra.mxu0 0.0
        %1127 = vmatprep.subr.mxu0 0.0
        %1128 = vmatpush1.msra.mxu0 0.0
        %1129 = vmatprep.subr.mxu0 0.0
        %1130 = vmatpush1.msra.mxu0 0.0
        %1131 = vmatprep.subr.mxu0 0.0
        %1132 = vmatpush1.msra.mxu0 0.0
        %1133 = vmatprep.subr.mxu0 0.0
        %1134 = vmatpush1.msra.mxu0 0.0
        %1135 = vmatprep.subr.mxu0 0.0
        %1136 = vmatpush1.msra.mxu0 0.0
        %1137 = vmatprep.subr.mxu0 0.0
        %1138 = vmatpush1.msra.mxu0 0.0
        %1139 = vmatprep.subr.mxu0 0.0
        %1140 = vmatpush1.msra.mxu0 0.0
        %1141 = vmatprep.subr.mxu0 0.0
        %1142 = vmatpush1.msra.mxu0 0.0
        %1143 = vmatprep.subr.mxu0 0.0
        %1144 = vmatpush1.msra.mxu0 0.0
        %1145 = vmatprep.subr.mxu0 0.0
        %1146 = vmatpush1.msra.mxu0 0.0
        %1147 = vmatprep.subr.mxu0 0.0
        %1148 = vmatpush1.msra.mxu0 0.0
        %1149 = vmatprep.subr.mxu0 0.0
        %1150 = vmatpush1.msra.mxu0 0.0
        %1151 = vmatprep.subr.mxu0 0.0
        %1152 = vmatpush1.msra.mxu0 0.0
        %1153 = vmatprep.subr.mxu0 0.0
        %1154 = vmatpush1.msra.mxu0 0.0
        %1155 = vmatprep.subr.mxu0 0.0
        %1156 = vmatpush1.msra.mxu0 0.0
        %1157 = vmatprep.subr.mxu0 0.0
        %1158 = vmatpush1.msra.mxu0 0.0
        %1159 = vmatprep.subr.mxu0 0.0
        %1160 = vmatpush1.msra.mxu0 0.0
        %1161 = vmatprep.subr.mxu0 0.0
        %1162 = vmatpush1.msra.mxu0 0.0
        %1163 = vmatprep.subr.mxu0 0.0
        %1164 = vmatpush1.msra.mxu0 0.0
        %1165 = vmatprep.subr.mxu0 0.0
        %1166 = vmatpush1.msra.mxu0 0.0
        %1167 = vmatprep.mubr.f32.mxu0 0.0
        %1168 = vmatmul.mubr.f32.gmra.mrb[0].mxu0 %v1101
        %v1169 = vpop.f32.mrb[0].mxu0
        %v1170 = vadd.f32 0.0, %v1169
        %v1171 = vpop.f32.mrb[0].mxu0
        %1172 = vdwg.mxu0
        %1173 = vst [vmem:[#allocation3 + $0x10] sm:$0xff] %v1170
        %v1174 = vld [vmem:[#allocation2 + $0x18] sm:$0xff]
        %v1175 = vld [vmem:[#allocation2 + $0x38] sm:$0xff]
        %v1176 = vld [vmem:[#allocation2 + $0x58] sm:$0xff]
        %1177 = vmatprep.subr.mxu0 0.0
        %1178 = vmatpush1.xpose.msra.mxu0 %v1175
        %1179 = vmatprep.subr.mxu0 0.0
        %1180 = vmatpush1.xpose.msra.mxu0 0.0
        %1181 = vmatprep.subr.mxu0 0.0
        %1182 = vmatpush1.xpose.msra.mxu0 0.0
        %1183 = vmatprep.subr.mxu0 0.0
        %1184 = vmatpush1.xpose.msra.mxu0 0.0
        %1185 = vmatprep.subr.mxu0 0.0
        %1186 = vmatpush1.xpose.msra.mxu0 0.0
        %1187 = vmatprep.subr.mxu0 0.0
        %1188 = vmatpush1.xpose.msra.mxu0 0.0
        %1189 = vmatprep.subr.mxu0 0.0
        %1190 = vmatpush1.xpose.msra.mxu0 0.0
        %1191 = vmatprep.subr.mxu0 0.0
        %1192 = vmatpush1.xpose.msra.mxu0 0.0
        %1193 = vmatprep.subr.mxu0 0.0
        %1194 = vmatpush1.xpose.msra.mxu0 0.0
        %1195 = vmatprep.subr.mxu0 0.0
        %1196 = vmatpush1.xpose.msra.mxu0 0.0
        %1197 = vmatprep.subr.mxu0 0.0
        %1198 = vmatpush1.xpose.msra.mxu0 0.0
        %1199 = vmatprep.subr.mxu0 0.0
        %1200 = vmatpush1.xpose.msra.mxu0 0.0
        %1201 = vmatprep.subr.mxu0 0.0
        %1202 = vmatpush1.xpose.msra.mxu0 0.0
        %1203 = vmatprep.subr.mxu0 0.0
        %1204 = vmatpush1.xpose.msra.mxu0 0.0
        %1205 = vmatprep.subr.mxu0 0.0
        %1206 = vmatpush1.xpose.msra.mxu0 0.0
        %1207 = vmatprep.subr.mxu0 0.0
        %1208 = vmatpush1.xpose.msra.mxu0 0.0
        %1209 = vmatprep.subr.mxu0 0.0
        %1210 = vmatpush1.xpose.msra.mxu0 0.0
        %1211 = vmatprep.subr.mxu0 0.0
        %1212 = vmatpush1.xpose.msra.mxu0 0.0
        %1213 = vmatprep.subr.mxu0 0.0
        %1214 = vmatpush1.xpose.msra.mxu0 0.0
        %1215 = vmatprep.subr.mxu0 0.0
        %1216 = vmatpush1.xpose.msra.mxu0 0.0
        %1217 = vmatprep.subr.mxu0 0.0
        %1218 = vmatpush1.xpose.msra.mxu0 0.0
        %1219 = vmatprep.subr.mxu0 0.0
        %1220 = vmatpush1.xpose.msra.mxu0 0.0
        %1221 = vmatprep.subr.mxu0 0.0
        %1222 = vmatpush1.xpose.msra.mxu0 0.0
        %1223 = vmatprep.subr.mxu0 0.0
        %1224 = vmatpush1.xpose.msra.mxu0 0.0
        %1225 = vmatprep.subr.mxu0 0.0
        %1226 = vmatpush1.xpose.msra.mxu0 0.0
        %1227 = vmatprep.subr.mxu0 0.0
        %1228 = vmatpush1.xpose.msra.mxu0 0.0
        %1229 = vmatprep.subr.mxu0 0.0
        %1230 = vmatpush1.xpose.msra.mxu0 0.0
        %1231 = vmatprep.subr.mxu0 0.0
        %1232 = vmatpush1.xpose.msra.mxu0 0.0
        %1233 = vmatprep.subr.mxu0 0.0
        %1234 = vmatpush1.xpose.msra.mxu0 0.0
        %1235 = vmatprep.subr.mxu0 0.0
        %1236 = vmatpush1.xpose.msra.mxu0 0.0
        %1237 = vmatprep.subr.mxu0 0.0
        %1238 = vmatpush1.xpose.msra.mxu0 0.0
        %1239 = vmatprep.subr.mxu0 0.0
        %1240 = vmatpush1.xpose.msra.mxu0 0.0
        %1241 = vmatprep.mubr.f32.mxu0 0.0
        %1242 = vmatmul.mubr.f32.gmra.mrb[0].mxu0 %v1174
        %v1243 = vpop.f32.mrb[0].mxu0
        %v1244 = vadd.f32 %v689, %v1243
        %v1245 = vpop.f32.mrb[0].mxu0
        %1246 = vdwg.mxu0
        %v1247 = vsel %vm763, %v1244, -inf
        %1248 = vmax.xlane.f32.xlu0 %v1247
        %v1249 = vpop.xlane.xlu0 %1248
        %v1250 = vsub.f32 %v1244, %v1249
        %v1251 = vmul.f32 %v1250, 1.442695
        %v1252 = vpow.pop %v1251
        %v1253 = vsel %vm763, %v1252, 0.0
        %1254 = vadd.xlane.f32.xlu0 %v1253
        %v1255 = vpop.xlane.xlu0 %1254
        %v1256 = vrcp.pop %v1255
        %v1257 = vmul.f32 %v1255, %v1256
        %v1258 = vsub.f32 2.0, %v1257
        %v1259 = vmul.f32 %v1256, %v1258
        %v1260 = vmul.f32 %v1252, %v1259
        %v1262 = vsel %vm763, %v1260, 0
        %1264 = vmatprep.subr.mxu0 0.0
        %1265 = vmatpush1.msra.mxu0 %v1176
        %1266 = vmatprep.subr.mxu0 0.0
        %1267 = vmatpush1.msra.mxu0 0.0
        %1268 = vmatprep.subr.mxu0 0.0
        %1269 = vmatpush1.msra.mxu0 0.0
        %1270 = vmatprep.subr.mxu0 0.0
        %1271 = vmatpush1.msra.mxu0 0.0
        %1272 = vmatprep.subr.mxu0 0.0
        %1273 = vmatpush1.msra.mxu0 0.0
        %1274 = vmatprep.subr.mxu0 0.0
        %1275 = vmatpush1.msra.mxu0 0.0
        %1276 = vmatprep.subr.mxu0 0.0
        %1277 = vmatpush1.msra.mxu0 0.0
        %1278 = vmatprep.subr.mxu0 0.0
        %1279 = vmatpush1.msra.mxu0 0.0
        %1280 = vmatprep.subr.mxu0 0.0
        %1281 = vmatpush1.msra.mxu0 0.0
        %1282 = vmatprep.subr.mxu0 0.0
        %1283 = vmatpush1.msra.mxu0 0.0
        %1284 = vmatprep.subr.mxu0 0.0
        %1285 = vmatpush1.msra.mxu0 0.0
        %1286 = vmatprep.subr.mxu0 0.0
        %1287 = vmatpush1.msra.mxu0 0.0
        %1288 = vmatprep.subr.mxu0 0.0
        %1289 = vmatpush1.msra.mxu0 0.0
        %1290 = vmatprep.subr.mxu0 0.0
        %1291 = vmatpush1.msra.mxu0 0.0
        %1292 = vmatprep.subr.mxu0 0.0
        %1293 = vmatpush1.msra.mxu0 0.0
        %1294 = vmatprep.subr.mxu0 0.0
        %1295 = vmatpush1.msra.mxu0 0.0
        %1296 = vmatprep.subr.mxu0 0.0
        %1297 = vmatpush1.msra.mxu0 0.0
        %1298 = vmatprep.subr.mxu0 0.0
        %1299 = vmatpush1.msra.mxu0 0.0
        %1300 = vmatprep.subr.mxu0 0.0
        %1301 = vmatpush1.msra.mxu0 0.0
        %1302 = vmatprep.subr.mxu0 0.0
        %1303 = vmatpush1.msra.mxu0 0.0
        %1304 = vmatprep.subr.mxu0 0.0
        %1305 = vmatpush1.msra.mxu0 0.0
        %1306 = vmatprep.subr.mxu0 0.0
        %1307 = vmatpush1.msra.mxu0 0.0
        %1308 = vmatprep.subr.mxu0 0.0
        %1309 = vmatpush1.msra.mxu0 0.0
        %1310 = vmatprep.subr.mxu0 0.0
        %1311 = vmatpush1.msra.mxu0 0.0
        %1312 = vmatprep.subr.mxu0 0.0
        %1313 = vmatpush1.msra.mxu0 0.0
        %1314 = vmatprep.subr.mxu0 0.0
        %1315 = vmatpush1.msra.mxu0 0.0
        %1316 = vmatprep.subr.mxu0 0.0
        %1317 = vmatpush1.msra.mxu0 0.0
        %1318 = vmatprep.subr.mxu0 0.0
        %1319 = vmatpush1.msra.mxu0 0.0
        %1320 = vmatprep.subr.mxu0 0.0
        %1321 = vmatpush1.msra.mxu0 0.0
        %1322 = vmatprep.subr.mxu0 0.0
        %1323 = vmatpush1.msra.mxu0 0.0
        %1324 = vmatprep.subr.mxu0 0.0
        %1325 = vmatpush1.msra.mxu0 0.0
        %1326 = vmatprep.subr.mxu0 0.0
        %1327 = vmatpush1.msra.mxu0 0.0
        %1328 = vmatprep.mubr.f32.mxu0 0.0
        %1329 = vmatmul.mubr.f32.gmra.mrb[0].mxu0 %v1262
        %v1330 = vpop.f32.mrb[0].mxu0
        %v1331 = vadd.f32 0.0, %v1330
        %v1332 = vpop.f32.mrb[0].mxu0
        %1333 = vdwg.mxu0
        %1334 = vst [vmem:[#allocation3 + $0x18] sm:$0xff] %v1331
        %v1335 = vld [vmem:[#allocation3] sm:$0xff]
        %v1336 = vld [vmem:[#allocation3 + $0x8] sm:$0xff]
        %v1337 = vld [vmem:[#allocation3 + $0x10] sm:$0xff]
        %v1338 = vld [vmem:[#allocation3 + $0x18] sm:$0xff]
        %v1339 = vld [vmem:[%s2] sm:$0xff]
        %v1340 = vld [vmem:[%s2 + $0x8] sm:$0xff]
        %v1341 = vld [vmem:[%s2 + $0x10] sm:$0xff]
        %v1342 = vld [vmem:[%s2 + $0x18] sm:$0xff]
        %v1343 = vld [vmem:[%s2 + $0x20] sm:$0xff]
        %v1344 = vld [vmem:[%s2 + $0x28] sm:$0xff]
        %v1345 = vld [vmem:[%s2 + $0x30] sm:$0xff]
        %v1346 = vld [vmem:[%s2 + $0x38] sm:$0xff]
        %v1347 = vld [vmem:[%s2 + $0x40] sm:$0xff]
        %v1348 = vld [vmem:[%s2 + $0x48] sm:$0xff]
        %v1349 = vld [vmem:[%s2 + $0x50] sm:$0xff]
        %v1350 = vld [vmem:[%s2 + $0x58] sm:$0xff]
        %v1351 = vld [vmem:[%s2 + $0x60] sm:$0xff]
        %v1352 = vld [vmem:[%s2 + $0x68] sm:$0xff]
        %v1353 = vld [vmem:[%s2 + $0x70] sm:$0xff]
        %v1354 = vld [vmem:[%s2 + $0x78] sm:$0xff]
        %v1355 = vld [vmem:[%s2 + $0x80] sm:$0xff]
        %v1356 = vld [vmem:[%s2 + $0x88] sm:$0xff]
        %v1357 = vld [vmem:[%s2 + $0x90] sm:$0xff]
        %v1358 = vld [vmem:[%s2 + $0x98] sm:$0xff]
        %v1359 = vld [vmem:[%s2 + $0xa0] sm:$0xff]
        %v1360 = vld [vmem:[%s2 + $0xa8] sm:$0xff]
        %v1361 = vld [vmem:[%s2 + $0xb0] sm:$0xff]
        %v1362 = vld [vmem:[%s2 + $0xb8] sm:$0xff]
        %v1363 = vld [vmem:[%s2 + $0xc0] sm:$0xff]
        %v1364 = vld [vmem:[%s2 + $0xc8] sm:$0xff]
        %v1365 = vld [vmem:[%s2 + $0xd0] sm:$0xff]
        %v1366 = vld [vmem:[%s2 + $0xd8] sm:$0xff]
        %v1367 = vld [vmem:[%s2 + $0xe0] sm:$0xff]
        %v1368 = vld [vmem:[%s2 + $0xe8] sm:$0xff]
        %v1369 = vld [vmem:[%s2 + $0xf0] sm:$0xff]
        %v1370 = vld [vmem:[%s2 + $0xf8] sm:$0xff]
        %v1371 = vld [vmem:[%s2 + $0x100] sm:$0xff]
        %v1372 = vld [vmem:[%s2 + $0x108] sm:$0xff]
        %v1373 = vld [vmem:[%s2 + $0x110] sm:$0xff]
        %v1374 = vld [vmem:[%s2 + $0x118] sm:$0xff]
        %v1375 = vld [vmem:[%s2 + $0x120] sm:$0xff]
        %v1376 = vld [vmem:[%s2 + $0x128] sm:$0xff]
        %v1377 = vld [vmem:[%s2 + $0x130] sm:$0xff]
        %v1378 = vld [vmem:[%s2 + $0x138] sm:$0xff]
        %v1379 = vld [vmem:[%s2 + $0x140] sm:$0xff]
        %v1380 = vld [vmem:[%s2 + $0x148] sm:$0xff]
        %v1381 = vld [vmem:[%s2 + $0x150] sm:$0xff]
        %v1382 = vld [vmem:[%s2 + $0x158] sm:$0xff]
        %v1383 = vld [vmem:[%s2 + $0x160] sm:$0xff]
        %v1384 = vld [vmem:[%s2 + $0x168] sm:$0xff]
        %v1385 = vld [vmem:[%s2 + $0x170] sm:$0xff]
        %v1386 = vld [vmem:[%s2 + $0x178] sm:$0xff]
        %v1387 = vld [vmem:[%s2 + $0x180] sm:$0xff]
        %v1388 = vld [vmem:[%s2 + $0x188] sm:$0xff]
        %v1389 = vld [vmem:[%s2 + $0x190] sm:$0xff]
        %v1390 = vld [vmem:[%s2 + $0x198] sm:$0xff]
        %v1391 = vld [vmem:[%s2 + $0x1a0] sm:$0xff]
        %v1392 = vld [vmem:[%s2 + $0x1a8] sm:$0xff]
        %v1393 = vld [vmem:[%s2 + $0x1b0] sm:$0xff]
        %v1394 = vld [vmem:[%s2 + $0x1b8] sm:$0xff]
        %v1395 = vld [vmem:[%s2 + $0x1c0] sm:$0xff]
        %v1396 = vld [vmem:[%s2 + $0x1c8] sm:$0xff]
        %v1397 = vld [vmem:[%s2 + $0x1d0] sm:$0xff]
        %v1398 = vld [vmem:[%s2 + $0x1d8] sm:$0xff]
        %v1399 = vld [vmem:[%s2 + $0x1e0] sm:$0xff]
        %v1400 = vld [vmem:[%s2 + $0x1e8] sm:$0xff]
        %v1401 = vld [vmem:[%s2 + $0x1f0] sm:$0xff]
        %v1402 = vld [vmem:[%s2 + $0x1f8] sm:$0xff]
        %v1403 = vld [vmem:[%s3] sm:$0x1]
        %v1405 = vlaneseq
        %v1406 = vshrl.u32 %v1405, 7
        %v1407 = vsub.s32 0, %v1406
        %v1408 = vrot.slane %v1403, %v1407
        %1410 = vmatprep.subr.mxu0 0.0
        %1411 = vmatpush1.msra.mxu0 %v1339
        %1412 = vmatprep.subr.mxu0 0.0
        %1413 = vmatpush1.msra.mxu0 %v1340
        %1414 = vmatprep.subr.mxu0 0.0
        %1415 = vmatpush1.msra.mxu0 %v1341
        %1416 = vmatprep.subr.mxu0 0.0
        %1417 = vmatpush1.msra.mxu0 %v1342
        %1418 = vmatprep.subr.mxu0 0.0
        %1419 = vmatpush1.msra.mxu0 %v1343
        %1420 = vmatprep.subr.mxu0 0.0
        %1421 = vmatpush1.msra.mxu0 %v1344
        %1422 = vmatprep.subr.mxu0 0.0
        %1423 = vmatpush1.msra.mxu0 %v1345
        %1424 = vmatprep.subr.mxu0 0.0
        %1425 = vmatpush1.msra.mxu0 %v1346
        %1426 = vmatprep.subr.mxu0 0.0
        %1427 = vmatpush1.msra.mxu0 %v1347
        %1428 = vmatprep.subr.mxu0 0.0
        %1429 = vmatpush1.msra.mxu0 %v1348
        %1430 = vmatprep.subr.mxu0 0.0
        %1431 = vmatpush1.msra.mxu0 %v1349
        %1432 = vmatprep.subr.mxu0 0.0
        %1433 = vmatpush1.msra.mxu0 %v1350
        %1434 = vmatprep.subr.mxu0 0.0
        %1435 = vmatpush1.msra.mxu0 %v1351
        %1436 = vmatprep.subr.mxu0 0.0
        %1437 = vmatpush1.msra.mxu0 %v1352
        %1438 = vmatprep.subr.mxu0 0.0
        %1439 = vmatpush1.msra.mxu0 %v1353
        %1440 = vmatprep.subr.mxu0 0.0
        %1441 = vmatpush1.msra.mxu0 %v1354
        %1442 = vmatprep.subr.mxu0 0.0
        %1443 = vmatpush1.msra.mxu0 %v1355
        %1444 = vmatprep.subr.mxu0 0.0
        %1445 = vmatpush1.msra.mxu0 %v1356
        %1446 = vmatprep.subr.mxu0 0.0
        %1447 = vmatpush1.msra.mxu0 %v1357
        %1448 = vmatprep.subr.mxu0 0.0
        %1449 = vmatpush1.msra.mxu0 %v1358
        %1450 = vmatprep.subr.mxu0 0.0
        %1451 = vmatpush1.msra.mxu0 %v1359
        %1452 = vmatprep.subr.mxu0 0.0
        %1453 = vmatpush1.msra.mxu0 %v1360
        %1454 = vmatprep.subr.mxu0 0.0
        %1455 = vmatpush1.msra.mxu0 %v1361
        %1456 = vmatprep.subr.mxu0 0.0
        %1457 = vmatpush1.msra.mxu0 %v1362
        %1458 = vmatprep.subr.mxu0 0.0
        %1459 = vmatpush1.msra.mxu0 %v1363
        %1460 = vmatprep.subr.mxu0 0.0
        %1461 = vmatpush1.msra.mxu0 %v1364
        %1462 = vmatprep.subr.mxu0 0.0
        %1463 = vmatpush1.msra.mxu0 %v1365
        %1464 = vmatprep.subr.mxu0 0.0
        %1465 = vmatpush1.msra.mxu0 %v1366
        %1466 = vmatprep.subr.mxu0 0.0
        %1467 = vmatpush1.msra.mxu0 %v1367
        %1468 = vmatprep.subr.mxu0 0.0
        %1469 = vmatpush1.msra.mxu0 %v1368
        %1470 = vmatprep.subr.mxu0 0.0
        %1471 = vmatpush1.msra.mxu0 %v1369
        %1472 = vmatprep.subr.mxu0 0.0
        %1473 = vmatpush1.msra.mxu0 %v1370
        %1474 = vmatprep.mubr.f32.mxu0 %v1336
        %1475 = vmatmul.mubr.f32.gmra.mrb[0].mxu0 %v1335
        %v1476 = vpop.f32.mrb[0].mxu0
        %v1477 = vadd.f32 %v1408, %v1476
        %v1478 = vpop.f32.mrb[0].mxu0
        %1479 = vdwg.mxu0
        %1480 = vmatprep.subr.mxu0 0.0
        %1481 = vmatpush1.msra.mxu0 %v1371
        %1482 = vmatprep.subr.mxu0 0.0
        %1483 = vmatpush1.msra.mxu0 %v1372
        %1484 = vmatprep.subr.mxu0 0.0
        %1485 = vmatpush1.msra.mxu0 %v1373
        %1486 = vmatprep.subr.mxu0 0.0
        %1487 = vmatpush1.msra.mxu0 %v1374
        %1488 = vmatprep.subr.mxu0 0.0
        %1489 = vmatpush1.msra.mxu0 %v1375
        %1490 = vmatprep.subr.mxu0 0.0
        %1491 = vmatpush1.msra.mxu0 %v1376
        %1492 = vmatprep.subr.mxu0 0.0
        %1493 = vmatpush1.msra.mxu0 %v1377
        %1494 = vmatprep.subr.mxu0 0.0
        %1495 = vmatpush1.msra.mxu0 %v1378
        %1496 = vmatprep.subr.mxu0 0.0
        %1497 = vmatpush1.msra.mxu0 %v1379
        %1498 = vmatprep.subr.mxu0 0.0
        %1499 = vmatpush1.msra.mxu0 %v1380
        %1500 = vmatprep.subr.mxu0 0.0
        %1501 = vmatpush1.msra.mxu0 %v1381
        %1502 = vmatprep.subr.mxu0 0.0
        %1503 = vmatpush1.msra.mxu0 %v1382
        %1504 = vmatprep.subr.mxu0 0.0
        %1505 = vmatpush1.msra.mxu0 %v1383
        %1506 = vmatprep.subr.mxu0 0.0
        %1507 = vmatpush1.msra.mxu0 %v1384
        %1508 = vmatprep.subr.mxu0 0.0
        %1509 = vmatpush1.msra.mxu0 %v1385
        %1510 = vmatprep.subr.mxu0 0.0
        %1511 = vmatpush1.msra.mxu0 %v1386
        %1512 = vmatprep.subr.mxu0 0.0
        %1513 = vmatpush1.msra.mxu0 %v1387
        %1514 = vmatprep.subr.mxu0 0.0
        %1515 = vmatpush1.msra.mxu0 %v1388
        %1516 = vmatprep.subr.mxu0 0.0
        %1517 = vmatpush1.msra.mxu0 %v1389
        %1518 = vmatprep.subr.mxu0 0.0
        %1519 = vmatpush1.msra.mxu0 %v1390
        %1520 = vmatprep.subr.mxu0 0.0
        %1521 = vmatpush1.msra.mxu0 %v1391
        %1522 = vmatprep.subr.mxu0 0.0
        %1523 = vmatpush1.msra.mxu0 %v1392
        %1524 = vmatprep.subr.mxu0 0.0
        %1525 = vmatpush1.msra.mxu0 %v1393
        %1526 = vmatprep.subr.mxu0 0.0
        %1527 = vmatpush1.msra.mxu0 %v1394
        %1528 = vmatprep.subr.mxu0 0.0
        %1529 = vmatpush1.msra.mxu0 %v1395
        %1530 = vmatprep.subr.mxu0 0.0
        %1531 = vmatpush1.msra.mxu0 %v1396
        %1532 = vmatprep.subr.mxu0 0.0
        %1533 = vmatpush1.msra.mxu0 %v1397
        %1534 = vmatprep.subr.mxu0 0.0
        %1535 = vmatpush1.msra.mxu0 %v1398
        %1536 = vmatprep.subr.mxu0 0.0
        %1537 = vmatpush1.msra.mxu0 %v1399
        %1538 = vmatprep.subr.mxu0 0.0
        %1539 = vmatpush1.msra.mxu0 %v1400
        %1540 = vmatprep.subr.mxu0 0.0
        %1541 = vmatpush1.msra.mxu0 %v1401
        %1542 = vmatprep.subr.mxu0 0.0
        %1543 = vmatpush1.msra.mxu0 %v1402
        %1544 = vmatprep.mubr.f32.mxu0 %v1338
        %1545 = vmatmul.mubr.f32.gmra.mrb[0].mxu0 %v1337
        %v1546 = vpop.f32.mrb[0].mxu0
        %v1547 = vadd.f32 %v1477, %v1546
        %v1548 = vpop.f32.mrb[0].mxu0
        %1549 = vdwg.mxu0
        %1550 = vst.msk [vmem:[%s188] sm:$0xff] %vm242, %v1547
        %s1551 = sand.u32 %s115, 1
        %s1552 = scalar_lea.sflag [#allocation5], %s1551
        %s1553 = sand.u32 %s115, 1
        %s1554 = smul.addr %s1553, 8
        %s1555 = scalar_lea.vmem [#allocation4], %s1554
        // Predicated region
        $region37: #{tpu_custom_call.1} parent=35 // pred_check
          %p1556 = pneg %p125
        $region38: #{tpu_custom_call.1} parent=35 // pred_check_branch
          %1558 = sbr.rel (%p1556) target = $region40
        $region39: #{tpu_custom_call.1} parent=35 // pred_region
          %s1560 = ssub.s32 128, 128
          %1561 = vsyncadd %s1552, %s1560
          %s1562 = smul.addr %s18, 128
          %s1563 = scalar_lea.hbm %s4, %s1562
          %s1565 = sshll.u32 %s1555, 4
          %s1566 = int_to_ptr.vmem [resolvable:$true] %s1565
          %1568 = dma.vmem_to_hbm [thread:$0]  %s1566, 128, %s1563, %s1552
        $region40: #{tpu_custom_call.1} parent=35 // pred_fallthru
          _
      $region36: #{tpu_custom_call.1} parent=5 // pred_fallthru
        _
      %p1569 = scmp.le.s32.totalorder 2, %s13
      // Predicated region
      $region41: #{tpu_custom_call.1} parent=5 // pred_check
        %p1570 = pneg %p1569
      $region42: #{tpu_custom_call.1} parent=5 // pred_check_branch
        %1572 = sbr.rel (%p1570) target = $region44
      $region43: #{tpu_custom_call.1} parent=5 // pred_region
        %s1573 = ssub.s32 %s13, 2
        // Predicated region
        $region45: #{tpu_custom_call.1} parent=43 // pred_check
          %p1574 = pneg %p131
        $region46: #{tpu_custom_call.1} parent=43 // pred_check_branch
          %1576 = sbr.rel (%p1574) target = $region48
        $region47: #{tpu_custom_call.1} parent=43 // pred_region
          %s1577 = sand.u32 %s116, 1
          %s1578 = scalar_lea.sflag [#allocation5], %s1577
          %s1579 = sand.u32 %s116, 1
          %s1580 = smul.addr %s1579, 8
          %s1581 = scalar_lea.vmem [#allocation4], %s1580
          %1582 = dma.done %s1578, 128
        $region48: #{tpu_custom_call.1} parent=43 // pred_fallthru
          _
      $region44: #{tpu_custom_call.1} parent=5 // pred_fallthru
        _
    $region6: #{tpu_custom_call.1} parent=1 // loop_footer
      %s17 = sadd.s32 1, %s13
    $region7: #{tpu_custom_call.1} parent=1 // loop_footer_branch
      %12 = sbr.rel target = $region3
    $region8: #{tpu_custom_call.1} parent=1 // loop_exit
      _
    %1583 = vsyncpa [#allocation5], 1
    %s1584 = scalar_lea.sflag [#allocation5], 1
    %1585 = vsyncpa %s1584, 1

</llo_original>
